<compile_context>
chip_gen: v5e
topology: v5e:2x2
jax: 0.10.0
libtpu: 0.0.40
codegen_flags: <defaults>
</compile_context>

<pallas_src>
import jax
import jax.numpy as jnp
from jax import lax
from jax.experimental import pallas as pl
from jax.experimental.pallas import tpu as pltpu


# ----------------------------------------------------------------------------
# Pallas kernels
# ----------------------------------------------------------------------------
def lstm_kernel(x_ref, len_ref, wih_ref, whh_ref, b_ref, hout_ref,
                h_sc, c_sc, g_sc):
    """Masked single-layer LSTM over a block of batch rows.

    x_ref:   (T, BB, E)  time-major inputs for BB batch rows
    len_ref: (BB, 1)     int32 valid lengths (packed-sequence emulation)
    wih_ref: (E, 4L)     fused input->gate weights, gate order (i, f, g, o)
    whh_ref: (L, 4L)     fused hidden->gate weights
    b_ref:   (1, 4L)     combined gate bias (b_ih + b_hh)
    hout_ref:(BB, L)     final hidden state (== ht[-1] of packed LSTM)
    h_sc/c_sc: (BB, L)   state scratch
    g_sc:    (T, BB, 4L) precomputed input-side gate pre-activations
    """
    T, BB, E = x_ref.shape
    L = whh_ref.shape[0]

    # Hoisted input projection: one fused (T*BB, E) @ (E, 4L) matmul + bias,
    # done once, outside the serial recurrence.
    x_flat = x_ref[...].reshape(T * BB, E)
    xg = jnp.dot(x_flat, wih_ref[...],
                 preferred_element_type=jnp.float32) + b_ref[...]
    g_sc[...] = xg.reshape(T, BB, 4 * L)

    h_sc[...] = jnp.zeros_like(h_sc)
    c_sc[...] = jnp.zeros_like(c_sc)
    lens = len_ref[...]                      # (BB, 1) int32, loaded once

    def step(t, carry):
        h_prev = h_sc[...]
        c_prev = c_sc[...]
        # One 128-wide matmul on the recurrent path per step.
        g = g_sc[t] + jnp.dot(h_prev, whh_ref[...],
                              preferred_element_type=jnp.float32)
        i_g = jax.nn.sigmoid(g[:, 0 * L:1 * L])
        f_g = jax.nn.sigmoid(g[:, 1 * L:2 * L])
        g_g = jnp.tanh(g[:, 2 * L:3 * L])
        o_g = jax.nn.sigmoid(g[:, 3 * L:4 * L])
        c_new = f_g * c_prev + i_g * g_g
        h_new = o_g * jnp.tanh(c_new)
        valid = t < lens                     # (BB, 1) bool
        h_sc[...] = jnp.where(valid, h_new, h_prev)
        c_sc[...] = jnp.where(valid, c_new, c_prev)
        return carry

    # Short static trip count -> fully unroll so the LLO scheduler can
    # interleave MXU / EUP / VPU work across iterations.
    lax.fori_loop(0, T, step, 0, unroll=True if T <= 16 else 2)
    hout_ref[...] = h_sc[...]


def head_kernel(x_ref, wh_ref, bh_ref, gamma_ref, beta_ref, mean_ref, var_ref,
                wp_ref, bp_ref, out_ref):
    """hidden_layer -> relu -> batchnorm(eval) -> predict_layer -> softmax(dim=0)."""
    h = jnp.dot(x_ref[...], wh_ref[...],
                preferred_element_type=jnp.float32) + bh_ref[...]
    h = jnp.maximum(h, 0.0)                                    # F.relu
    hn = (h - mean_ref[...]) * lax.rsqrt(var_ref[...] + 1e-5)  # BatchNorm1d (running stats)
    hn = hn * gamma_ref[...] + beta_ref[...]
    # TODO(synk): F.dropout skipped (inference mode; training-mode RNG not reproduced)
    logits = jnp.dot(hn, wp_ref[...],
                     preferred_element_type=jnp.float32) + bp_ref[...]
    # F.softmax(coherence_pred, dim=0): softmax ACROSS documents (rows)
    m = jnp.max(logits, axis=0, keepdims=True)
    e = jnp.exp(logits - m)
    out_ref[...] = e / jnp.sum(e, axis=0, keepdims=True)


# ----------------------------------------------------------------------------
# Wrappers
# ----------------------------------------------------------------------------
_VMEM = pl.BlockSpec(memory_space=pltpu.MemorySpace.VMEM)
_ROW_BLOCK = 8  # batch rows per grid step (one sublane tile)


def lstm_final_h(x_tbe, lengths, wih, whh, b):
    """x_tbe: (T, B, E) f32, lengths: (B,) int32 -> (B, L) f32 final hidden.

    One pallas_call for the whole batch; grid over batch-row blocks
    (marked "parallel" so v7x can split it across TensorCores).
    """
    T, B, E = x_tbe.shape
    L = whh.shape[0]
    bb = _ROW_BLOCK
    B_pad = ((B + bb - 1) // bb) * bb
    if B_pad != B:
        x_tbe = jnp.pad(x_tbe, ((0, 0), (0, B_pad - B), (0, 0)))
        lengths = jnp.pad(lengths, (0, B_pad - B))   # pad rows get length 0
    lengths = lengths.reshape(B_pad, 1).astype(jnp.int32)

    out = pl.pallas_call(
        lstm_kernel,
        out_shape=jax.ShapeDtypeStruct((B_pad, L), jnp.float32),
        grid_spec=pltpu.PrefetchScalarGridSpec(
            num_scalar_prefetch=0,
            grid=(B_pad // bb,),
            in_specs=[
                pl.BlockSpec((T, bb, E), lambda i: (0, i, 0)),
                pl.BlockSpec((bb, 1), lambda i: (i, 0)),
                pl.BlockSpec((E, 4 * L), lambda i: (0, 0)),
                pl.BlockSpec((L, 4 * L), lambda i: (0, 0)),
                pl.BlockSpec((1, 4 * L), lambda i: (0, 0)),
            ],
            out_specs=pl.BlockSpec((bb, L), lambda i: (i, 0)),
            scratch_shapes=[
                pltpu.VMEM((bb, L), jnp.float32),          # h
                pltpu.VMEM((bb, L), jnp.float32),          # c
                pltpu.VMEM((T, bb, 4 * L), jnp.float32),   # hoisted input gates
            ],
        ),
        compiler_params=pltpu.CompilerParams(
            dimension_semantics=("parallel",)),
    )(x_tbe, lengths, wih, whh, b)
    return out[:B]


def head(doc_vecs, p):
    D = doc_vecs.shape[0]
    C = p["Wp"].shape[-1]
    return pl.pallas_call(
        head_kernel,
        out_shape=jax.ShapeDtypeStruct((D, C), jnp.float32),
        in_specs=[_VMEM] * 9,
        out_specs=_VMEM,
    )(doc_vecs, p["Wh"], p["bh"], p["gamma"], p["beta"],
      p["rmean"], p["rvar"], p["Wp"], p["bp"])


def init_params(key, V, E, L, H, C):
    ks = jax.random.split(key, 12)

    def uni(k, shape, scale):
        return jax.random.uniform(k, shape, jnp.float32, -scale, scale)

    s = 1.0 / float(L) ** 0.5

    def lstm_p(k, in_dim):
        # Fused gate layout: [in_dim, 4L] / [L, 4L] / [1, 4L], gate order (i,f,g,o).
        k1, k2, k3 = jax.random.split(k, 3)
        return (uni(k1, (in_dim, 4 * L), s),
                uni(k2, (L, 4 * L), s),
                uni(k3, (1, 4 * L), s))

    def xavier(k, fan_in, fan_out):
        a = (6.0 / (fan_in + fan_out)) ** 0.5
        return jax.random.uniform(k, (fan_in, fan_out), jnp.float32, -a, a)

    return dict(
        embed=jax.random.normal(ks[0], (V, E), jnp.float32) * 0.1,
        word=lstm_p(ks[1], E),
        sent=lstm_p(ks[2], L),
        par=lstm_p(ks[3], L),
        Wh=xavier(ks[4], L, H), bh=jnp.zeros((1, H), jnp.float32),
        Wp=xavier(ks[5], H, C), bp=jnp.zeros((1, C), jnp.float32),
        gamma=jnp.ones((1, H), jnp.float32), beta=jnp.zeros((1, H), jnp.float32),
        rmean=jnp.zeros((1, H), jnp.float32), rvar=jnp.ones((1, H), jnp.float32),
    )


def lstm_par_seq_forward(params, word_ids, input_lengths, original_index):
    """word_ids: (D, P, S, W) int32 token ids
       input_lengths: (D, P, S) int32, sorted descending within each paragraph
       original_index: (D, P, S) int32 unsort permutation."""
    D, P, S, W = word_ids.shape
    L = params["sent"][1].shape[0]   # lstm_dim

    # ---- word-level LSTM: all D*P*S sentences in ONE batched kernel call ----
    # Single embedding gather for the whole batch (no per-paragraph gathers).
    emb = jnp.take(params["embed"], word_ids.reshape(D * P * S, W), axis=0)  # (DPS, W, E)
    x_word = jnp.transpose(emb, (1, 0, 2))                                   # (W, DPS, E)
    h_word = lstm_final_h(x_word, input_lengths.reshape(D * P * S),
                          *params["word"])                                   # (DPS, L)

    # Unsort back to original sentence order within each paragraph
    # (torch.gather over dim 0 in the reference).
    h_word = h_word.reshape(D * P, S, L)
    idx = jnp.broadcast_to(original_index.reshape(D * P, S)[:, :, None],
                           (D * P, S, L))
    h_unsorted = jnp.take_along_axis(h_word, idx, axis=1)                    # (DP, S, L)

    # ---- sentence-level LSTM: D*P paragraphs, sequence length S, batched ----
    x_sent = jnp.transpose(h_unsorted, (1, 0, 2))                            # (S, DP, L)
    h_sent = lstm_final_h(x_sent, jnp.full((D * P,), S, jnp.int32),
                          *params["sent"])                                   # (DP, L)

    # ---- paragraph-level LSTM: D documents, sequence length P, batched ----
    x_par = jnp.transpose(h_sent.reshape(D, P, L), (1, 0, 2))                # (P, D, L)
    h_par = lstm_final_h(x_par, jnp.full((D,), P, jnp.int32),
                         *params["par"])                                     # (D, L)

    return head(h_par, params)                                               # (D, num_labels)


# ----------------------------------------------------------------------------
# Demo
# ----------------------------------------------------------------------------
if __name__ == "__main__":
    D, P, S, W = 2, 2, 3, 8          # docs, paragraphs/doc, sentences/par, max words
    V, E, L, H = 50, 16, 32, 32      # vocab, embedding_dim, lstm_dim, hidden_dim
    C = 3                            # task == 'class' -> 3 labels, softmax over dim 0

    key = jax.random.PRNGKey(0)
    k_param, k_ids = jax.random.split(key)

    params = init_params(k_param, V, E, L, H, C)

    word_ids = jax.random.randint(k_ids, (D, P, S, W), 0, V, dtype=jnp.int32)
    # lengths sorted descending within each paragraph (pack_padded_sequence contract)
    input_lengths = jnp.tile(jnp.array([W, 5, 3], dtype=jnp.int32), (D, P, 1))
    # permutation restoring the original (pre-sort) sentence order
    original_index = jnp.tile(jnp.array([1, 2, 0], dtype=jnp.int32), (D, P, 1))

    fwd = jax.jit(lstm_par_seq_forward)
    out = fwd(params, word_ids, input_lengths, original_index)
    out = jax.block_until_ready(out)
    assert out.shape == (D, C)
    assert bool(jnp.all(jnp.isfinite(out)))
    # softmax over dim=0: columns sum to 1
    assert bool(jnp.allclose(jnp.sum(out, axis=0), 1.0, atol=1e-5))
    print("KERNEL_OK")
</pallas_src>

<mosaic_0001>
module attributes {stable_mosaic.version = 11 : i64} {
  func.func @lstm_kernel(%arg0: i32, %arg1: memref<8x8x16xf32, #tpu.memory_space<vmem>>, %arg2: memref<8x1xi32, #tpu.memory_space<vmem>>, %arg3: memref<16x128xf32, #tpu.memory_space<vmem>>, %arg4: memref<32x128xf32, #tpu.memory_space<vmem>>, %arg5: memref<1x128xf32, #tpu.memory_space<vmem>>, %arg6: memref<8x32xf32, #tpu.memory_space<vmem>>, %arg7: memref<8x32xf32, #tpu.memory_space<vmem>>, %arg8: memref<8x32xf32, #tpu.memory_space<vmem>>, %arg9: memref<8x8x128xf32, #tpu.memory_space<vmem>>) attributes {dimension_semantics = [#tpu.dimension_semantics<parallel>], iteration_bounds = array<i64: 2>, scalar_prefetch = 0 : i64, scratch_operands = 3 : i64, tpu.core_type = #tpu.core_type<tc>, window_params = [{transform_indices = @transform_0, window_bounds = array<i64: 8, 8, 16>}, {transform_indices = @transform_1, window_bounds = array<i64: 8, 1>}, {pipeline_mode = #tpu.pipeline_mode<synchronous>, transform_indices = @transform_2, window_bounds = array<i64: 16, 128>}, {pipeline_mode = #tpu.pipeline_mode<synchronous>, transform_indices = @transform_3, window_bounds = array<i64: 32, 128>}, {pipeline_mode = #tpu.pipeline_mode<synchronous>, transform_indices = @transform_4, window_bounds = array<i64: 1, 128>}, {transform_indices = @transform_5, window_bounds = array<i64: 8, 32>}]} {
    %c0 = arith.constant 0 : index
    %c0_0 = arith.constant 0 : index
    %c0_1 = arith.constant 0 : index
    %0 = vector.load %arg1[%c0, %c0_0, %c0_1] : memref<8x8x16xf32, #tpu.memory_space<vmem>>, vector<8x8x16xf32>
    %1 = vector.shape_cast %0 : vector<8x8x16xf32> to vector<64x16xf32>
    %c0_2 = arith.constant 0 : index
    %c0_3 = arith.constant 0 : index
    %2 = vector.load %arg3[%c0_2, %c0_3] : memref<16x128xf32, #tpu.memory_space<vmem>>, vector<16x128xf32>
    %cst = arith.constant dense<0.000000e+00> : vector<64x128xf32>
    %3 = tpu.matmul %1, %2, %cst {dimension_numbers = #tpu.dot_dimension_numbers<[1], [0], [0], [1], [0, 0, 1, 1], [], []>} : vector<64x16xf32>, vector<16x128xf32>, vector<64x128xf32> -> vector<64x128xf32>
    %c0_4 = arith.constant 0 : index
    %c0_5 = arith.constant 0 : index
    %4 = vector.load %arg5[%c0_4, %c0_5] : memref<1x128xf32, #tpu.memory_space<vmem>>, vector<1x128xf32>
    %5 = vector.broadcast %4 : vector<1x128xf32> to vector<64x128xf32>
    %6 = arith.addf %3, %5 : vector<64x128xf32>
    %7 = vector.shape_cast %6 : vector<64x128xf32> to vector<8x8x128xf32>
    %c0_6 = arith.constant 0 : index
    %c0_7 = arith.constant 0 : index
    %c0_8 = arith.constant 0 : index
    %8 = vector.load %arg9[%c0_6, %c0_7, %c0_8] : memref<8x8x128xf32, #tpu.memory_space<vmem>>, vector<8x8x128xf32>
    tpu.vector_store %arg9[%c0_6, %c0_7, %c0_8], %7 {strides = array<i32>} : memref<8x8x128xf32, #tpu.memory_space<vmem>>, vector<8x8x128xf32>,
    %cst_9 = arith.constant 0.000000e+00 : f32
    %9 = vector.broadcast %cst_9 : f32 to vector<8x32xf32>
    %c0_10 = arith.constant 0 : index
    %c0_11 = arith.constant 0 : index
    %10 = vector.load %arg7[%c0_10, %c0_11] : memref<8x32xf32, #tpu.memory_space<vmem>>, vector<8x32xf32>
    tpu.vector_store %arg7[%c0_10, %c0_11], %9 {strides = array<i32>} : memref<8x32xf32, #tpu.memory_space<vmem>>, vector<8x32xf32>,
    %cst_12 = arith.constant 0.000000e+00 : f32
    %11 = vector.broadcast %cst_12 : f32 to vector<8x32xf32>
    %c0_13 = arith.constant 0 : index
    %c0_14 = arith.constant 0 : index
    %12 = vector.load %arg8[%c0_13, %c0_14] : memref<8x32xf32, #tpu.memory_space<vmem>>, vector<8x32xf32>
    tpu.vector_store %arg8[%c0_13, %c0_14], %11 {strides = array<i32>} : memref<8x32xf32, #tpu.memory_space<vmem>>, vector<8x32xf32>,
    %c0_15 = arith.constant 0 : index
    %c0_16 = arith.constant 0 : index
    %13 = vector.load %arg2[%c0_15, %c0_16] : memref<8x1xi32, #tpu.memory_space<vmem>>, vector<8x1xi32>
    %c0_i32 = arith.constant 0 : i32
    %c0_17 = arith.constant 0 : index
    %c0_18 = arith.constant 0 : index
    %14 = vector.load %arg7[%c0_17, %c0_18] : memref<8x32xf32, #tpu.memory_space<vmem>>, vector<8x32xf32>
    %c0_19 = arith.constant 0 : index
    %c0_20 = arith.constant 0 : index
    %15 = vector.load %arg8[%c0_19, %c0_20] : memref<8x32xf32, #tpu.memory_space<vmem>>, vector<8x32xf32>
    %16 = arith.index_cast %c0_i32 : i32 to index
    %c0_21 = arith.constant 0 : index
    %c0_22 = arith.constant 0 : index
    %17 = vector.load %arg9[%16, %c0_21, %c0_22] : memref<8x8x128xf32, #tpu.memory_space<vmem>>, vector<1x8x128xf32>
    %18 = vector.shape_cast %17 : vector<1x8x128xf32> to vector<8x128xf32>
    %c0_23 = arith.constant 0 : index
    %c0_24 = arith.constant 0 : index
    %19 = vector.load %arg4[%c0_23, %c0_24] : memref<32x128xf32, #tpu.memory_space<vmem>>, vector<32x128xf32>
    %cst_25 = arith.constant dense<0.000000e+00> : vector<8x128xf32>
    %20 = tpu.matmul %14, %19, %cst_25 {dimension_numbers = #tpu.dot_dimension_numbers<[1], [0], [0], [1], [0, 0, 1, 1], [], []>} : vector<8x32xf32>, vector<32x128xf32>, vector<8x128xf32> -> vector<8x128xf32>
    %21 = arith.addf %18, %20 : vector<8x128xf32>
    %22 = vector.extract_strided_slice %21 {offsets = [0, 0], sizes = [8, 32], strides = [1, 1]} : vector<8x128xf32> to vector<8x32xf32>
    %23 = arith.negf %22 : vector<8x32xf32>
    %24 = math.exp %23 : vector<8x32xf32>
    %cst_26 = arith.constant 1.000000e+00 : f32
    %25 = vector.broadcast %cst_26 : f32 to vector<8x32xf32>
    %26 = arith.addf %25, %24 : vector<8x32xf32>
    %27 = arith.divf %25, %26 : vector<8x32xf32>
    %28 = vector.extract_strided_slice %21 {offsets = [0, 32], sizes = [8, 32], strides = [1, 1]} : vector<8x128xf32> to vector<8x32xf32>
    %29 = arith.negf %28 : vector<8x32xf32>
    %30 = math.exp %29 : vector<8x32xf32>
    %cst_27 = arith.constant 1.000000e+00 : f32
    %31 = vector.broadcast %cst_27 : f32 to vector<8x32xf32>
    %32 = arith.addf %31, %30 : vector<8x32xf32>
    %33 = arith.divf %31, %32 : vector<8x32xf32>
    %34 = vector.extract_strided_slice %21 {offsets = [0, 64], sizes = [8, 32], strides = [1, 1]} : vector<8x128xf32> to vector<8x32xf32>
    %35 = math.tanh %34 : vector<8x32xf32>
    %36 = vector.extract_strided_slice %21 {offsets = [0, 96], sizes = [8, 32], strides = [1, 1]} : vector<8x128xf32> to vector<8x32xf32>
    %37 = arith.negf %36 : vector<8x32xf32>
    %38 = math.exp %37 : vector<8x32xf32>
    %cst_28 = arith.constant 1.000000e+00 : f32
    %39 = vector.broadcast %cst_28 : f32 to vector<8x32xf32>
    %40 = arith.addf %39, %38 : vector<8x32xf32>
    %41 = arith.divf %39, %40 : vector<8x32xf32>
    %42 = arith.mulf %33, %15 : vector<8x32xf32>
    %43 = arith.mulf %27, %35 : vector<8x32xf32>
    %44 = arith.addf %42, %43 : vector<8x32xf32>
    %45 = math.tanh %44 : vector<8x32xf32>
    %46 = arith.mulf %41, %45 : vector<8x32xf32>
    %47 = vector.broadcast %c0_i32 : i32 to vector<8x1xi32>
    %48 = arith.cmpi slt, %47, %13 : vector<8x1xi32>
    %49 = vector.shape_cast %48 : vector<8x1xi1> to vector<8x1xi1>
    %50 = vector.broadcast %49 : vector<8x1xi1> to vector<8x32xi1>
    %51 = arith.select %50, %46, %14 : vector<8x32xi1>, vector<8x32xf32>
    %c0_29 = arith.constant 0 : index
    %c0_30 = arith.constant 0 : index
    %52 = vector.load %arg7[%c0_29, %c0_30] : memref<8x32xf32, #tpu.memory_space<vmem>>, vector<8x32xf32>
    tpu.vector_store %arg7[%c0_29, %c0_30], %51 {strides = array<i32>} : memref<8x32xf32, #tpu.memory_space<vmem>>, vector<8x32xf32>,
    %53 = vector.shape_cast %48 : vector<8x1xi1> to vector<8x1xi1>
    %54 = vector.broadcast %53 : vector<8x1xi1> to vector<8x32xi1>
    %55 = arith.select %54, %44, %15 : vector<8x32xi1>, vector<8x32xf32>
    %c0_31 = arith.constant 0 : index
    %c0_32 = arith.constant 0 : index
    %56 = vector.load %arg8[%c0_31, %c0_32] : memref<8x32xf32, #tpu.memory_space<vmem>>, vector<8x32xf32>
    tpu.vector_store %arg8[%c0_31, %c0_32], %55 {strides = array<i32>} : memref<8x32xf32, #tpu.memory_space<vmem>>, vector<8x32xf32>,
    %c1_i32 = arith.constant 1 : i32
    %c0_33 = arith.constant 0 : index
    %c0_34 = arith.constant 0 : index
    %57 = vector.load %arg7[%c0_33, %c0_34] : memref<8x32xf32, #tpu.memory_space<vmem>>, vector<8x32xf32>
    %c0_35 = arith.constant 0 : index
    %c0_36 = arith.constant 0 : index
    %58 = vector.load %arg8[%c0_35, %c0_36] : memref<8x32xf32, #tpu.memory_space<vmem>>, vector<8x32xf32>
    %59 = arith.index_cast %c1_i32 : i32 to index
    %c0_37 = arith.constant 0 : index
    %c0_38 = arith.constant 0 : index
    %60 = vector.load %arg9[%59, %c0_37, %c0_38] : memref<8x8x128xf32, #tpu.memory_space<vmem>>, vector<1x8x128xf32>
    %61 = vector.shape_cast %60 : vector<1x8x128xf32> to vector<8x128xf32>
    %c0_39 = arith.constant 0 : index
    %c0_40 = arith.constant 0 : index
    %62 = vector.load %arg4[%c0_39, %c0_40] : memref<32x128xf32, #tpu.memory_space<vmem>>, vector<32x128xf32>
    %cst_41 = arith.constant dense<0.000000e+00> : vector<8x128xf32>
    %63 = tpu.matmul %57, %62, %cst_41 {dimension_numbers = #tpu.dot_dimension_numbers<[1], [0], [0], [1], [0, 0, 1, 1], [], []>} : vector<8x32xf32>, vector<32x128xf32>, vector<8x128xf32> -> vector<8x128xf32>
    %64 = arith.addf %61, %63 : vector<8x128xf32>
    %65 = vector.extract_strided_slice %64 {offsets = [0, 0], sizes = [8, 32], strides = [1, 1]} : vector<8x128xf32> to vector<8x32xf32>
    %66 = arith.negf %65 : vector<8x32xf32>
    %67 = math.exp %66 : vector<8x32xf32>
    %cst_42 = arith.constant 1.000000e+00 : f32
    %68 = vector.broadcast %cst_42 : f32 to vector<8x32xf32>
    %69 = arith.addf %68, %67 : vector<8x32xf32>
    %70 = arith.divf %68, %69 : vector<8x32xf32>
    %71 = vector.extract_strided_slice %64 {offsets = [0, 32], sizes = [8, 32], strides = [1, 1]} : vector<8x128xf32> to vector<8x32xf32>
    %72 = arith.negf %71 : vector<8x32xf32>
    %73 = math.exp %72 : vector<8x32xf32>
    %cst_43 = arith.constant 1.000000e+00 : f32
    %74 = vector.broadcast %cst_43 : f32 to vector<8x32xf32>
    %75 = arith.addf %74, %73 : vector<8x32xf32>
    %76 = arith.divf %74, %75 : vector<8x32xf32>
    %77 = vector.extract_strided_slice %64 {offsets = [0, 64], sizes = [8, 32], strides = [1, 1]} : vector<8x128xf32> to vector<8x32xf32>
    %78 = math.tanh %77 : vector<8x32xf32>
    %79 = vector.extract_strided_slice %64 {offsets = [0, 96], sizes = [8, 32], strides = [1, 1]} : vector<8x128xf32> to vector<8x32xf32>
    %80 = arith.negf %79 : vector<8x32xf32>
    %81 = math.exp %80 : vector<8x32xf32>
    %cst_44 = arith.constant 1.000000e+00 : f32
    %82 = vector.broadcast %cst_44 : f32 to vector<8x32xf32>
    %83 = arith.addf %82, %81 : vector<8x32xf32>
    %84 = arith.divf %82, %83 : vector<8x32xf32>
    %85 = arith.mulf %76, %58 : vector<8x32xf32>
    %86 = arith.mulf %70, %78 : vector<8x32xf32>
    %87 = arith.addf %85, %86 : vector<8x32xf32>
    %88 = math.tanh %87 : vector<8x32xf32>
    %89 = arith.mulf %84, %88 : vector<8x32xf32>
    %90 = vector.broadcast %c1_i32 : i32 to vector<8x1xi32>
    %91 = arith.cmpi slt, %90, %13 : vector<8x1xi32>
    %92 = vector.shape_cast %91 : vector<8x1xi1> to vector<8x1xi1>
    %93 = vector.broadcast %92 : vector<8x1xi1> to vector<8x32xi1>
    %94 = arith.select %93, %89, %57 : vector<8x32xi1>, vector<8x32xf32>
    %c0_45 = arith.constant 0 : index
    %c0_46 = arith.constant 0 : index
    %95 = vector.load %arg7[%c0_45, %c0_46] : memref<8x32xf32, #tpu.memory_space<vmem>>, vector<8x32xf32>
    tpu.vector_store %arg7[%c0_45, %c0_46], %94 {strides = array<i32>} : memref<8x32xf32, #tpu.memory_space<vmem>>, vector<8x32xf32>,
    %96 = vector.shape_cast %91 : vector<8x1xi1> to vector<8x1xi1>
    %97 = vector.broadcast %96 : vector<8x1xi1> to vector<8x32xi1>
    %98 = arith.select %97, %87, %58 : vector<8x32xi1>, vector<8x32xf32>
    %c0_47 = arith.constant 0 : index
    %c0_48 = arith.constant 0 : index
    %99 = vector.load %arg8[%c0_47, %c0_48] : memref<8x32xf32, #tpu.memory_space<vmem>>, vector<8x32xf32>
    tpu.vector_store %arg8[%c0_47, %c0_48], %98 {strides = array<i32>} : memref<8x32xf32, #tpu.memory_space<vmem>>, vector<8x32xf32>,
    %c2_i32 = arith.constant 2 : i32
    %c0_49 = arith.constant 0 : index
    %c0_50 = arith.constant 0 : index
    %100 = vector.load %arg7[%c0_49, %c0_50] : memref<8x32xf32, #tpu.memory_space<vmem>>, vector<8x32xf32>
    %c0_51 = arith.constant 0 : index
    %c0_52 = arith.constant 0 : index
    %101 = vector.load %arg8[%c0_51, %c0_52] : memref<8x32xf32, #tpu.memory_space<vmem>>, vector<8x32xf32>
    %102 = arith.index_cast %c2_i32 : i32 to index
    %c0_53 = arith.constant 0 : index
    %c0_54 = arith.constant 0 : index
    %103 = vector.load %arg9[%102, %c0_53, %c0_54] : memref<8x8x128xf32, #tpu.memory_space<vmem>>, vector<1x8x128xf32>
    %104 = vector.shape_cast %103 : vector<1x8x128xf32> to vector<8x128xf32>
    %c0_55 = arith.constant 0 : index
    %c0_56 = arith.constant 0 : index
    %105 = vector.load %arg4[%c0_55, %c0_56] : memref<32x128xf32, #tpu.memory_space<vmem>>, vector<32x128xf32>
    %cst_57 = arith.constant dense<0.000000e+00> : vector<8x128xf32>
    %106 = tpu.matmul %100, %105, %cst_57 {dimension_numbers = #tpu.dot_dimension_numbers<[1], [0], [0], [1], [0, 0, 1, 1], [], []>} : vector<8x32xf32>, vector<32x128xf32>, vector<8x128xf32> -> vector<8x128xf32>
    %107 = arith.addf %104, %106 : vector<8x128xf32>
    %108 = vector.extract_strided_slice %107 {offsets = [0, 0], sizes = [8, 32], strides = [1, 1]} : vector<8x128xf32> to vector<8x32xf32>
    %109 = arith.negf %108 : vector<8x32xf32>
    %110 = math.exp %109 : vector<8x32xf32>
    %cst_58 = arith.constant 1.000000e+00 : f32
    %111 = vector.broadcast %cst_58 : f32 to vector<8x32xf32>
    %112 = arith.addf %111, %110 : vector<8x32xf32>
    %113 = arith.divf %111, %112 : vector<8x32xf32>
    %114 = vector.extract_strided_slice %107 {offsets = [0, 32], sizes = [8, 32], strides = [1, 1]} : vector<8x128xf32> to vector<8x32xf32>
    %115 = arith.negf %114 : vector<8x32xf32>
    %116 = math.exp %115 : vector<8x32xf32>
    %cst_59 = arith.constant 1.000000e+00 : f32
    %117 = vector.broadcast %cst_59 : f32 to vector<8x32xf32>
    %118 = arith.addf %117, %116 : vector<8x32xf32>
    %119 = arith.divf %117, %118 : vector<8x32xf32>
    %120 = vector.extract_strided_slice %107 {offsets = [0, 64], sizes = [8, 32], strides = [1, 1]} : vector<8x128xf32> to vector<8x32xf32>
    %121 = math.tanh %120 : vector<8x32xf32>
    %122 = vector.extract_strided_slice %107 {offsets = [0, 96], sizes = [8, 32], strides = [1, 1]} : vector<8x128xf32> to vector<8x32xf32>
    %123 = arith.negf %122 : vector<8x32xf32>
    %124 = math.exp %123 : vector<8x32xf32>
    %cst_60 = arith.constant 1.000000e+00 : f32
    %125 = vector.broadcast %cst_60 : f32 to vector<8x32xf32>
    %126 = arith.addf %125, %124 : vector<8x32xf32>
    %127 = arith.divf %125, %126 : vector<8x32xf32>
    %128 = arith.mulf %119, %101 : vector<8x32xf32>
    %129 = arith.mulf %113, %121 : vector<8x32xf32>
    %130 = arith.addf %128, %129 : vector<8x32xf32>
    %131 = math.tanh %130 : vector<8x32xf32>
    %132 = arith.mulf %127, %131 : vector<8x32xf32>
    %133 = vector.broadcast %c2_i32 : i32 to vector<8x1xi32>
    %134 = arith.cmpi slt, %133, %13 : vector<8x1xi32>
    %135 = vector.shape_cast %134 : vector<8x1xi1> to vector<8x1xi1>
    %136 = vector.broadcast %135 : vector<8x1xi1> to vector<8x32xi1>
    %137 = arith.select %136, %132, %100 : vector<8x32xi1>, vector<8x32xf32>
    %c0_61 = arith.constant 0 : index
    %c0_62 = arith.constant 0 : index
    %138 = vector.load %arg7[%c0_61, %c0_62] : memref<8x32xf32, #tpu.memory_space<vmem>>, vector<8x32xf32>
    tpu.vector_store %arg7[%c0_61, %c0_62], %137 {strides = array<i32>} : memref<8x32xf32, #tpu.memory_space<vmem>>, vector<8x32xf32>,
    %139 = vector.shape_cast %134 : vector<8x1xi1> to vector<8x1xi1>
    %140 = vector.broadcast %139 : vector<8x1xi1> to vector<8x32xi1>
    %141 = arith.select %140, %130, %101 : vector<8x32xi1>, vector<8x32xf32>
    %c0_63 = arith.constant 0 : index
    %c0_64 = arith.constant 0 : index
    %142 = vector.load %arg8[%c0_63, %c0_64] : memref<8x32xf32, #tpu.memory_space<vmem>>, vector<8x32xf32>
    tpu.vector_store %arg8[%c0_63, %c0_64], %141 {strides = array<i32>} : memref<8x32xf32, #tpu.memory_space<vmem>>, vector<8x32xf32>,
    %c3_i32 = arith.constant 3 : i32
    %c0_65 = arith.constant 0 : index
    %c0_66 = arith.constant 0 : index
    %143 = vector.load %arg7[%c0_65, %c0_66] : memref<8x32xf32, #tpu.memory_space<vmem>>, vector<8x32xf32>
    %c0_67 = arith.constant 0 : index
    %c0_68 = arith.constant 0 : index
    %144 = vector.load %arg8[%c0_67, %c0_68] : memref<8x32xf32, #tpu.memory_space<vmem>>, vector<8x32xf32>
    %145 = arith.index_cast %c3_i32 : i32 to index
    %c0_69 = arith.constant 0 : index
    %c0_70 = arith.constant 0 : index
    %146 = vector.load %arg9[%145, %c0_69, %c0_70] : memref<8x8x128xf32, #tpu.memory_space<vmem>>, vector<1x8x128xf32>
    %147 = vector.shape_cast %146 : vector<1x8x128xf32> to vector<8x128xf32>
    %c0_71 = arith.constant 0 : index
    %c0_72 = arith.constant 0 : index
    %148 = vector.load %arg4[%c0_71, %c0_72] : memref<32x128xf32, #tpu.memory_space<vmem>>, vector<32x128xf32>
    %cst_73 = arith.constant dense<0.000000e+00> : vector<8x128xf32>
    %149 = tpu.matmul %143, %148, %cst_73 {dimension_numbers = #tpu.dot_dimension_numbers<[1], [0], [0], [1], [0, 0, 1, 1], [], []>} : vector<8x32xf32>, vector<32x128xf32>, vector<8x128xf32> -> vector<8x128xf32>
    %150 = arith.addf %147, %149 : vector<8x128xf32>
    %151 = vector.extract_strided_slice %150 {offsets = [0, 0], sizes = [8, 32], strides = [1, 1]} : vector<8x128xf32> to vector<8x32xf32>
    %152 = arith.negf %151 : vector<8x32xf32>
    %153 = math.exp %152 : vector<8x32xf32>
    %cst_74 = arith.constant 1.000000e+00 : f32
    %154 = vector.broadcast %cst_74 : f32 to vector<8x32xf32>
    %155 = arith.addf %154, %153 : vector<8x32xf32>
    %156 = arith.divf %154, %155 : vector<8x32xf32>
    %157 = vector.extract_strided_slice %150 {offsets = [0, 32], sizes = [8, 32], strides = [1, 1]} : vector<8x128xf32> to vector<8x32xf32>
    %158 = arith.negf %157 : vector<8x32xf32>
    %159 = math.exp %158 : vector<8x32xf32>
    %cst_75 = arith.constant 1.000000e+00 : f32
    %160 = vector.broadcast %cst_75 : f32 to vector<8x32xf32>
    %161 = arith.addf %160, %159 : vector<8x32xf32>
    %162 = arith.divf %160, %161 : vector<8x32xf32>
    %163 = vector.extract_strided_slice %150 {offsets = [0, 64], sizes = [8, 32], strides = [1, 1]} : vector<8x128xf32> to vector<8x32xf32>
    %164 = math.tanh %163 : vector<8x32xf32>
    %165 = vector.extract_strided_slice %150 {offsets = [0, 96], sizes = [8, 32], strides = [1, 1]} : vector<8x128xf32> to vector<8x32xf32>
    %166 = arith.negf %165 : vector<8x32xf32>
    %167 = math.exp %166 : vector<8x32xf32>
    %cst_76 = arith.constant 1.000000e+00 : f32
    %168 = vector.broadcast %cst_76 : f32 to vector<8x32xf32>
    %169 = arith.addf %168, %167 : vector<8x32xf32>
    %170 = arith.divf %168, %169 : vector<8x32xf32>
    %171 = arith.mulf %162, %144 : vector<8x32xf32>
    %172 = arith.mulf %156, %164 : vector<8x32xf32>
    %173 = arith.addf %171, %172 : vector<8x32xf32>
    %174 = math.tanh %173 : vector<8x32xf32>
    %175 = arith.mulf %170, %174 : vector<8x32xf32>
    %176 = vector.broadcast %c3_i32 : i32 to vector<8x1xi32>
    %177 = arith.cmpi slt, %176, %13 : vector<8x1xi32>
    %178 = vector.shape_cast %177 : vector<8x1xi1> to vector<8x1xi1>
    %179 = vector.broadcast %178 : vector<8x1xi1> to vector<8x32xi1>
    %180 = arith.select %179, %175, %143 : vector<8x32xi1>, vector<8x32xf32>
    %c0_77 = arith.constant 0 : index
    %c0_78 = arith.constant 0 : index
    %181 = vector.load %arg7[%c0_77, %c0_78] : memref<8x32xf32, #tpu.memory_space<vmem>>, vector<8x32xf32>
    tpu.vector_store %arg7[%c0_77, %c0_78], %180 {strides = array<i32>} : memref<8x32xf32, #tpu.memory_space<vmem>>, vector<8x32xf32>,
    %182 = vector.shape_cast %177 : vector<8x1xi1> to vector<8x1xi1>
    %183 = vector.broadcast %182 : vector<8x1xi1> to vector<8x32xi1>
    %184 = arith.select %183, %173, %144 : vector<8x32xi1>, vector<8x32xf32>
    %c0_79 = arith.constant 0 : index
    %c0_80 = arith.constant 0 : index
    %185 = vector.load %arg8[%c0_79, %c0_80] : memref<8x32xf32, #tpu.memory_space<vmem>>, vector<8x32xf32>
    tpu.vector_store %arg8[%c0_79, %c0_80], %184 {strides = array<i32>} : memref<8x32xf32, #tpu.memory_space<vmem>>, vector<8x32xf32>,
    %c4_i32 = arith.constant 4 : i32
    %c0_81 = arith.constant 0 : index
    %c0_82 = arith.constant 0 : index
    %186 = vector.load %arg7[%c0_81, %c0_82] : memref<8x32xf32, #tpu.memory_space<vmem>>, vector<8x32xf32>
    %c0_83 = arith.constant 0 : index
    %c0_84 = arith.constant 0 : index
    %187 = vector.load %arg8[%c0_83, %c0_84] : memref<8x32xf32, #tpu.memory_space<vmem>>, vector<8x32xf32>
    %188 = arith.index_cast %c4_i32 : i32 to index
    %c0_85 = arith.constant 0 : index
    %c0_86 = arith.constant 0 : index
    %189 = vector.load %arg9[%188, %c0_85, %c0_86] : memref<8x8x128xf32, #tpu.memory_space<vmem>>, vector<1x8x128xf32>
    %190 = vector.shape_cast %189 : vector<1x8x128xf32> to vector<8x128xf32>
    %c0_87 = arith.constant 0 : index
    %c0_88 = arith.constant 0 : index
    %191 = vector.load %arg4[%c0_87, %c0_88] : memref<32x128xf32, #tpu.memory_space<vmem>>, vector<32x128xf32>
    %cst_89 = arith.constant dense<0.000000e+00> : vector<8x128xf32>
    %192 = tpu.matmul %186, %191, %cst_89 {dimension_numbers = #tpu.dot_dimension_numbers<[1], [0], [0], [1], [0, 0, 1, 1], [], []>} : vector<8x32xf32>, vector<32x128xf32>, vector<8x128xf32> -> vector<8x128xf32>
    %193 = arith.addf %190, %192 : vector<8x128xf32>
    %194 = vector.extract_strided_slice %193 {offsets = [0, 0], sizes = [8, 32], strides = [1, 1]} : vector<8x128xf32> to vector<8x32xf32>
    %195 = arith.negf %194 : vector<8x32xf32>
    %196 = math.exp %195 : vector<8x32xf32>
    %cst_90 = arith.constant 1.000000e+00 : f32
    %197 = vector.broadcast %cst_90 : f32 to vector<8x32xf32>
    %198 = arith.addf %197, %196 : vector<8x32xf32>
    %199 = arith.divf %197, %198 : vector<8x32xf32>
    %200 = vector.extract_strided_slice %193 {offsets = [0, 32], sizes = [8, 32], strides = [1, 1]} : vector<8x128xf32> to vector<8x32xf32>
    %201 = arith.negf %200 : vector<8x32xf32>
    %202 = math.exp %201 : vector<8x32xf32>
    %cst_91 = arith.constant 1.000000e+00 : f32
    %203 = vector.broadcast %cst_91 : f32 to vector<8x32xf32>
    %204 = arith.addf %203, %202 : vector<8x32xf32>
    %205 = arith.divf %203, %204 : vector<8x32xf32>
    %206 = vector.extract_strided_slice %193 {offsets = [0, 64], sizes = [8, 32], strides = [1, 1]} : vector<8x128xf32> to vector<8x32xf32>
    %207 = math.tanh %206 : vector<8x32xf32>
    %208 = vector.extract_strided_slice %193 {offsets = [0, 96], sizes = [8, 32], strides = [1, 1]} : vector<8x128xf32> to vector<8x32xf32>
    %209 = arith.negf %208 : vector<8x32xf32>
    %210 = math.exp %209 : vector<8x32xf32>
    %cst_92 = arith.constant 1.000000e+00 : f32
    %211 = vector.broadcast %cst_92 : f32 to vector<8x32xf32>
    %212 = arith.addf %211, %210 : vector<8x32xf32>
    %213 = arith.divf %211, %212 : vector<8x32xf32>
    %214 = arith.mulf %205, %187 : vector<8x32xf32>
    %215 = arith.mulf %199, %207 : vector<8x32xf32>
    %216 = arith.addf %214, %215 : vector<8x32xf32>
    %217 = math.tanh %216 : vector<8x32xf32>
    %218 = arith.mulf %213, %217 : vector<8x32xf32>
    %219 = vector.broadcast %c4_i32 : i32 to vector<8x1xi32>
    %220 = arith.cmpi slt, %219, %13 : vector<8x1xi32>
    %221 = vector.shape_cast %220 : vector<8x1xi1> to vector<8x1xi1>
    %222 = vector.broadcast %221 : vector<8x1xi1> to vector<8x32xi1>
    %223 = arith.select %222, %218, %186 : vector<8x32xi1>, vector<8x32xf32>
    %c0_93 = arith.constant 0 : index
    %c0_94 = arith.constant 0 : index
    %224 = vector.load %arg7[%c0_93, %c0_94] : memref<8x32xf32, #tpu.memory_space<vmem>>, vector<8x32xf32>
    tpu.vector_store %arg7[%c0_93, %c0_94], %223 {strides = array<i32>} : memref<8x32xf32, #tpu.memory_space<vmem>>, vector<8x32xf32>,
    %225 = vector.shape_cast %220 : vector<8x1xi1> to vector<8x1xi1>
    %226 = vector.broadcast %225 : vector<8x1xi1> to vector<8x32xi1>
    %227 = arith.select %226, %216, %187 : vector<8x32xi1>, vector<8x32xf32>
    %c0_95 = arith.constant 0 : index
    %c0_96 = arith.constant 0 : index
    %228 = vector.load %arg8[%c0_95, %c0_96] : memref<8x32xf32, #tpu.memory_space<vmem>>, vector<8x32xf32>
    tpu.vector_store %arg8[%c0_95, %c0_96], %227 {strides = array<i32>} : memref<8x32xf32, #tpu.memory_space<vmem>>, vector<8x32xf32>,
    %c5_i32 = arith.constant 5 : i32
    %c0_97 = arith.constant 0 : index
    %c0_98 = arith.constant 0 : index
    %229 = vector.load %arg7[%c0_97, %c0_98] : memref<8x32xf32, #tpu.memory_space<vmem>>, vector<8x32xf32>
    %c0_99 = arith.constant 0 : index
    %c0_100 = arith.constant 0 : index
    %230 = vector.load %arg8[%c0_99, %c0_100] : memref<8x32xf32, #tpu.memory_space<vmem>>, vector<8x32xf32>
    %231 = arith.index_cast %c5_i32 : i32 to index
    %c0_101 = arith.constant 0 : index
    %c0_102 = arith.constant 0 : index
    %232 = vector.load %arg9[%231, %c0_101, %c0_102] : memref<8x8x128xf32, #tpu.memory_space<vmem>>, vector<1x8x128xf32>
    %233 = vector.shape_cast %232 : vector<1x8x128xf32> to vector<8x128xf32>
    %c0_103 = arith.constant 0 : index
    %c0_104 = arith.constant 0 : index
    %234 = vector.load %arg4[%c0_103, %c0_104] : memref<32x128xf32, #tpu.memory_space<vmem>>, vector<32x128xf32>
    %cst_105 = arith.constant dense<0.000000e+00> : vector<8x128xf32>
    %235 = tpu.matmul %229, %234, %cst_105 {dimension_numbers = #tpu.dot_dimension_numbers<[1], [0], [0], [1], [0, 0, 1, 1], [], []>} : vector<8x32xf32>, vector<32x128xf32>, vector<8x128xf32> -> vector<8x128xf32>
    %236 = arith.addf %233, %235 : vector<8x128xf32>
    %237 = vector.extract_strided_slice %236 {offsets = [0, 0], sizes = [8, 32], strides = [1, 1]} : vector<8x128xf32> to vector<8x32xf32>
    %238 = arith.negf %237 : vector<8x32xf32>
    %239 = math.exp %238 : vector<8x32xf32>
    %cst_106 = arith.constant 1.000000e+00 : f32
    %240 = vector.broadcast %cst_106 : f32 to vector<8x32xf32>
    %241 = arith.addf %240, %239 : vector<8x32xf32>
    %242 = arith.divf %240, %241 : vector<8x32xf32>
    %243 = vector.extract_strided_slice %236 {offsets = [0, 32], sizes = [8, 32], strides = [1, 1]} : vector<8x128xf32> to vector<8x32xf32>
    %244 = arith.negf %243 : vector<8x32xf32>
    %245 = math.exp %244 : vector<8x32xf32>
    %cst_107 = arith.constant 1.000000e+00 : f32
    %246 = vector.broadcast %cst_107 : f32 to vector<8x32xf32>
    %247 = arith.addf %246, %245 : vector<8x32xf32>
    %248 = arith.divf %246, %247 : vector<8x32xf32>
    %249 = vector.extract_strided_slice %236 {offsets = [0, 64], sizes = [8, 32], strides = [1, 1]} : vector<8x128xf32> to vector<8x32xf32>
    %250 = math.tanh %249 : vector<8x32xf32>
    %251 = vector.extract_strided_slice %236 {offsets = [0, 96], sizes = [8, 32], strides = [1, 1]} : vector<8x128xf32> to vector<8x32xf32>
    %252 = arith.negf %251 : vector<8x32xf32>
    %253 = math.exp %252 : vector<8x32xf32>
    %cst_108 = arith.constant 1.000000e+00 : f32
    %254 = vector.broadcast %cst_108 : f32 to vector<8x32xf32>
    %255 = arith.addf %254, %253 : vector<8x32xf32>
    %256 = arith.divf %254, %255 : vector<8x32xf32>
    %257 = arith.mulf %248, %230 : vector<8x32xf32>
    %258 = arith.mulf %242, %250 : vector<8x32xf32>
    %259 = arith.addf %257, %258 : vector<8x32xf32>
    %260 = math.tanh %259 : vector<8x32xf32>
    %261 = arith.mulf %256, %260 : vector<8x32xf32>
    %262 = vector.broadcast %c5_i32 : i32 to vector<8x1xi32>
    %263 = arith.cmpi slt, %262, %13 : vector<8x1xi32>
    %264 = vector.shape_cast %263 : vector<8x1xi1> to vector<8x1xi1>
    %265 = vector.broadcast %264 : vector<8x1xi1> to vector<8x32xi1>
    %266 = arith.select %265, %261, %229 : vector<8x32xi1>, vector<8x32xf32>
    %c0_109 = arith.constant 0 : index
    %c0_110 = arith.constant 0 : index
    %267 = vector.load %arg7[%c0_109, %c0_110] : memref<8x32xf32, #tpu.memory_space<vmem>>, vector<8x32xf32>
    tpu.vector_store %arg7[%c0_109, %c0_110], %266 {strides = array<i32>} : memref<8x32xf32, #tpu.memory_space<vmem>>, vector<8x32xf32>,
    %268 = vector.shape_cast %263 : vector<8x1xi1> to vector<8x1xi1>
    %269 = vector.broadcast %268 : vector<8x1xi1> to vector<8x32xi1>
    %270 = arith.select %269, %259, %230 : vector<8x32xi1>, vector<8x32xf32>
    %c0_111 = arith.constant 0 : index
    %c0_112 = arith.constant 0 : index
    %271 = vector.load %arg8[%c0_111, %c0_112] : memref<8x32xf32, #tpu.memory_space<vmem>>, vector<8x32xf32>
    tpu.vector_store %arg8[%c0_111, %c0_112], %270 {strides = array<i32>} : memref<8x32xf32, #tpu.memory_space<vmem>>, vector<8x32xf32>,
    %c6_i32 = arith.constant 6 : i32
    %c0_113 = arith.constant 0 : index
    %c0_114 = arith.constant 0 : index
    %272 = vector.load %arg7[%c0_113, %c0_114] : memref<8x32xf32, #tpu.memory_space<vmem>>, vector<8x32xf32>
    %c0_115 = arith.constant 0 : index
    %c0_116 = arith.constant 0 : index
    %273 = vector.load %arg8[%c0_115, %c0_116] : memref<8x32xf32, #tpu.memory_space<vmem>>, vector<8x32xf32>
    %274 = arith.index_cast %c6_i32 : i32 to index
    %c0_117 = arith.constant 0 : index
    %c0_118 = arith.constant 0 : index
    %275 = vector.load %arg9[%274, %c0_117, %c0_118] : memref<8x8x128xf32, #tpu.memory_space<vmem>>, vector<1x8x128xf32>
    %276 = vector.shape_cast %275 : vector<1x8x128xf32> to vector<8x128xf32>
    %c0_119 = arith.constant 0 : index
    %c0_120 = arith.constant 0 : index
    %277 = vector.load %arg4[%c0_119, %c0_120] : memref<32x128xf32, #tpu.memory_space<vmem>>, vector<32x128xf32>
    %cst_121 = arith.constant dense<0.000000e+00> : vector<8x128xf32>
    %278 = tpu.matmul %272, %277, %cst_121 {dimension_numbers = #tpu.dot_dimension_numbers<[1], [0], [0], [1], [0, 0, 1, 1], [], []>} : vector<8x32xf32>, vector<32x128xf32>, vector<8x128xf32> -> vector<8x128xf32>
    %279 = arith.addf %276, %278 : vector<8x128xf32>
    %280 = vector.extract_strided_slice %279 {offsets = [0, 0], sizes = [8, 32], strides = [1, 1]} : vector<8x128xf32> to vector<8x32xf32>
    %281 = arith.negf %280 : vector<8x32xf32>
    %282 = math.exp %281 : vector<8x32xf32>
    %cst_122 = arith.constant 1.000000e+00 : f32
    %283 = vector.broadcast %cst_122 : f32 to vector<8x32xf32>
    %284 = arith.addf %283, %282 : vector<8x32xf32>
    %285 = arith.divf %283, %284 : vector<8x32xf32>
    %286 = vector.extract_strided_slice %279 {offsets = [0, 32], sizes = [8, 32], strides = [1, 1]} : vector<8x128xf32> to vector<8x32xf32>
    %287 = arith.negf %286 : vector<8x32xf32>
    %288 = math.exp %287 : vector<8x32xf32>
    %cst_123 = arith.constant 1.000000e+00 : f32
    %289 = vector.broadcast %cst_123 : f32 to vector<8x32xf32>
    %290 = arith.addf %289, %288 : vector<8x32xf32>
    %291 = arith.divf %289, %290 : vector<8x32xf32>
    %292 = vector.extract_strided_slice %279 {offsets = [0, 64], sizes = [8, 32], strides = [1, 1]} : vector<8x128xf32> to vector<8x32xf32>
    %293 = math.tanh %292 : vector<8x32xf32>
    %294 = vector.extract_strided_slice %279 {offsets = [0, 96], sizes = [8, 32], strides = [1, 1]} : vector<8x128xf32> to vector<8x32xf32>
    %295 = arith.negf %294 : vector<8x32xf32>
    %296 = math.exp %295 : vector<8x32xf32>
    %cst_124 = arith.constant 1.000000e+00 : f32
    %297 = vector.broadcast %cst_124 : f32 to vector<8x32xf32>
    %298 = arith.addf %297, %296 : vector<8x32xf32>
    %299 = arith.divf %297, %298 : vector<8x32xf32>
    %300 = arith.mulf %291, %273 : vector<8x32xf32>
    %301 = arith.mulf %285, %293 : vector<8x32xf32>
    %302 = arith.addf %300, %301 : vector<8x32xf32>
    %303 = math.tanh %302 : vector<8x32xf32>
    %304 = arith.mulf %299, %303 : vector<8x32xf32>
    %305 = vector.broadcast %c6_i32 : i32 to vector<8x1xi32>
    %306 = arith.cmpi slt, %305, %13 : vector<8x1xi32>
    %307 = vector.shape_cast %306 : vector<8x1xi1> to vector<8x1xi1>
    %308 = vector.broadcast %307 : vector<8x1xi1> to vector<8x32xi1>
    %309 = arith.select %308, %304, %272 : vector<8x32xi1>, vector<8x32xf32>
    %c0_125 = arith.constant 0 : index
    %c0_126 = arith.constant 0 : index
    %310 = vector.load %arg7[%c0_125, %c0_126] : memref<8x32xf32, #tpu.memory_space<vmem>>, vector<8x32xf32>
    tpu.vector_store %arg7[%c0_125, %c0_126], %309 {strides = array<i32>} : memref<8x32xf32, #tpu.memory_space<vmem>>, vector<8x32xf32>,
    %311 = vector.shape_cast %306 : vector<8x1xi1> to vector<8x1xi1>
    %312 = vector.broadcast %311 : vector<8x1xi1> to vector<8x32xi1>
    %313 = arith.select %312, %302, %273 : vector<8x32xi1>, vector<8x32xf32>
    %c0_127 = arith.constant 0 : index
    %c0_128 = arith.constant 0 : index
    %314 = vector.load %arg8[%c0_127, %c0_128] : memref<8x32xf32, #tpu.memory_space<vmem>>, vector<8x32xf32>
    tpu.vector_store %arg8[%c0_127, %c0_128], %313 {strides = array<i32>} : memref<8x32xf32, #tpu.memory_space<vmem>>, vector<8x32xf32>,
    %c7_i32 = arith.constant 7 : i32
    %c0_129 = arith.constant 0 : index
    %c0_130 = arith.constant 0 : index
    %315 = vector.load %arg7[%c0_129, %c0_130] : memref<8x32xf32, #tpu.memory_space<vmem>>, vector<8x32xf32>
    %c0_131 = arith.constant 0 : index
    %c0_132 = arith.constant 0 : index
    %316 = vector.load %arg8[%c0_131, %c0_132] : memref<8x32xf32, #tpu.memory_space<vmem>>, vector<8x32xf32>
    %317 = arith.index_cast %c7_i32 : i32 to index
    %c0_133 = arith.constant 0 : index
    %c0_134 = arith.constant 0 : index
    %318 = vector.load %arg9[%317, %c0_133, %c0_134] : memref<8x8x128xf32, #tpu.memory_space<vmem>>, vector<1x8x128xf32>
    %319 = vector.shape_cast %318 : vector<1x8x128xf32> to vector<8x128xf32>
    %c0_135 = arith.constant 0 : index
    %c0_136 = arith.constant 0 : index
    %320 = vector.load %arg4[%c0_135, %c0_136] : memref<32x128xf32, #tpu.memory_space<vmem>>, vector<32x128xf32>
    %cst_137 = arith.constant dense<0.000000e+00> : vector<8x128xf32>
    %321 = tpu.matmul %315, %320, %cst_137 {dimension_numbers = #tpu.dot_dimension_numbers<[1], [0], [0], [1], [0, 0, 1, 1], [], []>} : vector<8x32xf32>, vector<32x128xf32>, vector<8x128xf32> -> vector<8x128xf32>
    %322 = arith.addf %319, %321 : vector<8x128xf32>
    %323 = vector.extract_strided_slice %322 {offsets = [0, 0], sizes = [8, 32], strides = [1, 1]} : vector<8x128xf32> to vector<8x32xf32>
    %324 = arith.negf %323 : vector<8x32xf32>
    %325 = math.exp %324 : vector<8x32xf32>
    %cst_138 = arith.constant 1.000000e+00 : f32
    %326 = vector.broadcast %cst_138 : f32 to vector<8x32xf32>
    %327 = arith.addf %326, %325 : vector<8x32xf32>
    %328 = arith.divf %326, %327 : vector<8x32xf32>
    %329 = vector.extract_strided_slice %322 {offsets = [0, 32], sizes = [8, 32], strides = [1, 1]} : vector<8x128xf32> to vector<8x32xf32>
    %330 = arith.negf %329 : vector<8x32xf32>
    %331 = math.exp %330 : vector<8x32xf32>
    %cst_139 = arith.constant 1.000000e+00 : f32
    %332 = vector.broadcast %cst_139 : f32 to vector<8x32xf32>
    %333 = arith.addf %332, %331 : vector<8x32xf32>
    %334 = arith.divf %332, %333 : vector<8x32xf32>
    %335 = vector.extract_strided_slice %322 {offsets = [0, 64], sizes = [8, 32], strides = [1, 1]} : vector<8x128xf32> to vector<8x32xf32>
    %336 = math.tanh %335 : vector<8x32xf32>
    %337 = vector.extract_strided_slice %322 {offsets = [0, 96], sizes = [8, 32], strides = [1, 1]} : vector<8x128xf32> to vector<8x32xf32>
    %338 = arith.negf %337 : vector<8x32xf32>
    %339 = math.exp %338 : vector<8x32xf32>
    %cst_140 = arith.constant 1.000000e+00 : f32
    %340 = vector.broadcast %cst_140 : f32 to vector<8x32xf32>
    %341 = arith.addf %340, %339 : vector<8x32xf32>
    %342 = arith.divf %340, %341 : vector<8x32xf32>
    %343 = arith.mulf %334, %316 : vector<8x32xf32>
    %344 = arith.mulf %328, %336 : vector<8x32xf32>
    %345 = arith.addf %343, %344 : vector<8x32xf32>
    %346 = math.tanh %345 : vector<8x32xf32>
    %347 = arith.mulf %342, %346 : vector<8x32xf32>
    %348 = vector.broadcast %c7_i32 : i32 to vector<8x1xi32>
    %349 = arith.cmpi slt, %348, %13 : vector<8x1xi32>
    %350 = vector.shape_cast %349 : vector<8x1xi1> to vector<8x1xi1>
    %351 = vector.broadcast %350 : vector<8x1xi1> to vector<8x32xi1>
    %352 = arith.select %351, %347, %315 : vector<8x32xi1>, vector<8x32xf32>
    %c0_141 = arith.constant 0 : index
    %c0_142 = arith.constant 0 : index
    %353 = vector.load %arg7[%c0_141, %c0_142] : memref<8x32xf32, #tpu.memory_space<vmem>>, vector<8x32xf32>
    tpu.vector_store %arg7[%c0_141, %c0_142], %352 {strides = array<i32>} : memref<8x32xf32, #tpu.memory_space<vmem>>, vector<8x32xf32>,
    %354 = vector.shape_cast %349 : vector<8x1xi1> to vector<8x1xi1>
    %355 = vector.broadcast %354 : vector<8x1xi1> to vector<8x32xi1>
    %356 = arith.select %355, %345, %316 : vector<8x32xi1>, vector<8x32xf32>
    %c0_143 = arith.constant 0 : index
    %c0_144 = arith.constant 0 : index
    %357 = vector.load %arg8[%c0_143, %c0_144] : memref<8x32xf32, #tpu.memory_space<vmem>>, vector<8x32xf32>
    tpu.vector_store %arg8[%c0_143, %c0_144], %356 {strides = array<i32>} : memref<8x32xf32, #tpu.memory_space<vmem>>, vector<8x32xf32>,
    %c8_i32 = arith.constant 8 : i32
    %c0_145 = arith.constant 0 : index
    %c0_146 = arith.constant 0 : index
    %358 = vector.load %arg7[%c0_145, %c0_146] : memref<8x32xf32, #tpu.memory_space<vmem>>, vector<8x32xf32>
    %c0_147 = arith.constant 0 : index
    %c0_148 = arith.constant 0 : index
    %359 = vector.load %arg6[%c0_147, %c0_148] : memref<8x32xf32, #tpu.memory_space<vmem>>, vector<8x32xf32>
    tpu.vector_store %arg6[%c0_147, %c0_148], %358 {strides = array<i32>} : memref<8x32xf32, #tpu.memory_space<vmem>>, vector<8x32xf32>,
    return
  }
  func.func @transform_0(%arg0: i32) -> (i32, i32, i32) {
    %c0_i32 = arith.constant 0 : i32
    %c0_i32_0 = arith.constant 0 : i32
    %c0_i32_1 = arith.constant 0 : i32
    return %c0_i32, %arg0, %c0_i32_0 : i32, i32, i32
  }
  func.func @transform_1(%arg0: i32) -> (i32, i32) {
    %c0_i32 = arith.constant 0 : i32
    %c0_i32_0 = arith.constant 0 : i32
    return %arg0, %c0_i32 : i32, i32
  }
  func.func @transform_2(%arg0: i32) -> (i32, i32) {
    %c0_i32 = arith.constant 0 : i32
    %c0_i32_0 = arith.constant 0 : i32
    %c0_i32_1 = arith.constant 0 : i32
    return %c0_i32, %c0_i32_0 : i32, i32
  }
  func.func @transform_3(%arg0: i32) -> (i32, i32) {
    %c0_i32 = arith.constant 0 : i32
    %c0_i32_0 = arith.constant 0 : i32
    %c0_i32_1 = arith.constant 0 : i32
    return %c0_i32, %c0_i32_0 : i32, i32
  }
  func.func @transform_4(%arg0: i32) -> (i32, i32) {
    %c0_i32 = arith.constant 0 : i32
    %c0_i32_0 = arith.constant 0 : i32
    %c0_i32_1 = arith.constant 0 : i32
    return %c0_i32, %c0_i32_0 : i32, i32
  }
  func.func @transform_5(%arg0: i32) -> (i32, i32) {
    %c0_i32 = arith.constant 0 : i32
    %c0_i32_0 = arith.constant 0 : i32
    return %arg0, %c0_i32 : i32, i32
  }
}

module attributes {stable_mosaic.version = 11 : i64} {
  func.func @lstm_kernel(%arg0: i32, %arg1: memref<3x8x32xf32, #tpu.memory_space<vmem>>, %arg2: memref<8x1xi32, #tpu.memory_space<vmem>>, %arg3: memref<32x128xf32, #tpu.memory_space<vmem>>, %arg4: memref<32x128xf32, #tpu.memory_space<vmem>>, %arg5: memref<1x128xf32, #tpu.memory_space<vmem>>, %arg6: memref<8x32xf32, #tpu.memory_space<vmem>>, %arg7: memref<8x32xf32, #tpu.memory_space<vmem>>, %arg8: memref<8x32xf32, #tpu.memory_space<vmem>>, %arg9: memref<3x8x128xf32, #tpu.memory_space<vmem>>) attributes {dimension_semantics = [#tpu.dimension_semantics<parallel>], iteration_bounds = array<i64: 1>, scalar_prefetch = 0 : i64, scratch_operands = 3 : i64, tpu.core_type = #tpu.core_type<tc>, window_params = [{transform_indices = @transform_0, window_bounds = array<i64: 3, 8, 32>}, {transform_indices = @transform_1, window_bounds = array<i64: 8, 1>}, {pipeline_mode = #tpu.pipeline_mode<synchronous>, transform_indices = @transform_2, window_bounds = array<i64: 32, 128>}, {pipeline_mode = #tpu.pipeline_mode<synchronous>, transform_indices = @transform_3, window_bounds = array<i64: 32, 128>}, {pipeline_mode = #tpu.pipeline_mode<synchronous>, transform_indices = @transform_4, window_bounds = array<i64: 1, 128>}, {transform_indices = @transform_5, window_bounds = array<i64: 8, 32>}]} {
    %c0 = arith.constant 0 : index
    %c0_0 = arith.constant 0 : index
    %c0_1 = arith.constant 0 : index
    %0 = vector.load %arg1[%c0, %c0_0, %c0_1] : memref<3x8x32xf32, #tpu.memory_space<vmem>>, vector<3x8x32xf32>
    %1 = vector.shape_cast %0 : vector<3x8x32xf32> to vector<24x32xf32>
    %c0_2 = arith.constant 0 : index
    %c0_3 = arith.constant 0 : index
    %2 = vector.load %arg3[%c0_2, %c0_3] : memref<32x128xf32, #tpu.memory_space<vmem>>, vector<32x128xf32>
    %cst = arith.constant dense<0.000000e+00> : vector<24x128xf32>
    %3 = tpu.matmul %1, %2, %cst {dimension_numbers = #tpu.dot_dimension_numbers<[1], [0], [0], [1], [0, 0, 1, 1], [], []>} : vector<24x32xf32>, vector<32x128xf32>, vector<24x128xf32> -> vector<24x128xf32>
    %c0_4 = arith.constant 0 : index
    %c0_5 = arith.constant 0 : index
    %4 = vector.load %arg5[%c0_4, %c0_5] : memref<1x128xf32, #tpu.memory_space<vmem>>, vector<1x128xf32>
    %5 = vector.broadcast %4 : vector<1x128xf32> to vector<24x128xf32>
    %6 = arith.addf %3, %5 : vector<24x128xf32>
    %7 = vector.shape_cast %6 : vector<24x128xf32> to vector<3x8x128xf32>
    %c0_6 = arith.constant 0 : index
    %c0_7 = arith.constant 0 : index
    %c0_8 = arith.constant 0 : index
    %8 = vector.load %arg9[%c0_6, %c0_7, %c0_8] : memref<3x8x128xf32, #tpu.memory_space<vmem>>, vector<3x8x128xf32>
    tpu.vector_store %arg9[%c0_6, %c0_7, %c0_8], %7 {strides = array<i32>} : memref<3x8x128xf32, #tpu.memory_space<vmem>>, vector<3x8x128xf32>,
    %cst_9 = arith.constant 0.000000e+00 : f32
    %9 = vector.broadcast %cst_9 : f32 to vector<8x32xf32>
    %c0_10 = arith.constant 0 : index
    %c0_11 = arith.constant 0 : index
    %10 = vector.load %arg7[%c0_10, %c0_11] : memref<8x32xf32, #tpu.memory_space<vmem>>, vector<8x32xf32>
    tpu.vector_store %arg7[%c0_10, %c0_11], %9 {strides = array<i32>} : memref<8x32xf32, #tpu.memory_space<vmem>>, vector<8x32xf32>,
    %cst_12 = arith.constant 0.000000e+00 : f32
    %11 = vector.broadcast %cst_12 : f32 to vector<8x32xf32>
    %c0_13 = arith.constant 0 : index
    %c0_14 = arith.constant 0 : index
    %12 = vector.load %arg8[%c0_13, %c0_14] : memref<8x32xf32, #tpu.memory_space<vmem>>, vector<8x32xf32>
    tpu.vector_store %arg8[%c0_13, %c0_14], %11 {strides = array<i32>} : memref<8x32xf32, #tpu.memory_space<vmem>>, vector<8x32xf32>,
    %c0_15 = arith.constant 0 : index
    %c0_16 = arith.constant 0 : index
    %13 = vector.load %arg2[%c0_15, %c0_16] : memref<8x1xi32, #tpu.memory_space<vmem>>, vector<8x1xi32>
    %c0_i32 = arith.constant 0 : i32
    %c0_17 = arith.constant 0 : index
    %c0_18 = arith.constant 0 : index
    %14 = vector.load %arg7[%c0_17, %c0_18] : memref<8x32xf32, #tpu.memory_space<vmem>>, vector<8x32xf32>
    %c0_19 = arith.constant 0 : index
    %c0_20 = arith.constant 0 : index
    %15 = vector.load %arg8[%c0_19, %c0_20] : memref<8x32xf32, #tpu.memory_space<vmem>>, vector<8x32xf32>
    %16 = arith.index_cast %c0_i32 : i32 to index
    %c0_21 = arith.constant 0 : index
    %c0_22 = arith.constant 0 : index
    %17 = vector.load %arg9[%16, %c0_21, %c0_22] : memref<3x8x128xf32, #tpu.memory_space<vmem>>, vector<1x8x128xf32>
    %18 = vector.shape_cast %17 : vector<1x8x128xf32> to vector<8x128xf32>
    %c0_23 = arith.constant 0 : index
    %c0_24 = arith.constant 0 : index
    %19 = vector.load %arg4[%c0_23, %c0_24] : memref<32x128xf32, #tpu.memory_space<vmem>>, vector<32x128xf32>
    %cst_25 = arith.constant dense<0.000000e+00> : vector<8x128xf32>
    %20 = tpu.matmul %14, %19, %cst_25 {dimension_numbers = #tpu.dot_dimension_numbers<[1], [0], [0], [1], [0, 0, 1, 1], [], []>} : vector<8x32xf32>, vector<32x128xf32>, vector<8x128xf32> -> vector<8x128xf32>
    %21 = arith.addf %18, %20 : vector<8x128xf32>
    %22 = vector.extract_strided_slice %21 {offsets = [0, 0], sizes = [8, 32], strides = [1, 1]} : vector<8x128xf32> to vector<8x32xf32>
    %23 = arith.negf %22 : vector<8x32xf32>
    %24 = math.exp %23 : vector<8x32xf32>
    %cst_26 = arith.constant 1.000000e+00 : f32
    %25 = vector.broadcast %cst_26 : f32 to vector<8x32xf32>
    %26 = arith.addf %25, %24 : vector<8x32xf32>
    %27 = arith.divf %25, %26 : vector<8x32xf32>
    %28 = vector.extract_strided_slice %21 {offsets = [0, 32], sizes = [8, 32], strides = [1, 1]} : vector<8x128xf32> to vector<8x32xf32>
    %29 = arith.negf %28 : vector<8x32xf32>
    %30 = math.exp %29 : vector<8x32xf32>
    %cst_27 = arith.constant 1.000000e+00 : f32
    %31 = vector.broadcast %cst_27 : f32 to vector<8x32xf32>
    %32 = arith.addf %31, %30 : vector<8x32xf32>
    %33 = arith.divf %31, %32 : vector<8x32xf32>
    %34 = vector.extract_strided_slice %21 {offsets = [0, 64], sizes = [8, 32], strides = [1, 1]} : vector<8x128xf32> to vector<8x32xf32>
    %35 = math.tanh %34 : vector<8x32xf32>
    %36 = vector.extract_strided_slice %21 {offsets = [0, 96], sizes = [8, 32], strides = [1, 1]} : vector<8x128xf32> to vector<8x32xf32>
    %37 = arith.negf %36 : vector<8x32xf32>
    %38 = math.exp %37 : vector<8x32xf32>
    %cst_28 = arith.constant 1.000000e+00 : f32
    %39 = vector.broadcast %cst_28 : f32 to vector<8x32xf32>
    %40 = arith.addf %39, %38 : vector<8x32xf32>
    %41 = arith.divf %39, %40 : vector<8x32xf32>
    %42 = arith.mulf %33, %15 : vector<8x32xf32>
    %43 = arith.mulf %27, %35 : vector<8x32xf32>
    %44 = arith.addf %42, %43 : vector<8x32xf32>
    %45 = math.tanh %44 : vector<8x32xf32>
    %46 = arith.mulf %41, %45 : vector<8x32xf32>
    %47 = vector.broadcast %c0_i32 : i32 to vector<8x1xi32>
    %48 = arith.cmpi slt, %47, %13 : vector<8x1xi32>
    %49 = vector.shape_cast %48 : vector<8x1xi1> to vector<8x1xi1>
    %50 = vector.broadcast %49 : vector<8x1xi1> to vector<8x32xi1>
    %51 = arith.select %50, %46, %14 : vector<8x32xi1>, vector<8x32xf32>
    %c0_29 = arith.constant 0 : index
    %c0_30 = arith.constant 0 : index
    %52 = vector.load %arg7[%c0_29, %c0_30] : memref<8x32xf32, #tpu.memory_space<vmem>>, vector<8x32xf32>
    tpu.vector_store %arg7[%c0_29, %c0_30], %51 {strides = array<i32>} : memref<8x32xf32, #tpu.memory_space<vmem>>, vector<8x32xf32>,
    %53 = vector.shape_cast %48 : vector<8x1xi1> to vector<8x1xi1>
    %54 = vector.broadcast %53 : vector<8x1xi1> to vector<8x32xi1>
    %55 = arith.select %54, %44, %15 : vector<8x32xi1>, vector<8x32xf32>
    %c0_31 = arith.constant 0 : index
    %c0_32 = arith.constant 0 : index
    %56 = vector.load %arg8[%c0_31, %c0_32] : memref<8x32xf32, #tpu.memory_space<vmem>>, vector<8x32xf32>
    tpu.vector_store %arg8[%c0_31, %c0_32], %55 {strides = array<i32>} : memref<8x32xf32, #tpu.memory_space<vmem>>, vector<8x32xf32>,
    %c1_i32 = arith.constant 1 : i32
    %c0_33 = arith.constant 0 : index
    %c0_34 = arith.constant 0 : index
    %57 = vector.load %arg7[%c0_33, %c0_34] : memref<8x32xf32, #tpu.memory_space<vmem>>, vector<8x32xf32>
    %c0_35 = arith.constant 0 : index
    %c0_36 = arith.constant 0 : index
    %58 = vector.load %arg8[%c0_35, %c0_36] : memref<8x32xf32, #tpu.memory_space<vmem>>, vector<8x32xf32>
    %59 = arith.index_cast %c1_i32 : i32 to index
    %c0_37 = arith.constant 0 : index
    %c0_38 = arith.constant 0 : index
    %60 = vector.load %arg9[%59, %c0_37, %c0_38] : memref<3x8x128xf32, #tpu.memory_space<vmem>>, vector<1x8x128xf32>
    %61 = vector.shape_cast %60 : vector<1x8x128xf32> to vector<8x128xf32>
    %c0_39 = arith.constant 0 : index
    %c0_40 = arith.constant 0 : index
    %62 = vector.load %arg4[%c0_39, %c0_40] : memref<32x128xf32, #tpu.memory_space<vmem>>, vector<32x128xf32>
    %cst_41 = arith.constant dense<0.000000e+00> : vector<8x128xf32>
    %63 = tpu.matmul %57, %62, %cst_41 {dimension_numbers = #tpu.dot_dimension_numbers<[1], [0], [0], [1], [0, 0, 1, 1], [], []>} : vector<8x32xf32>, vector<32x128xf32>, vector<8x128xf32> -> vector<8x128xf32>
    %64 = arith.addf %61, %63 : vector<8x128xf32>
    %65 = vector.extract_strided_slice %64 {offsets = [0, 0], sizes = [8, 32], strides = [1, 1]} : vector<8x128xf32> to vector<8x32xf32>
    %66 = arith.negf %65 : vector<8x32xf32>
    %67 = math.exp %66 : vector<8x32xf32>
    %cst_42 = arith.constant 1.000000e+00 : f32
    %68 = vector.broadcast %cst_42 : f32 to vector<8x32xf32>
    %69 = arith.addf %68, %67 : vector<8x32xf32>
    %70 = arith.divf %68, %69 : vector<8x32xf32>
    %71 = vector.extract_strided_slice %64 {offsets = [0, 32], sizes = [8, 32], strides = [1, 1]} : vector<8x128xf32> to vector<8x32xf32>
    %72 = arith.negf %71 : vector<8x32xf32>
    %73 = math.exp %72 : vector<8x32xf32>
    %cst_43 = arith.constant 1.000000e+00 : f32
    %74 = vector.broadcast %cst_43 : f32 to vector<8x32xf32>
    %75 = arith.addf %74, %73 : vector<8x32xf32>
    %76 = arith.divf %74, %75 : vector<8x32xf32>
    %77 = vector.extract_strided_slice %64 {offsets = [0, 64], sizes = [8, 32], strides = [1, 1]} : vector<8x128xf32> to vector<8x32xf32>
    %78 = math.tanh %77 : vector<8x32xf32>
    %79 = vector.extract_strided_slice %64 {offsets = [0, 96], sizes = [8, 32], strides = [1, 1]} : vector<8x128xf32> to vector<8x32xf32>
    %80 = arith.negf %79 : vector<8x32xf32>
    %81 = math.exp %80 : vector<8x32xf32>
    %cst_44 = arith.constant 1.000000e+00 : f32
    %82 = vector.broadcast %cst_44 : f32 to vector<8x32xf32>
    %83 = arith.addf %82, %81 : vector<8x32xf32>
    %84 = arith.divf %82, %83 : vector<8x32xf32>
    %85 = arith.mulf %76, %58 : vector<8x32xf32>
    %86 = arith.mulf %70, %78 : vector<8x32xf32>
    %87 = arith.addf %85, %86 : vector<8x32xf32>
    %88 = math.tanh %87 : vector<8x32xf32>
    %89 = arith.mulf %84, %88 : vector<8x32xf32>
    %90 = vector.broadcast %c1_i32 : i32 to vector<8x1xi32>
    %91 = arith.cmpi slt, %90, %13 : vector<8x1xi32>
    %92 = vector.shape_cast %91 : vector<8x1xi1> to vector<8x1xi1>
    %93 = vector.broadcast %92 : vector<8x1xi1> to vector<8x32xi1>
    %94 = arith.select %93, %89, %57 : vector<8x32xi1>, vector<8x32xf32>
    %c0_45 = arith.constant 0 : index
    %c0_46 = arith.constant 0 : index
    %95 = vector.load %arg7[%c0_45, %c0_46] : memref<8x32xf32, #tpu.memory_space<vmem>>, vector<8x32xf32>
    tpu.vector_store %arg7[%c0_45, %c0_46], %94 {strides = array<i32>} : memref<8x32xf32, #tpu.memory_space<vmem>>, vector<8x32xf32>,
    %96 = vector.shape_cast %91 : vector<8x1xi1> to vector<8x1xi1>
    %97 = vector.broadcast %96 : vector<8x1xi1> to vector<8x32xi1>
    %98 = arith.select %97, %87, %58 : vector<8x32xi1>, vector<8x32xf32>
    %c0_47 = arith.constant 0 : index
    %c0_48 = arith.constant 0 : index
    %99 = vector.load %arg8[%c0_47, %c0_48] : memref<8x32xf32, #tpu.memory_space<vmem>>, vector<8x32xf32>
    tpu.vector_store %arg8[%c0_47, %c0_48], %98 {strides = array<i32>} : memref<8x32xf32, #tpu.memory_space<vmem>>, vector<8x32xf32>,
    %c2_i32 = arith.constant 2 : i32
    %c0_49 = arith.constant 0 : index
    %c0_50 = arith.constant 0 : index
    %100 = vector.load %arg7[%c0_49, %c0_50] : memref<8x32xf32, #tpu.memory_space<vmem>>, vector<8x32xf32>
    %c0_51 = arith.constant 0 : index
    %c0_52 = arith.constant 0 : index
    %101 = vector.load %arg8[%c0_51, %c0_52] : memref<8x32xf32, #tpu.memory_space<vmem>>, vector<8x32xf32>
    %102 = arith.index_cast %c2_i32 : i32 to index
    %c0_53 = arith.constant 0 : index
    %c0_54 = arith.constant 0 : index
    %103 = vector.load %arg9[%102, %c0_53, %c0_54] : memref<3x8x128xf32, #tpu.memory_space<vmem>>, vector<1x8x128xf32>
    %104 = vector.shape_cast %103 : vector<1x8x128xf32> to vector<8x128xf32>
    %c0_55 = arith.constant 0 : index
    %c0_56 = arith.constant 0 : index
    %105 = vector.load %arg4[%c0_55, %c0_56] : memref<32x128xf32, #tpu.memory_space<vmem>>, vector<32x128xf32>
    %cst_57 = arith.constant dense<0.000000e+00> : vector<8x128xf32>
    %106 = tpu.matmul %100, %105, %cst_57 {dimension_numbers = #tpu.dot_dimension_numbers<[1], [0], [0], [1], [0, 0, 1, 1], [], []>} : vector<8x32xf32>, vector<32x128xf32>, vector<8x128xf32> -> vector<8x128xf32>
    %107 = arith.addf %104, %106 : vector<8x128xf32>
    %108 = vector.extract_strided_slice %107 {offsets = [0, 0], sizes = [8, 32], strides = [1, 1]} : vector<8x128xf32> to vector<8x32xf32>
    %109 = arith.negf %108 : vector<8x32xf32>
    %110 = math.exp %109 : vector<8x32xf32>
    %cst_58 = arith.constant 1.000000e+00 : f32
    %111 = vector.broadcast %cst_58 : f32 to vector<8x32xf32>
    %112 = arith.addf %111, %110 : vector<8x32xf32>
    %113 = arith.divf %111, %112 : vector<8x32xf32>
    %114 = vector.extract_strided_slice %107 {offsets = [0, 32], sizes = [8, 32], strides = [1, 1]} : vector<8x128xf32> to vector<8x32xf32>
    %115 = arith.negf %114 : vector<8x32xf32>
    %116 = math.exp %115 : vector<8x32xf32>
    %cst_59 = arith.constant 1.000000e+00 : f32
    %117 = vector.broadcast %cst_59 : f32 to vector<8x32xf32>
    %118 = arith.addf %117, %116 : vector<8x32xf32>
    %119 = arith.divf %117, %118 : vector<8x32xf32>
    %120 = vector.extract_strided_slice %107 {offsets = [0, 64], sizes = [8, 32], strides = [1, 1]} : vector<8x128xf32> to vector<8x32xf32>
    %121 = math.tanh %120 : vector<8x32xf32>
    %122 = vector.extract_strided_slice %107 {offsets = [0, 96], sizes = [8, 32], strides = [1, 1]} : vector<8x128xf32> to vector<8x32xf32>
    %123 = arith.negf %122 : vector<8x32xf32>
    %124 = math.exp %123 : vector<8x32xf32>
    %cst_60 = arith.constant 1.000000e+00 : f32
    %125 = vector.broadcast %cst_60 : f32 to vector<8x32xf32>
    %126 = arith.addf %125, %124 : vector<8x32xf32>
    %127 = arith.divf %125, %126 : vector<8x32xf32>
    %128 = arith.mulf %119, %101 : vector<8x32xf32>
    %129 = arith.mulf %113, %121 : vector<8x32xf32>
    %130 = arith.addf %128, %129 : vector<8x32xf32>
    %131 = math.tanh %130 : vector<8x32xf32>
    %132 = arith.mulf %127, %131 : vector<8x32xf32>
    %133 = vector.broadcast %c2_i32 : i32 to vector<8x1xi32>
    %134 = arith.cmpi slt, %133, %13 : vector<8x1xi32>
    %135 = vector.shape_cast %134 : vector<8x1xi1> to vector<8x1xi1>
    %136 = vector.broadcast %135 : vector<8x1xi1> to vector<8x32xi1>
    %137 = arith.select %136, %132, %100 : vector<8x32xi1>, vector<8x32xf32>
    %c0_61 = arith.constant 0 : index
    %c0_62 = arith.constant 0 : index
    %138 = vector.load %arg7[%c0_61, %c0_62] : memref<8x32xf32, #tpu.memory_space<vmem>>, vector<8x32xf32>
    tpu.vector_store %arg7[%c0_61, %c0_62], %137 {strides = array<i32>} : memref<8x32xf32, #tpu.memory_space<vmem>>, vector<8x32xf32>,
    %139 = vector.shape_cast %134 : vector<8x1xi1> to vector<8x1xi1>
    %140 = vector.broadcast %139 : vector<8x1xi1> to vector<8x32xi1>
    %141 = arith.select %140, %130, %101 : vector<8x32xi1>, vector<8x32xf32>
    %c0_63 = arith.constant 0 : index
    %c0_64 = arith.constant 0 : index
    %142 = vector.load %arg8[%c0_63, %c0_64] : memref<8x32xf32, #tpu.memory_space<vmem>>, vector<8x32xf32>
    tpu.vector_store %arg8[%c0_63, %c0_64], %141 {strides = array<i32>} : memref<8x32xf32, #tpu.memory_space<vmem>>, vector<8x32xf32>,
    %c3_i32 = arith.constant 3 : i32
    %c0_65 = arith.constant 0 : index
    %c0_66 = arith.constant 0 : index
    %143 = vector.load %arg7[%c0_65, %c0_66] : memref<8x32xf32, #tpu.memory_space<vmem>>, vector<8x32xf32>
    %c0_67 = arith.constant 0 : index
    %c0_68 = arith.constant 0 : index
    %144 = vector.load %arg6[%c0_67, %c0_68] : memref<8x32xf32, #tpu.memory_space<vmem>>, vector<8x32xf32>
    tpu.vector_store %arg6[%c0_67, %c0_68], %143 {strides = array<i32>} : memref<8x32xf32, #tpu.memory_space<vmem>>, vector<8x32xf32>,
    return
  }
  func.func @transform_0(%arg0: i32) -> (i32, i32, i32) {
    %c0_i32 = arith.constant 0 : i32
    %c0_i32_0 = arith.constant 0 : i32
    %c0_i32_1 = arith.constant 0 : i32
    return %c0_i32, %arg0, %c0_i32_0 : i32, i32, i32
  }
  func.func @transform_1(%arg0: i32) -> (i32, i32) {
    %c0_i32 = arith.constant 0 : i32
    %c0_i32_0 = arith.constant 0 : i32
    return %arg0, %c0_i32 : i32, i32
  }
  func.func @transform_2(%arg0: i32) -> (i32, i32) {
    %c0_i32 = arith.constant 0 : i32
    %c0_i32_0 = arith.constant 0 : i32
    %c0_i32_1 = arith.constant 0 : i32
    return %c0_i32, %c0_i32_0 : i32, i32
  }
  func.func @transform_3(%arg0: i32) -> (i32, i32) {
    %c0_i32 = arith.constant 0 : i32
    %c0_i32_0 = arith.constant 0 : i32
    %c0_i32_1 = arith.constant 0 : i32
    return %c0_i32, %c0_i32_0 : i32, i32
  }
  func.func @transform_4(%arg0: i32) -> (i32, i32) {
    %c0_i32 = arith.constant 0 : i32
    %c0_i32_0 = arith.constant 0 : i32
    %c0_i32_1 = arith.constant 0 : i32
    return %c0_i32, %c0_i32_0 : i32, i32
  }
  func.func @transform_5(%arg0: i32) -> (i32, i32) {
    %c0_i32 = arith.constant 0 : i32
    %c0_i32_0 = arith.constant 0 : i32
    return %arg0, %c0_i32 : i32, i32
  }
}

module attributes {stable_mosaic.version = 11 : i64} {
  func.func @lstm_kernel(%arg0: i32, %arg1: memref<2x8x32xf32, #tpu.memory_space<vmem>>, %arg2: memref<8x1xi32, #tpu.memory_space<vmem>>, %arg3: memref<32x128xf32, #tpu.memory_space<vmem>>, %arg4: memref<32x128xf32, #tpu.memory_space<vmem>>, %arg5: memref<1x128xf32, #tpu.memory_space<vmem>>, %arg6: memref<8x32xf32, #tpu.memory_space<vmem>>, %arg7: memref<8x32xf32, #tpu.memory_space<vmem>>, %arg8: memref<8x32xf32, #tpu.memory_space<vmem>>, %arg9: memref<2x8x128xf32, #tpu.memory_space<vmem>>) attributes {dimension_semantics = [#tpu.dimension_semantics<parallel>], iteration_bounds = array<i64: 1>, scalar_prefetch = 0 : i64, scratch_operands = 3 : i64, tpu.core_type = #tpu.core_type<tc>, window_params = [{transform_indices = @transform_0, window_bounds = array<i64: 2, 8, 32>}, {transform_indices = @transform_1, window_bounds = array<i64: 8, 1>}, {pipeline_mode = #tpu.pipeline_mode<synchronous>, transform_indices = @transform_2, window_bounds = array<i64: 32, 128>}, {pipeline_mode = #tpu.pipeline_mode<synchronous>, transform_indices = @transform_3, window_bounds = array<i64: 32, 128>}, {pipeline_mode = #tpu.pipeline_mode<synchronous>, transform_indices = @transform_4, window_bounds = array<i64: 1, 128>}, {transform_indices = @transform_5, window_bounds = array<i64: 8, 32>}]} {
    %c0 = arith.constant 0 : index
    %c0_0 = arith.constant 0 : index
    %c0_1 = arith.constant 0 : index
    %0 = vector.load %arg1[%c0, %c0_0, %c0_1] : memref<2x8x32xf32, #tpu.memory_space<vmem>>, vector<2x8x32xf32>
    %1 = vector.shape_cast %0 : vector<2x8x32xf32> to vector<16x32xf32>
    %c0_2 = arith.constant 0 : index
    %c0_3 = arith.constant 0 : index
    %2 = vector.load %arg3[%c0_2, %c0_3] : memref<32x128xf32, #tpu.memory_space<vmem>>, vector<32x128xf32>
    %cst = arith.constant dense<0.000000e+00> : vector<16x128xf32>
    %3 = tpu.matmul %1, %2, %cst {dimension_numbers = #tpu.dot_dimension_numbers<[1], [0], [0], [1], [0, 0, 1, 1], [], []>} : vector<16x32xf32>, vector<32x128xf32>, vector<16x128xf32> -> vector<16x128xf32>
    %c0_4 = arith.constant 0 : index
    %c0_5 = arith.constant 0 : index
    %4 = vector.load %arg5[%c0_4, %c0_5] : memref<1x128xf32, #tpu.memory_space<vmem>>, vector<1x128xf32>
    %5 = vector.broadcast %4 : vector<1x128xf32> to vector<16x128xf32>
    %6 = arith.addf %3, %5 : vector<16x128xf32>
    %7 = vector.shape_cast %6 : vector<16x128xf32> to vector<2x8x128xf32>
    %c0_6 = arith.constant 0 : index
    %c0_7 = arith.constant 0 : index
    %c0_8 = arith.constant 0 : index
    %8 = vector.load %arg9[%c0_6, %c0_7, %c0_8] : memref<2x8x128xf32, #tpu.memory_space<vmem>>, vector<2x8x128xf32>
    tpu.vector_store %arg9[%c0_6, %c0_7, %c0_8], %7 {strides = array<i32>} : memref<2x8x128xf32, #tpu.memory_space<vmem>>, vector<2x8x128xf32>,
    %cst_9 = arith.constant 0.000000e+00 : f32
    %9 = vector.broadcast %cst_9 : f32 to vector<8x32xf32>
    %c0_10 = arith.constant 0 : index
    %c0_11 = arith.constant 0 : index
    %10 = vector.load %arg7[%c0_10, %c0_11] : memref<8x32xf32, #tpu.memory_space<vmem>>, vector<8x32xf32>
    tpu.vector_store %arg7[%c0_10, %c0_11], %9 {strides = array<i32>} : memref<8x32xf32, #tpu.memory_space<vmem>>, vector<8x32xf32>,
    %cst_12 = arith.constant 0.000000e+00 : f32
    %11 = vector.broadcast %cst_12 : f32 to vector<8x32xf32>
    %c0_13 = arith.constant 0 : index
    %c0_14 = arith.constant 0 : index
    %12 = vector.load %arg8[%c0_13, %c0_14] : memref<8x32xf32, #tpu.memory_space<vmem>>, vector<8x32xf32>
    tpu.vector_store %arg8[%c0_13, %c0_14], %11 {strides = array<i32>} : memref<8x32xf32, #tpu.memory_space<vmem>>, vector<8x32xf32>,
    %c0_15 = arith.constant 0 : index
    %c0_16 = arith.constant 0 : index
    %13 = vector.load %arg2[%c0_15, %c0_16] : memref<8x1xi32, #tpu.memory_space<vmem>>, vector<8x1xi32>
    %c0_i32 = arith.constant 0 : i32
    %c0_17 = arith.constant 0 : index
    %c0_18 = arith.constant 0 : index
    %14 = vector.load %arg7[%c0_17, %c0_18] : memref<8x32xf32, #tpu.memory_space<vmem>>, vector<8x32xf32>
    %c0_19 = arith.constant 0 : index
    %c0_20 = arith.constant 0 : index
    %15 = vector.load %arg8[%c0_19, %c0_20] : memref<8x32xf32, #tpu.memory_space<vmem>>, vector<8x32xf32>
    %16 = arith.index_cast %c0_i32 : i32 to index
    %c0_21 = arith.constant 0 : index
    %c0_22 = arith.constant 0 : index
    %17 = vector.load %arg9[%16, %c0_21, %c0_22] : memref<2x8x128xf32, #tpu.memory_space<vmem>>, vector<1x8x128xf32>
    %18 = vector.shape_cast %17 : vector<1x8x128xf32> to vector<8x128xf32>
    %c0_23 = arith.constant 0 : index
    %c0_24 = arith.constant 0 : index
    %19 = vector.load %arg4[%c0_23, %c0_24] : memref<32x128xf32, #tpu.memory_space<vmem>>, vector<32x128xf32>
    %cst_25 = arith.constant dense<0.000000e+00> : vector<8x128xf32>
    %20 = tpu.matmul %14, %19, %cst_25 {dimension_numbers = #tpu.dot_dimension_numbers<[1], [0], [0], [1], [0, 0, 1, 1], [], []>} : vector<8x32xf32>, vector<32x128xf32>, vector<8x128xf32> -> vector<8x128xf32>
    %21 = arith.addf %18, %20 : vector<8x128xf32>
    %22 = vector.extract_strided_slice %21 {offsets = [0, 0], sizes = [8, 32], strides = [1, 1]} : vector<8x128xf32> to vector<8x32xf32>
    %23 = arith.negf %22 : vector<8x32xf32>
    %24 = math.exp %23 : vector<8x32xf32>
    %cst_26 = arith.constant 1.000000e+00 : f32
    %25 = vector.broadcast %cst_26 : f32 to vector<8x32xf32>
    %26 = arith.addf %25, %24 : vector<8x32xf32>
    %27 = arith.divf %25, %26 : vector<8x32xf32>
    %28 = vector.extract_strided_slice %21 {offsets = [0, 32], sizes = [8, 32], strides = [1, 1]} : vector<8x128xf32> to vector<8x32xf32>
    %29 = arith.negf %28 : vector<8x32xf32>
    %30 = math.exp %29 : vector<8x32xf32>
    %cst_27 = arith.constant 1.000000e+00 : f32
    %31 = vector.broadcast %cst_27 : f32 to vector<8x32xf32>
    %32 = arith.addf %31, %30 : vector<8x32xf32>
    %33 = arith.divf %31, %32 : vector<8x32xf32>
    %34 = vector.extract_strided_slice %21 {offsets = [0, 64], sizes = [8, 32], strides = [1, 1]} : vector<8x128xf32> to vector<8x32xf32>
    %35 = math.tanh %34 : vector<8x32xf32>
    %36 = vector.extract_strided_slice %21 {offsets = [0, 96], sizes = [8, 32], strides = [1, 1]} : vector<8x128xf32> to vector<8x32xf32>
    %37 = arith.negf %36 : vector<8x32xf32>
    %38 = math.exp %37 : vector<8x32xf32>
    %cst_28 = arith.constant 1.000000e+00 : f32
    %39 = vector.broadcast %cst_28 : f32 to vector<8x32xf32>
    %40 = arith.addf %39, %38 : vector<8x32xf32>
    %41 = arith.divf %39, %40 : vector<8x32xf32>
    %42 = arith.mulf %33, %15 : vector<8x32xf32>
    %43 = arith.mulf %27, %35 : vector<8x32xf32>
    %44 = arith.addf %42, %43 : vector<8x32xf32>
    %45 = math.tanh %44 : vector<8x32xf32>
    %46 = arith.mulf %41, %45 : vector<8x32xf32>
    %47 = vector.broadcast %c0_i32 : i32 to vector<8x1xi32>
    %48 = arith.cmpi slt, %47, %13 : vector<8x1xi32>
    %49 = vector.shape_cast %48 : vector<8x1xi1> to vector<8x1xi1>
    %50 = vector.broadcast %49 : vector<8x1xi1> to vector<8x32xi1>
    %51 = arith.select %50, %46, %14 : vector<8x32xi1>, vector<8x32xf32>
    %c0_29 = arith.constant 0 : index
    %c0_30 = arith.constant 0 : index
    %52 = vector.load %arg7[%c0_29, %c0_30] : memref<8x32xf32, #tpu.memory_space<vmem>>, vector<8x32xf32>
    tpu.vector_store %arg7[%c0_29, %c0_30], %51 {strides = array<i32>} : memref<8x32xf32, #tpu.memory_space<vmem>>, vector<8x32xf32>,
    %53 = vector.shape_cast %48 : vector<8x1xi1> to vector<8x1xi1>
    %54 = vector.broadcast %53 : vector<8x1xi1> to vector<8x32xi1>
    %55 = arith.select %54, %44, %15 : vector<8x32xi1>, vector<8x32xf32>
    %c0_31 = arith.constant 0 : index
    %c0_32 = arith.constant 0 : index
    %56 = vector.load %arg8[%c0_31, %c0_32] : memref<8x32xf32, #tpu.memory_space<vmem>>, vector<8x32xf32>
    tpu.vector_store %arg8[%c0_31, %c0_32], %55 {strides = array<i32>} : memref<8x32xf32, #tpu.memory_space<vmem>>, vector<8x32xf32>,
    %c1_i32 = arith.constant 1 : i32
    %c0_33 = arith.constant 0 : index
    %c0_34 = arith.constant 0 : index
    %57 = vector.load %arg7[%c0_33, %c0_34] : memref<8x32xf32, #tpu.memory_space<vmem>>, vector<8x32xf32>
    %c0_35 = arith.constant 0 : index
    %c0_36 = arith.constant 0 : index
    %58 = vector.load %arg8[%c0_35, %c0_36] : memref<8x32xf32, #tpu.memory_space<vmem>>, vector<8x32xf32>
    %59 = arith.index_cast %c1_i32 : i32 to index
    %c0_37 = arith.constant 0 : index
    %c0_38 = arith.constant 0 : index
    %60 = vector.load %arg9[%59, %c0_37, %c0_38] : memref<2x8x128xf32, #tpu.memory_space<vmem>>, vector<1x8x128xf32>
    %61 = vector.shape_cast %60 : vector<1x8x128xf32> to vector<8x128xf32>
    %c0_39 = arith.constant 0 : index
    %c0_40 = arith.constant 0 : index
    %62 = vector.load %arg4[%c0_39, %c0_40] : memref<32x128xf32, #tpu.memory_space<vmem>>, vector<32x128xf32>
    %cst_41 = arith.constant dense<0.000000e+00> : vector<8x128xf32>
    %63 = tpu.matmul %57, %62, %cst_41 {dimension_numbers = #tpu.dot_dimension_numbers<[1], [0], [0], [1], [0, 0, 1, 1], [], []>} : vector<8x32xf32>, vector<32x128xf32>, vector<8x128xf32> -> vector<8x128xf32>
    %64 = arith.addf %61, %63 : vector<8x128xf32>
    %65 = vector.extract_strided_slice %64 {offsets = [0, 0], sizes = [8, 32], strides = [1, 1]} : vector<8x128xf32> to vector<8x32xf32>
    %66 = arith.negf %65 : vector<8x32xf32>
    %67 = math.exp %66 : vector<8x32xf32>
    %cst_42 = arith.constant 1.000000e+00 : f32
    %68 = vector.broadcast %cst_42 : f32 to vector<8x32xf32>
    %69 = arith.addf %68, %67 : vector<8x32xf32>
    %70 = arith.divf %68, %69 : vector<8x32xf32>
    %71 = vector.extract_strided_slice %64 {offsets = [0, 32], sizes = [8, 32], strides = [1, 1]} : vector<8x128xf32> to vector<8x32xf32>
    %72 = arith.negf %71 : vector<8x32xf32>
    %73 = math.exp %72 : vector<8x32xf32>
    %cst_43 = arith.constant 1.000000e+00 : f32
    %74 = vector.broadcast %cst_43 : f32 to vector<8x32xf32>
    %75 = arith.addf %74, %73 : vector<8x32xf32>
    %76 = arith.divf %74, %75 : vector<8x32xf32>
    %77 = vector.extract_strided_slice %64 {offsets = [0, 64], sizes = [8, 32], strides = [1, 1]} : vector<8x128xf32> to vector<8x32xf32>
    %78 = math.tanh %77 : vector<8x32xf32>
    %79 = vector.extract_strided_slice %64 {offsets = [0, 96], sizes = [8, 32], strides = [1, 1]} : vector<8x128xf32> to vector<8x32xf32>
    %80 = arith.negf %79 : vector<8x32xf32>
    %81 = math.exp %80 : vector<8x32xf32>
    %cst_44 = arith.constant 1.000000e+00 : f32
    %82 = vector.broadcast %cst_44 : f32 to vector<8x32xf32>
    %83 = arith.addf %82, %81 : vector<8x32xf32>
    %84 = arith.divf %82, %83 : vector<8x32xf32>
    %85 = arith.mulf %76, %58 : vector<8x32xf32>
    %86 = arith.mulf %70, %78 : vector<8x32xf32>
    %87 = arith.addf %85, %86 : vector<8x32xf32>
    %88 = math.tanh %87 : vector<8x32xf32>
    %89 = arith.mulf %84, %88 : vector<8x32xf32>
    %90 = vector.broadcast %c1_i32 : i32 to vector<8x1xi32>
    %91 = arith.cmpi slt, %90, %13 : vector<8x1xi32>
    %92 = vector.shape_cast %91 : vector<8x1xi1> to vector<8x1xi1>
    %93 = vector.broadcast %92 : vector<8x1xi1> to vector<8x32xi1>
    %94 = arith.select %93, %89, %57 : vector<8x32xi1>, vector<8x32xf32>
    %c0_45 = arith.constant 0 : index
    %c0_46 = arith.constant 0 : index
    %95 = vector.load %arg7[%c0_45, %c0_46] : memref<8x32xf32, #tpu.memory_space<vmem>>, vector<8x32xf32>
    tpu.vector_store %arg7[%c0_45, %c0_46], %94 {strides = array<i32>} : memref<8x32xf32, #tpu.memory_space<vmem>>, vector<8x32xf32>,
    %96 = vector.shape_cast %91 : vector<8x1xi1> to vector<8x1xi1>
    %97 = vector.broadcast %96 : vector<8x1xi1> to vector<8x32xi1>
    %98 = arith.select %97, %87, %58 : vector<8x32xi1>, vector<8x32xf32>
    %c0_47 = arith.constant 0 : index
    %c0_48 = arith.constant 0 : index
    %99 = vector.load %arg8[%c0_47, %c0_48] : memref<8x32xf32, #tpu.memory_space<vmem>>, vector<8x32xf32>
    tpu.vector_store %arg8[%c0_47, %c0_48], %98 {strides = array<i32>} : memref<8x32xf32, #tpu.memory_space<vmem>>, vector<8x32xf32>,
    %c2_i32 = arith.constant 2 : i32
    %c0_49 = arith.constant 0 : index
    %c0_50 = arith.constant 0 : index
    %100 = vector.load %arg7[%c0_49, %c0_50] : memref<8x32xf32, #tpu.memory_space<vmem>>, vector<8x32xf32>
    %c0_51 = arith.constant 0 : index
    %c0_52 = arith.constant 0 : index
    %101 = vector.load %arg6[%c0_51, %c0_52] : memref<8x32xf32, #tpu.memory_space<vmem>>, vector<8x32xf32>
    tpu.vector_store %arg6[%c0_51, %c0_52], %100 {strides = array<i32>} : memref<8x32xf32, #tpu.memory_space<vmem>>, vector<8x32xf32>,
    return
  }
  func.func @transform_0(%arg0: i32) -> (i32, i32, i32) {
    %c0_i32 = arith.constant 0 : i32
    %c0_i32_0 = arith.constant 0 : i32
    %c0_i32_1 = arith.constant 0 : i32
    return %c0_i32, %arg0, %c0_i32_0 : i32, i32, i32
  }
  func.func @transform_1(%arg0: i32) -> (i32, i32) {
    %c0_i32 = arith.constant 0 : i32
    %c0_i32_0 = arith.constant 0 : i32
    return %arg0, %c0_i32 : i32, i32
  }
  func.func @transform_2(%arg0: i32) -> (i32, i32) {
    %c0_i32 = arith.constant 0 : i32
    %c0_i32_0 = arith.constant 0 : i32
    %c0_i32_1 = arith.constant 0 : i32
    return %c0_i32, %c0_i32_0 : i32, i32
  }
  func.func @transform_3(%arg0: i32) -> (i32, i32) {
    %c0_i32 = arith.constant 0 : i32
    %c0_i32_0 = arith.constant 0 : i32
    %c0_i32_1 = arith.constant 0 : i32
    return %c0_i32, %c0_i32_0 : i32, i32
  }
  func.func @transform_4(%arg0: i32) -> (i32, i32) {
    %c0_i32 = arith.constant 0 : i32
    %c0_i32_0 = arith.constant 0 : i32
    %c0_i32_1 = arith.constant 0 : i32
    return %c0_i32, %c0_i32_0 : i32, i32
  }
  func.func @transform_5(%arg0: i32) -> (i32, i32) {
    %c0_i32 = arith.constant 0 : i32
    %c0_i32_0 = arith.constant 0 : i32
    return %arg0, %c0_i32 : i32, i32
  }
}

module attributes {stable_mosaic.version = 11 : i64} {
  func.func @head_kernel(%arg0: memref<2x32xf32, #tpu.memory_space<vmem>>, %arg1: memref<32x32xf32, #tpu.memory_space<vmem>>, %arg2: memref<1x32xf32, #tpu.memory_space<vmem>>, %arg3: memref<1x32xf32, #tpu.memory_space<vmem>>, %arg4: memref<1x32xf32, #tpu.memory_space<vmem>>, %arg5: memref<1x32xf32, #tpu.memory_space<vmem>>, %arg6: memref<1x32xf32, #tpu.memory_space<vmem>>, %arg7: memref<32x3xf32, #tpu.memory_space<vmem>>, %arg8: memref<1x3xf32, #tpu.memory_space<vmem>>, %arg9: memref<2x3xf32, #tpu.memory_space<vmem>>) attributes {dimension_semantics = [], scalar_prefetch = 0 : i64, scratch_operands = 0 : i64, tpu.core_type = #tpu.core_type<tc>} {
    %c0 = arith.constant 0 : index
    %c0_0 = arith.constant 0 : index
    %0 = vector.load %arg0[%c0, %c0_0] : memref<2x32xf32, #tpu.memory_space<vmem>>, vector<2x32xf32>
    %c0_1 = arith.constant 0 : index
    %c0_2 = arith.constant 0 : index
    %1 = vector.load %arg1[%c0_1, %c0_2] : memref<32x32xf32, #tpu.memory_space<vmem>>, vector<32x32xf32>
    %cst = arith.constant dense<0.000000e+00> : vector<2x32xf32>
    %2 = tpu.matmul %0, %1, %cst {dimension_numbers = #tpu.dot_dimension_numbers<[1], [0], [0], [1], [0, 0, 1, 1], [], []>} : vector<2x32xf32>, vector<32x32xf32>, vector<2x32xf32> -> vector<2x32xf32>
    %c0_3 = arith.constant 0 : index
    %c0_4 = arith.constant 0 : index
    %3 = vector.load %arg2[%c0_3, %c0_4] : memref<1x32xf32, #tpu.memory_space<vmem>>, vector<1x32xf32>
    %4 = vector.broadcast %3 : vector<1x32xf32> to vector<2x32xf32>
    %5 = arith.addf %2, %4 : vector<2x32xf32>
    %cst_5 = arith.constant 0.000000e+00 : f32
    %6 = vector.broadcast %cst_5 : f32 to vector<2x32xf32>
    %7 = arith.maximumf %5, %6 : vector<2x32xf32>
    %c0_6 = arith.constant 0 : index
    %c0_7 = arith.constant 0 : index
    %8 = vector.load %arg5[%c0_6, %c0_7] : memref<1x32xf32, #tpu.memory_space<vmem>>, vector<1x32xf32>
    %9 = vector.broadcast %8 : vector<1x32xf32> to vector<2x32xf32>
    %10 = arith.subf %7, %9 : vector<2x32xf32>
    %c0_8 = arith.constant 0 : index
    %c0_9 = arith.constant 0 : index
    %11 = vector.load %arg6[%c0_8, %c0_9] : memref<1x32xf32, #tpu.memory_space<vmem>>, vector<1x32xf32>
    %cst_10 = arith.constant 9.99999974E-6 : f32
    %12 = vector.broadcast %cst_10 : f32 to vector<1x32xf32>
    %13 = arith.addf %11, %12 : vector<1x32xf32>
    %14 = math.rsqrt %13 : vector<1x32xf32>
    %15 = vector.broadcast %14 : vector<1x32xf32> to vector<2x32xf32>
    %16 = arith.mulf %10, %15 : vector<2x32xf32>
    %c0_11 = arith.constant 0 : index
    %c0_12 = arith.constant 0 : index
    %17 = vector.load %arg3[%c0_11, %c0_12] : memref<1x32xf32, #tpu.memory_space<vmem>>, vector<1x32xf32>
    %18 = vector.broadcast %17 : vector<1x32xf32> to vector<2x32xf32>
    %19 = arith.mulf %16, %18 : vector<2x32xf32>
    %c0_13 = arith.constant 0 : index
    %c0_14 = arith.constant 0 : index
    %20 = vector.load %arg4[%c0_13, %c0_14] : memref<1x32xf32, #tpu.memory_space<vmem>>, vector<1x32xf32>
    %21 = vector.broadcast %20 : vector<1x32xf32> to vector<2x32xf32>
    %22 = arith.addf %19, %21 : vector<2x32xf32>
    %c0_15 = arith.constant 0 : index
    %c0_16 = arith.constant 0 : index
    %23 = vector.load %arg7[%c0_15, %c0_16] : memref<32x3xf32, #tpu.memory_space<vmem>>, vector<32x3xf32>
    %cst_17 = arith.constant dense<0.000000e+00> : vector<2x3xf32>
    %24 = tpu.matmul %22, %23, %cst_17 {dimension_numbers = #tpu.dot_dimension_numbers<[1], [0], [0], [1], [0, 0, 1, 1], [], []>} : vector<2x32xf32>, vector<32x3xf32>, vector<2x3xf32> -> vector<2x3xf32>
    %c0_18 = arith.constant 0 : index
    %c0_19 = arith.constant 0 : index
    %25 = vector.load %arg8[%c0_18, %c0_19] : memref<1x3xf32, #tpu.memory_space<vmem>>, vector<1x3xf32>
    %26 = vector.broadcast %25 : vector<1x3xf32> to vector<2x3xf32>
    %27 = arith.addf %24, %26 : vector<2x3xf32>
    %cst_20 = arith.constant dense<0xFF800000> : vector<3xf32>
    %28 = vector.multi_reduction <maximumf>, %27, %cst_20 [0] : vector<2x3xf32> to vector<3xf32>
    %29 = vector.shape_cast %28 : vector<3xf32> to vector<1x3xf32>
    %30 = vector.broadcast %29 : vector<1x3xf32> to vector<2x3xf32>
    %31 = arith.subf %27, %30 : vector<2x3xf32>
    %32 = math.exp %31 : vector<2x3xf32>
    %cst_21 = arith.constant dense<0.000000e+00> : vector<3xf32>
    %33 = vector.multi_reduction <add>, %32, %cst_21 [0] : vector<2x3xf32> to vector<3xf32>
    %34 = vector.shape_cast %33 : vector<3xf32> to vector<1x3xf32>
    %35 = vector.broadcast %34 : vector<1x3xf32> to vector<2x3xf32>
    %36 = arith.divf %32, %35 : vector<2x3xf32>
    %c0_22 = arith.constant 0 : index
    %c0_23 = arith.constant 0 : index
    %37 = vector.load %arg9[%c0_22, %c0_23] : memref<2x3xf32, #tpu.memory_space<vmem>>, vector<2x3xf32>
    tpu.vector_store %arg9[%c0_22, %c0_23], %36 {strides = array<i32>} : memref<2x3xf32, #tpu.memory_space<vmem>>, vector<2x3xf32>,
    return
  }
}

</mosaic_0001>

<llo_original>
// kernel: lstm_par_seq_forward.6
$region0: #{lstm_par_seq_forward.6}
  #allocation0 [shape = 'u32[]', space=smem, size = 0x4, offset = 0x4, fixed_abs, tag = 'smem constant byte address 0x4 - core index']
  #allocation1 [shape = 'u32[72,128]{1,0:T(1,128)}', space=vmem, size = 0x9000, scoped, tag = 'internal scratch']
  #allocation2 [shape = 'f32[8,32]{1,0:T(8,128)}', space=vmem, size = 0x1000, scoped, tag = 'scratch operand']
  #allocation3 [shape = 'f32[8,32]{1,0:T(8,128)}', space=vmem, size = 0x1000, scoped, tag = 'scratch operand']
  #allocation4 [shape = 'f32[2,8,128]{2,1,0:T(8,128)}', space=vmem, size = 0x2000, scoped, tag = 'scratch operand']
  %s0 = inlined_call_operand.vmem [shape: f32[2,8,32], index: 0, kind: input, shape index: {}]
  %s1 = inlined_call_operand.vmem [shape: s32[8,1], index: 1, kind: input, shape index: {}]
  %s2 = inlined_call_operand.vmem [shape: f32[32,128], index: 2, kind: input, shape index: {}]
  %s3 = inlined_call_operand.vmem [shape: f32[32,128], index: 3, kind: input, shape index: {}]
  %s4 = inlined_call_operand.vmem [shape: f32[1,128], index: 4, kind: input, shape index: {}]
  %s5 = inlined_call_operand.vmem [shape: f32[8,32], index: 5, kind: output, shape index: {}]
  %s6 = sld [smem:[#allocation0]]
  $region30: #{lstm_par_seq_forward.6} parent=0
    _
  %s8 = ssub.s32 1, %s6
  %s9 = scalar_select 0, %s8, %s6
  // Predicated region
  $region2: #{lstm_par_seq_forward.6} parent=0 // pred_check
    _
  $region3: #{lstm_par_seq_forward.6} parent=0 // pred_check_branch
    %11 = sbr.rel (0) target = $region5
  $region4: #{lstm_par_seq_forward.6} parent=0 // pred_region
    _
  $region5: #{lstm_par_seq_forward.6} parent=0 // pred_fallthru
    _
  // Predicated region
  $region6: #{lstm_par_seq_forward.6} parent=0 // pred_check
    _
  $region7: #{lstm_par_seq_forward.6} parent=0 // pred_check_branch
    %13 = sbr.rel (0) target = $region9
  $region8: #{lstm_par_seq_forward.6} parent=0 // pred_region
    _
  $region9: #{lstm_par_seq_forward.6} parent=0 // pred_fallthru
    _
  // Predicated region
  $region10: #{lstm_par_seq_forward.6} parent=0 // pred_check
    _
  $region11: #{lstm_par_seq_forward.6} parent=0 // pred_check_branch
    %15 = sbr.rel (0) target = $region13
  $region12: #{lstm_par_seq_forward.6} parent=0 // pred_region
    _
  $region13: #{lstm_par_seq_forward.6} parent=0 // pred_fallthru
    _
  // Predicated region
  $region14: #{lstm_par_seq_forward.6} parent=0 // pred_check
    _
  $region15: #{lstm_par_seq_forward.6} parent=0 // pred_check_branch
    %17 = sbr.rel (0) target = $region17
  $region16: #{lstm_par_seq_forward.6} parent=0 // pred_region
    _
  $region17: #{lstm_par_seq_forward.6} parent=0 // pred_fallthru
    _
  // Predicated region
  $region18: #{lstm_par_seq_forward.6} parent=0 // pred_check
    _
  $region19: #{lstm_par_seq_forward.6} parent=0 // pred_check_branch
    %19 = sbr.rel (0) target = $region21
  $region20: #{lstm_par_seq_forward.6} parent=0 // pred_region
    _
  $region21: #{lstm_par_seq_forward.6} parent=0 // pred_fallthru
    _
  %v20 = vld [vmem:[%s0] sm:$0xff]
  %v21 = vld [vmem:[%s0 + $0x8] sm:$0xff]
  %v22 = vld [vmem:[%s2] sm:$0xff]
  %v23 = vld [vmem:[%s2 + $0x8] sm:$0xff]
  %v24 = vld [vmem:[%s2 + $0x10] sm:$0xff]
  %v25 = vld [vmem:[%s2 + $0x18] sm:$0xff]
  %v26 = vld [vmem:[%s4] sm:$0x1]
  %v28 = vperm.slane %v26, 0
  %vm30 = vcmask 261120
  %v32 = vsel %vm30, %v20, 0
  %v35 = vsel %vm30, %v21, 0
  %37 = vmatpush.msra.mxu0 0.0
  %38 = vmatpush.msra.mxu0 0.0
  %39 = vmatpush.msra.mxu0 0.0
  %40 = vmatpush.msra.mxu0 0.0
  %41 = vmatpush.msra.mxu0 0.0
  %42 = vmatpush.msra.mxu0 0.0
  %43 = vmatpush.msra.mxu0 0.0
  %44 = vmatpush.msra.mxu0 0.0
  %45 = vmatpush.msra.mxu0 0.0
  %46 = vmatpush.msra.mxu0 0.0
  %47 = vmatpush.msra.mxu0 0.0
  %48 = vmatpush.msra.mxu0 0.0
  %49 = vmatpush.msra.mxu0 %v25
  %50 = vmatpush.msra.mxu0 %v24
  %51 = vmatpush.msra.mxu0 %v23
  %52 = vmatpush.msra.mxu0 %v22
  %53 = vmatmul.f32.gmra.mxu0 %v32
  %v54 = vpop.f32.mrf.mxu0
  %v55 = vadd.f32 %v28, %v54
  %56 = vmatmul.f32.gmra.mxu0 %v35
  %v57 = vpop.f32.mrf.mxu0
  %v58 = vadd.f32 %v28, %v57
  %59 = vdwg.mxu0
  %60 = vst [vmem:[#allocation4] sm:$0xff] %v55
  %61 = vst [vmem:[#allocation4 + $0x8] sm:$0xff] %v58
  %62 = vst.msk [vmem:[#allocation2] sm:$0xff] %vm30, 0.0
  %63 = vst.msk [vmem:[#allocation3] sm:$0xff] %vm30, 0.0
  %v64 = vld [vmem:[%s1] sm:$0xff]
  %v65 = vld [vmem:[#allocation2] sm:$0xff]
  %v66 = vld [vmem:[#allocation3] sm:$0xff]
  %v67 = vld [vmem:[#allocation4] sm:$0xff]
  %v68 = vld [vmem:[%s3] sm:$0xff]
  %v69 = vld [vmem:[%s3 + $0x8] sm:$0xff]
  %v70 = vld [vmem:[%s3 + $0x10] sm:$0xff]
  %v71 = vld [vmem:[%s3 + $0x18] sm:$0xff]
  %v73 = vsel %vm30, %v65, 0
  %75 = vmatpush.msra.mxu0 0.0
  %76 = vmatpush.msra.mxu0 0.0
  %77 = vmatpush.msra.mxu0 0.0
  %78 = vmatpush.msra.mxu0 0.0
  %79 = vmatpush.msra.mxu0 0.0
  %80 = vmatpush.msra.mxu0 0.0
  %81 = vmatpush.msra.mxu0 0.0
  %82 = vmatpush.msra.mxu0 0.0
  %83 = vmatpush.msra.mxu0 0.0
  %84 = vmatpush.msra.mxu0 0.0
  %85 = vmatpush.msra.mxu0 0.0
  %86 = vmatpush.msra.mxu0 0.0
  %87 = vmatpush.msra.mxu0 %v71
  %88 = vmatpush.msra.mxu0 %v70
  %89 = vmatpush.msra.mxu0 %v69
  %90 = vmatpush.msra.mxu0 %v68
  %91 = vmatmul.f32.gmra.mxu0 %v73
  %v92 = vpop.f32.mrf.mxu0
  %v93 = vadd.f32 0.0, %v92
  %94 = vdwg.mxu0
  %v95 = vadd.f32 %v67, %v93
  %v96 = vxor.u32 %v95, 2147483648
  %v97 = vmul.f32 %v96, 1.442695
  %v98 = vpow.pop %v97
  %v99 = vadd.f32 %v98, 1.0
  %v100 = vrcp.pop %v99
  %v101 = vmul.f32 %v99, %v100
  %v102 = vsub.f32 1.0, %v101
  %v103 = vmul.f32 %v100, %v102
  %v104 = vadd.f32 %v100, %v103
  %vm105 = vweird.f32 %v99
  %vm106 = vweird.f32 %v100
  %vm107 = vmor %vm105, %vm106
  %v108 = vsel %vm107, %v100, %v104
  %v109 = vand.u32 2147483647, %v99
  %vm110 = vcmp.eq.f32.partialorder %v109, 8.507059e+37
  %v111 = vand.u32 %v99, 2147483648
  %v112 = vor.u32 1.1754944e-38, %v111
  %v113 = vsel %vm110, %v112, %v108
  %v114 = vmul.f32 1.0, %v113
  %v115 = vtanh.pop %v95
  %117 = vrot.lane.b32.xlu0 %v66, 32
  %v118 = vpop.permute.xlu0 %117
  %v120 = vmul.f32 %v114, %v118
  %122 = vrot.lane.b32.xlu0 %v115, 64
  %v123 = vpop.permute.xlu0 %122
  %v125 = vmul.f32 %v114, %v123
  %127 = vrot.lane.b32.xlu0 %v125, 32
  %v128 = vpop.permute.xlu0 %127
  %v130 = vadd.f32 %v120, %v128
  %v131 = vtanh.pop %v130
  %133 = vrot.lane.b32.xlu0 %v131, 64
  %v134 = vpop.permute.xlu0 %133
  %v136 = vmul.f32 %v114, %v134
  %vm137 = vcmp.gt.s32.totalorder %v64, 0
  %v138 = vsel %vm137, 1, 0
  %139 = vset.pattern.permute.xlu0 0
  %140 = vperm.xlu0 %139, %v138
  %v141 = vpop.permute.xlu0 %140
  %vm142 = vcmp.eq.s32.totalorder %v141, 1
  %143 = vrot.lane.b32.xlu0 %v65, 96
  %v144 = vpop.permute.xlu0 %143
  %v146 = vsel %vm142, %v136, %v144
  %148 = vrot.lane.b32.xlu0 %v146, 32
  %v149 = vpop.permute.xlu0 %148
  %151 = vst.msk [vmem:[#allocation2] sm:$0xff] %vm30, %v149
  %v152 = vsel %vm142, %v130, %v118
  %154 = vrot.lane.b32.xlu0 %v152, 96
  %v155 = vpop.permute.xlu0 %154
  %157 = vst.msk [vmem:[#allocation3] sm:$0xff] %vm30, %v155
  %v158 = vld [vmem:[#allocation2] sm:$0xff]
  %v159 = vld [vmem:[#allocation3] sm:$0xff]
  %s160 = scalar_lea.vmem [#allocation4], 8
  %v161 = vld [vmem:[%s160] sm:$0xff]
  %v162 = vld [vmem:[%s3] sm:$0xff]
  %v163 = vld [vmem:[%s3 + $0x8] sm:$0xff]
  %v164 = vld [vmem:[%s3 + $0x10] sm:$0xff]
  %v165 = vld [vmem:[%s3 + $0x18] sm:$0xff]
  %v167 = vsel %vm30, %v158, 0
  %169 = vmatpush.msra.mxu0 0.0
  %170 = vmatpush.msra.mxu0 0.0
  %171 = vmatpush.msra.mxu0 0.0
  %172 = vmatpush.msra.mxu0 0.0
  %173 = vmatpush.msra.mxu0 0.0
  %174 = vmatpush.msra.mxu0 0.0
  %175 = vmatpush.msra.mxu0 0.0
  %176 = vmatpush.msra.mxu0 0.0
  %177 = vmatpush.msra.mxu0 0.0
  %178 = vmatpush.msra.mxu0 0.0
  %179 = vmatpush.msra.mxu0 0.0
  %180 = vmatpush.msra.mxu0 0.0
  %181 = vmatpush.msra.mxu0 %v165
  %182 = vmatpush.msra.mxu0 %v164
  %183 = vmatpush.msra.mxu0 %v163
  %184 = vmatpush.msra.mxu0 %v162
  %185 = vmatmul.f32.gmra.mxu0 %v167
  %v186 = vpop.f32.mrf.mxu0
  %v187 = vadd.f32 0.0, %v186
  %188 = vdwg.mxu0
  %v189 = vadd.f32 %v161, %v187
  %v190 = vxor.u32 %v189, 2147483648
  %v191 = vmul.f32 %v190, 1.442695
  %v192 = vpow.pop %v191
  %v193 = vadd.f32 %v192, 1.0
  %v194 = vrcp.pop %v193
  %v195 = vmul.f32 %v193, %v194
  %v196 = vsub.f32 1.0, %v195
  %v197 = vmul.f32 %v194, %v196
  %v198 = vadd.f32 %v194, %v197
  %vm199 = vweird.f32 %v193
  %vm200 = vweird.f32 %v194
  %vm201 = vmor %vm199, %vm200
  %v202 = vsel %vm201, %v194, %v198
  %v203 = vand.u32 2147483647, %v193
  %vm204 = vcmp.eq.f32.partialorder %v203, 8.507059e+37
  %v205 = vand.u32 %v193, 2147483648
  %v206 = vor.u32 1.1754944e-38, %v205
  %v207 = vsel %vm204, %v206, %v202
  %v208 = vmul.f32 1.0, %v207
  %v209 = vtanh.pop %v189
  %211 = vrot.lane.b32.xlu0 %v159, 32
  %v212 = vpop.permute.xlu0 %211
  %v214 = vmul.f32 %v208, %v212
  %216 = vrot.lane.b32.xlu0 %v209, 64
  %v217 = vpop.permute.xlu0 %216
  %v219 = vmul.f32 %v208, %v217
  %221 = vrot.lane.b32.xlu0 %v219, 32
  %v222 = vpop.permute.xlu0 %221
  %v224 = vadd.f32 %v214, %v222
  %v225 = vtanh.pop %v224
  %227 = vrot.lane.b32.xlu0 %v225, 64
  %v228 = vpop.permute.xlu0 %227
  %v230 = vmul.f32 %v208, %v228
  %vm231 = vcmp.gt.s32.totalorder %v64, 1
  %v232 = vsel %vm231, 1, 0
  %233 = vset.pattern.permute.xlu0 0
  %234 = vperm.xlu0 %233, %v232
  %v235 = vpop.permute.xlu0 %234
  %vm236 = vcmp.eq.s32.totalorder %v235, 1
  %237 = vrot.lane.b32.xlu0 %v158, 96
  %v238 = vpop.permute.xlu0 %237
  %v240 = vsel %vm236, %v230, %v238
  %242 = vrot.lane.b32.xlu0 %v240, 32
  %v243 = vpop.permute.xlu0 %242
  %245 = vst.msk [vmem:[#allocation2] sm:$0xff] %vm30, %v243
  %v246 = vsel %vm236, %v224, %v212
  %248 = vrot.lane.b32.xlu0 %v246, 96
  %v249 = vpop.permute.xlu0 %248
  %251 = vst.msk [vmem:[#allocation3] sm:$0xff] %vm30, %v249
  %v252 = vld [vmem:[#allocation2] sm:$0xff]
  %253 = vst.msk [vmem:[%s5] sm:$0xff] %vm30, %v252
  // Predicated region
  $region22: #{lstm_par_seq_forward.6} parent=0 // pred_check
    _
  $region23: #{lstm_par_seq_forward.6} parent=0 // pred_check_branch
    %255 = sbr.rel (0) target = $region25
  $region24: #{lstm_par_seq_forward.6} parent=0 // pred_region
    _
  $region25: #{lstm_par_seq_forward.6} parent=0 // pred_fallthru
    _
  // Predicated region
  $region26: #{lstm_par_seq_forward.6} parent=0 // pred_check
    _
  $region27: #{lstm_par_seq_forward.6} parent=0 // pred_check_branch
    %257 = sbr.rel (0) target = $region29
  $region28: #{lstm_par_seq_forward.6} parent=0 // pred_region
    _
  $region29: #{lstm_par_seq_forward.6} parent=0 // pred_fallthru
    _

// kernel: lstm_par_seq_forward.5
$region0: #{lstm_par_seq_forward.5}
  #allocation0 [shape = 'u32[]', space=smem, size = 0x4, offset = 0x4, fixed_abs, tag = 'smem constant byte address 0x4 - core index']
  #allocation1 [shape = 'u32[72,128]{1,0:T(1,128)}', space=vmem, size = 0x9000, scoped, tag = 'internal scratch']
  #allocation2 [shape = 'f32[8,32]{1,0:T(8,128)}', space=vmem, size = 0x1000, scoped, tag = 'scratch operand']
  #allocation3 [shape = 'f32[8,32]{1,0:T(8,128)}', space=vmem, size = 0x1000, scoped, tag = 'scratch operand']
  #allocation4 [shape = 'f32[3,8,128]{2,1,0:T(8,128)}', space=vmem, size = 0x3000, scoped, tag = 'scratch operand']
  %s0 = inlined_call_operand.vmem [shape: f32[3,8,32], index: 0, kind: input, shape index: {}]
  %s1 = inlined_call_operand.vmem [shape: s32[8,1], index: 1, kind: input, shape index: {}]
  %s2 = inlined_call_operand.vmem [shape: f32[32,128], index: 2, kind: input, shape index: {}]
  %s3 = inlined_call_operand.vmem [shape: f32[32,128], index: 3, kind: input, shape index: {}]
  %s4 = inlined_call_operand.vmem [shape: f32[1,128], index: 4, kind: input, shape index: {}]
  %s5 = inlined_call_operand.vmem [shape: f32[8,32], index: 5, kind: output, shape index: {}]
  %s6 = sld [smem:[#allocation0]]
  $region30: #{lstm_par_seq_forward.5} parent=0
    _
  %s8 = ssub.s32 1, %s6
  %s9 = scalar_select 0, %s8, %s6
  // Predicated region
  $region2: #{lstm_par_seq_forward.5} parent=0 // pred_check
    _
  $region3: #{lstm_par_seq_forward.5} parent=0 // pred_check_branch
    %11 = sbr.rel (0) target = $region5
  $region4: #{lstm_par_seq_forward.5} parent=0 // pred_region
    _
  $region5: #{lstm_par_seq_forward.5} parent=0 // pred_fallthru
    _
  // Predicated region
  $region6: #{lstm_par_seq_forward.5} parent=0 // pred_check
    _
  $region7: #{lstm_par_seq_forward.5} parent=0 // pred_check_branch
    %13 = sbr.rel (0) target = $region9
  $region8: #{lstm_par_seq_forward.5} parent=0 // pred_region
    _
  $region9: #{lstm_par_seq_forward.5} parent=0 // pred_fallthru
    _
  // Predicated region
  $region10: #{lstm_par_seq_forward.5} parent=0 // pred_check
    _
  $region11: #{lstm_par_seq_forward.5} parent=0 // pred_check_branch
    %15 = sbr.rel (0) target = $region13
  $region12: #{lstm_par_seq_forward.5} parent=0 // pred_region
    _
  $region13: #{lstm_par_seq_forward.5} parent=0 // pred_fallthru
    _
  // Predicated region
  $region14: #{lstm_par_seq_forward.5} parent=0 // pred_check
    _
  $region15: #{lstm_par_seq_forward.5} parent=0 // pred_check_branch
    %17 = sbr.rel (0) target = $region17
  $region16: #{lstm_par_seq_forward.5} parent=0 // pred_region
    _
  $region17: #{lstm_par_seq_forward.5} parent=0 // pred_fallthru
    _
  // Predicated region
  $region18: #{lstm_par_seq_forward.5} parent=0 // pred_check
    _
  $region19: #{lstm_par_seq_forward.5} parent=0 // pred_check_branch
    %19 = sbr.rel (0) target = $region21
  $region20: #{lstm_par_seq_forward.5} parent=0 // pred_region
    _
  $region21: #{lstm_par_seq_forward.5} parent=0 // pred_fallthru
    _
  %v20 = vld [vmem:[%s0] sm:$0xff]
  %v21 = vld [vmem:[%s0 + $0x8] sm:$0xff]
  %v22 = vld [vmem:[%s0 + $0x10] sm:$0xff]
  %v23 = vld [vmem:[%s2] sm:$0xff]
  %v24 = vld [vmem:[%s2 + $0x8] sm:$0xff]
  %v25 = vld [vmem:[%s2 + $0x10] sm:$0xff]
  %v26 = vld [vmem:[%s2 + $0x18] sm:$0xff]
  %v27 = vld [vmem:[%s4] sm:$0x1]
  %v29 = vperm.slane %v27, 0
  %vm31 = vcmask 261120
  %v33 = vsel %vm31, %v20, 0
  %v36 = vsel %vm31, %v21, 0
  %v39 = vsel %vm31, %v22, 0
  %41 = vmatpush.msra.mxu0 0.0
  %42 = vmatpush.msra.mxu0 0.0
  %43 = vmatpush.msra.mxu0 0.0
  %44 = vmatpush.msra.mxu0 0.0
  %45 = vmatpush.msra.mxu0 0.0
  %46 = vmatpush.msra.mxu0 0.0
  %47 = vmatpush.msra.mxu0 0.0
  %48 = vmatpush.msra.mxu0 0.0
  %49 = vmatpush.msra.mxu0 0.0
  %50 = vmatpush.msra.mxu0 0.0
  %51 = vmatpush.msra.mxu0 0.0
  %52 = vmatpush.msra.mxu0 0.0
  %53 = vmatpush.msra.mxu0 %v26
  %54 = vmatpush.msra.mxu0 %v25
  %55 = vmatpush.msra.mxu0 %v24
  %56 = vmatpush.msra.mxu0 %v23
  %57 = vmatmul.f32.gmra.mxu0 %v33
  %v58 = vpop.f32.mrf.mxu0
  %v59 = vadd.f32 %v29, %v58
  %60 = vmatmul.f32.gmra.mxu0 %v36
  %v61 = vpop.f32.mrf.mxu0
  %v62 = vadd.f32 %v29, %v61
  %63 = vmatmul.f32.gmra.mxu0 %v39
  %v64 = vpop.f32.mrf.mxu0
  %v65 = vadd.f32 %v29, %v64
  %66 = vdwg.mxu0
  %67 = vst [vmem:[#allocation4] sm:$0xff] %v59
  %68 = vst [vmem:[#allocation4 + $0x8] sm:$0xff] %v62
  %69 = vst [vmem:[#allocation4 + $0x10] sm:$0xff] %v65
  %70 = vst.msk [vmem:[#allocation2] sm:$0xff] %vm31, 0.0
  %71 = vst.msk [vmem:[#allocation3] sm:$0xff] %vm31, 0.0
  %v72 = vld [vmem:[%s1] sm:$0xff]
  %v73 = vld [vmem:[#allocation2] sm:$0xff]
  %v74 = vld [vmem:[#allocation3] sm:$0xff]
  %v75 = vld [vmem:[#allocation4] sm:$0xff]
  %v76 = vld [vmem:[%s3] sm:$0xff]
  %v77 = vld [vmem:[%s3 + $0x8] sm:$0xff]
  %v78 = vld [vmem:[%s3 + $0x10] sm:$0xff]
  %v79 = vld [vmem:[%s3 + $0x18] sm:$0xff]
  %v81 = vsel %vm31, %v73, 0
  %83 = vmatpush.msra.mxu0 0.0
  %84 = vmatpush.msra.mxu0 0.0
  %85 = vmatpush.msra.mxu0 0.0
  %86 = vmatpush.msra.mxu0 0.0
  %87 = vmatpush.msra.mxu0 0.0
  %88 = vmatpush.msra.mxu0 0.0
  %89 = vmatpush.msra.mxu0 0.0
  %90 = vmatpush.msra.mxu0 0.0
  %91 = vmatpush.msra.mxu0 0.0
  %92 = vmatpush.msra.mxu0 0.0
  %93 = vmatpush.msra.mxu0 0.0
  %94 = vmatpush.msra.mxu0 0.0
  %95 = vmatpush.msra.mxu0 %v79
  %96 = vmatpush.msra.mxu0 %v78
  %97 = vmatpush.msra.mxu0 %v77
  %98 = vmatpush.msra.mxu0 %v76
  %99 = vmatmul.f32.gmra.mxu0 %v81
  %v100 = vpop.f32.mrf.mxu0
  %v101 = vadd.f32 0.0, %v100
  %102 = vdwg.mxu0
  %v103 = vadd.f32 %v75, %v101
  %v104 = vxor.u32 %v103, 2147483648
  %v105 = vmul.f32 %v104, 1.442695
  %v106 = vpow.pop %v105
  %v107 = vadd.f32 %v106, 1.0
  %v108 = vrcp.pop %v107
  %v109 = vmul.f32 %v107, %v108
  %v110 = vsub.f32 1.0, %v109
  %v111 = vmul.f32 %v108, %v110
  %v112 = vadd.f32 %v108, %v111
  %vm113 = vweird.f32 %v107
  %vm114 = vweird.f32 %v108
  %vm115 = vmor %vm113, %vm114
  %v116 = vsel %vm115, %v108, %v112
  %v117 = vand.u32 2147483647, %v107
  %vm118 = vcmp.eq.f32.partialorder %v117, 8.507059e+37
  %v119 = vand.u32 %v107, 2147483648
  %v120 = vor.u32 1.1754944e-38, %v119
  %v121 = vsel %vm118, %v120, %v116
  %v122 = vmul.f32 1.0, %v121
  %v123 = vtanh.pop %v103
  %125 = vrot.lane.b32.xlu0 %v74, 32
  %v126 = vpop.permute.xlu0 %125
  %v128 = vmul.f32 %v122, %v126
  %130 = vrot.lane.b32.xlu0 %v123, 64
  %v131 = vpop.permute.xlu0 %130
  %v133 = vmul.f32 %v122, %v131
  %135 = vrot.lane.b32.xlu0 %v133, 32
  %v136 = vpop.permute.xlu0 %135
  %v138 = vadd.f32 %v128, %v136
  %v139 = vtanh.pop %v138
  %141 = vrot.lane.b32.xlu0 %v139, 64
  %v142 = vpop.permute.xlu0 %141
  %v144 = vmul.f32 %v122, %v142
  %vm145 = vcmp.gt.s32.totalorder %v72, 0
  %v146 = vsel %vm145, 1, 0
  %147 = vset.pattern.permute.xlu0 0
  %148 = vperm.xlu0 %147, %v146
  %v149 = vpop.permute.xlu0 %148
  %vm150 = vcmp.eq.s32.totalorder %v149, 1
  %151 = vrot.lane.b32.xlu0 %v73, 96
  %v152 = vpop.permute.xlu0 %151
  %v154 = vsel %vm150, %v144, %v152
  %156 = vrot.lane.b32.xlu0 %v154, 32
  %v157 = vpop.permute.xlu0 %156
  %159 = vst.msk [vmem:[#allocation2] sm:$0xff] %vm31, %v157
  %v160 = vsel %vm150, %v138, %v126
  %162 = vrot.lane.b32.xlu0 %v160, 96
  %v163 = vpop.permute.xlu0 %162
  %165 = vst.msk [vmem:[#allocation3] sm:$0xff] %vm31, %v163
  %v166 = vld [vmem:[#allocation2] sm:$0xff]
  %v167 = vld [vmem:[#allocation3] sm:$0xff]
  %s168 = scalar_lea.vmem [#allocation4], 8
  %v169 = vld [vmem:[%s168] sm:$0xff]
  %v170 = vld [vmem:[%s3] sm:$0xff]
  %v171 = vld [vmem:[%s3 + $0x8] sm:$0xff]
  %v172 = vld [vmem:[%s3 + $0x10] sm:$0xff]
  %v173 = vld [vmem:[%s3 + $0x18] sm:$0xff]
  %v175 = vsel %vm31, %v166, 0
  %177 = vmatpush.msra.mxu0 0.0
  %178 = vmatpush.msra.mxu0 0.0
  %179 = vmatpush.msra.mxu0 0.0
  %180 = vmatpush.msra.mxu0 0.0
  %181 = vmatpush.msra.mxu0 0.0
  %182 = vmatpush.msra.mxu0 0.0
  %183 = vmatpush.msra.mxu0 0.0
  %184 = vmatpush.msra.mxu0 0.0
  %185 = vmatpush.msra.mxu0 0.0
  %186 = vmatpush.msra.mxu0 0.0
  %187 = vmatpush.msra.mxu0 0.0
  %188 = vmatpush.msra.mxu0 0.0
  %189 = vmatpush.msra.mxu0 %v173
  %190 = vmatpush.msra.mxu0 %v172
  %191 = vmatpush.msra.mxu0 %v171
  %192 = vmatpush.msra.mxu0 %v170
  %193 = vmatmul.f32.gmra.mxu0 %v175
  %v194 = vpop.f32.mrf.mxu0
  %v195 = vadd.f32 0.0, %v194
  %196 = vdwg.mxu0
  %v197 = vadd.f32 %v169, %v195
  %v198 = vxor.u32 %v197, 2147483648
  %v199 = vmul.f32 %v198, 1.442695
  %v200 = vpow.pop %v199
  %v201 = vadd.f32 %v200, 1.0
  %v202 = vrcp.pop %v201
  %v203 = vmul.f32 %v201, %v202
  %v204 = vsub.f32 1.0, %v203
  %v205 = vmul.f32 %v202, %v204
  %v206 = vadd.f32 %v202, %v205
  %vm207 = vweird.f32 %v201
  %vm208 = vweird.f32 %v202
  %vm209 = vmor %vm207, %vm208
  %v210 = vsel %vm209, %v202, %v206
  %v211 = vand.u32 2147483647, %v201
  %vm212 = vcmp.eq.f32.partialorder %v211, 8.507059e+37
  %v213 = vand.u32 %v201, 2147483648
  %v214 = vor.u32 1.1754944e-38, %v213
  %v215 = vsel %vm212, %v214, %v210
  %v216 = vmul.f32 1.0, %v215
  %v217 = vtanh.pop %v197
  %219 = vrot.lane.b32.xlu0 %v167, 32
  %v220 = vpop.permute.xlu0 %219
  %v222 = vmul.f32 %v216, %v220
  %224 = vrot.lane.b32.xlu0 %v217, 64
  %v225 = vpop.permute.xlu0 %224
  %v227 = vmul.f32 %v216, %v225
  %229 = vrot.lane.b32.xlu0 %v227, 32
  %v230 = vpop.permute.xlu0 %229
  %v232 = vadd.f32 %v222, %v230
  %v233 = vtanh.pop %v232
  %235 = vrot.lane.b32.xlu0 %v233, 64
  %v236 = vpop.permute.xlu0 %235
  %v238 = vmul.f32 %v216, %v236
  %vm239 = vcmp.gt.s32.totalorder %v72, 1
  %v240 = vsel %vm239, 1, 0
  %241 = vset.pattern.permute.xlu0 0
  %242 = vperm.xlu0 %241, %v240
  %v243 = vpop.permute.xlu0 %242
  %vm244 = vcmp.eq.s32.totalorder %v243, 1
  %245 = vrot.lane.b32.xlu0 %v166, 96
  %v246 = vpop.permute.xlu0 %245
  %v248 = vsel %vm244, %v238, %v246
  %250 = vrot.lane.b32.xlu0 %v248, 32
  %v251 = vpop.permute.xlu0 %250
  %253 = vst.msk [vmem:[#allocation2] sm:$0xff] %vm31, %v251
  %v254 = vsel %vm244, %v232, %v220
  %256 = vrot.lane.b32.xlu0 %v254, 96
  %v257 = vpop.permute.xlu0 %256
  %259 = vst.msk [vmem:[#allocation3] sm:$0xff] %vm31, %v257
  %v260 = vld [vmem:[#allocation2] sm:$0xff]
  %v261 = vld [vmem:[#allocation3] sm:$0xff]
  %s262 = scalar_lea.vmem [#allocation4], 16
  %v263 = vld [vmem:[%s262] sm:$0xff]
  %v264 = vld [vmem:[%s3] sm:$0xff]
  %v265 = vld [vmem:[%s3 + $0x8] sm:$0xff]
  %v266 = vld [vmem:[%s3 + $0x10] sm:$0xff]
  %v267 = vld [vmem:[%s3 + $0x18] sm:$0xff]
  %v269 = vsel %vm31, %v260, 0
  %271 = vmatpush.msra.mxu0 0.0
  %272 = vmatpush.msra.mxu0 0.0
  %273 = vmatpush.msra.mxu0 0.0
  %274 = vmatpush.msra.mxu0 0.0
  %275 = vmatpush.msra.mxu0 0.0
  %276 = vmatpush.msra.mxu0 0.0
  %277 = vmatpush.msra.mxu0 0.0
  %278 = vmatpush.msra.mxu0 0.0
  %279 = vmatpush.msra.mxu0 0.0
  %280 = vmatpush.msra.mxu0 0.0
  %281 = vmatpush.msra.mxu0 0.0
  %282 = vmatpush.msra.mxu0 0.0
  %283 = vmatpush.msra.mxu0 %v267
  %284 = vmatpush.msra.mxu0 %v266
  %285 = vmatpush.msra.mxu0 %v265
  %286 = vmatpush.msra.mxu0 %v264
  %287 = vmatmul.f32.gmra.mxu0 %v269
  %v288 = vpop.f32.mrf.mxu0
  %v289 = vadd.f32 0.0, %v288
  %290 = vdwg.mxu0
  %v291 = vadd.f32 %v263, %v289
  %v292 = vxor.u32 %v291, 2147483648
  %v293 = vmul.f32 %v292, 1.442695
  %v294 = vpow.pop %v293
  %v295 = vadd.f32 %v294, 1.0
  %v296 = vrcp.pop %v295
  %v297 = vmul.f32 %v295, %v296
  %v298 = vsub.f32 1.0, %v297
  %v299 = vmul.f32 %v296, %v298
  %v300 = vadd.f32 %v296, %v299
  %vm301 = vweird.f32 %v295
  %vm302 = vweird.f32 %v296
  %vm303 = vmor %vm301, %vm302
  %v304 = vsel %vm303, %v296, %v300
  %v305 = vand.u32 2147483647, %v295
  %vm306 = vcmp.eq.f32.partialorder %v305, 8.507059e+37
  %v307 = vand.u32 %v295, 2147483648
  %v308 = vor.u32 1.1754944e-38, %v307
  %v309 = vsel %vm306, %v308, %v304
  %v310 = vmul.f32 1.0, %v309
  %v311 = vtanh.pop %v291
  %313 = vrot.lane.b32.xlu0 %v261, 32
  %v314 = vpop.permute.xlu0 %313
  %v316 = vmul.f32 %v310, %v314
  %318 = vrot.lane.b32.xlu0 %v311, 64
  %v319 = vpop.permute.xlu0 %318
  %v321 = vmul.f32 %v310, %v319
  %323 = vrot.lane.b32.xlu0 %v321, 32
  %v324 = vpop.permute.xlu0 %323
  %v326 = vadd.f32 %v316, %v324
  %v327 = vtanh.pop %v326
  %329 = vrot.lane.b32.xlu0 %v327, 64
  %v330 = vpop.permute.xlu0 %329
  %v332 = vmul.f32 %v310, %v330
  %vm333 = vcmp.gt.s32.totalorder %v72, 2
  %v334 = vsel %vm333, 1, 0
  %335 = vset.pattern.permute.xlu0 0
  %336 = vperm.xlu0 %335, %v334
  %v337 = vpop.permute.xlu0 %336
  %vm338 = vcmp.eq.s32.totalorder %v337, 1
  %339 = vrot.lane.b32.xlu0 %v260, 96
  %v340 = vpop.permute.xlu0 %339
  %v342 = vsel %vm338, %v332, %v340
  %344 = vrot.lane.b32.xlu0 %v342, 32
  %v345 = vpop.permute.xlu0 %344
  %347 = vst.msk [vmem:[#allocation2] sm:$0xff] %vm31, %v345
  %v348 = vsel %vm338, %v326, %v314
  %350 = vrot.lane.b32.xlu0 %v348, 96
  %v351 = vpop.permute.xlu0 %350
  %353 = vst.msk [vmem:[#allocation3] sm:$0xff] %vm31, %v351
  %v354 = vld [vmem:[#allocation2] sm:$0xff]
  %355 = vst.msk [vmem:[%s5] sm:$0xff] %vm31, %v354
  // Predicated region
  $region22: #{lstm_par_seq_forward.5} parent=0 // pred_check
    _
  $region23: #{lstm_par_seq_forward.5} parent=0 // pred_check_branch
    %357 = sbr.rel (0) target = $region25
  $region24: #{lstm_par_seq_forward.5} parent=0 // pred_region
    _
  $region25: #{lstm_par_seq_forward.5} parent=0 // pred_fallthru
    _
  // Predicated region
  $region26: #{lstm_par_seq_forward.5} parent=0 // pred_check
    _
  $region27: #{lstm_par_seq_forward.5} parent=0 // pred_check_branch
    %359 = sbr.rel (0) target = $region29
  $region28: #{lstm_par_seq_forward.5} parent=0 // pred_region
    _
  $region29: #{lstm_par_seq_forward.5} parent=0 // pred_fallthru
    _

// kernel: lstm_par_seq_forward.4
$region0: #{lstm_par_seq_forward.4}
  #allocation0 [shape = 'u32[]', space=smem, size = 0x4, offset = 0x4, fixed_abs, tag = 'smem constant byte address 0x4 - core index']
  #allocation1 [shape = 'u32[72,128]{1,0:T(1,128)}', space=vmem, size = 0x9000, scoped, tag = 'internal scratch']
  #allocation2 [shape = 'f32[8,32]{1,0:T(8,128)}', space=vmem, size = 0x1000, scoped, tag = 'scratch operand']
  #allocation3 [shape = 'f32[8,32]{1,0:T(8,128)}', space=vmem, size = 0x1000, scoped, tag = 'scratch operand']
  #allocation4 [shape = 'f32[8,8,128]{2,1,0:T(8,128)}', space=vmem, size = 0x8000, scoped, tag = 'scratch operand']
  %s0 = inlined_call_operand.vmem [shape: f32[8,16,16], index: 0, kind: input, shape index: {}]
  %s1 = inlined_call_operand.vmem [shape: s32[16,1], index: 1, kind: input, shape index: {}]
  %s2 = inlined_call_operand.vmem [shape: f32[16,128], index: 2, kind: input, shape index: {}]
  %s3 = inlined_call_operand.vmem [shape: f32[32,128], index: 3, kind: input, shape index: {}]
  %s4 = inlined_call_operand.vmem [shape: f32[1,128], index: 4, kind: input, shape index: {}]
  %s5 = inlined_call_operand.vmem [shape: f32[16,32], index: 5, kind: output, shape index: {}]
  %s6 = sld [smem:[#allocation0]]
  $region91: #{lstm_par_seq_forward.4} parent=0
    _
  %s8 = ssub.s32 1, %s6
  %s9 = scalar_select 0, %s8, %s6
  $region1: #{lstm_par_seq_forward.4} parent=0
    #allocation5 [shape = 'u8[65536]{0}', space=vmem, size = 0x10000, scoped, tag = 'input window, operand 0']
    loop: start=0, step=1, limit=4
    $region2: #{lstm_par_seq_forward.4} parent=1 // loop_pre_header
      _
    $region3: #{lstm_par_seq_forward.4} parent=1 // loop_header
      %s11 = sphi 0, %s15
      %p12 = scmp.ge.s32.totalorder %s11, 4
      %s21 = sphi 0, %s23
      %s24 = sphi 0, %s21
      %s25 = sphi 0, %s24
      %s41 = sphi 0, %s25
      %s47 = sphi 0, %s49
      %s50 = sphi 0, %s47
      %s51 = sphi 0, %s50
      %s67 = sphi 0, %s51
      %s71 = sphi 0, %s71
      %s73 = sphi 0, %s71
      %s74 = sphi 0, %s73
      %s88 = sphi 0, %s74
      %s92 = sphi 0, %s92
      %s94 = sphi 0, %s92
      %s95 = sphi 0, %s94
      %s109 = sphi 0, %s95
      %s113 = sphi 0, %s113
      %s115 = sphi 0, %s113
      %s116 = sphi 0, %s115
      %s130 = sphi 0, %s116
      %s136 = sphi 0, %s138
      %s139 = sphi 0, %s136
      %s140 = sphi 0, %s139
      %s156 = sphi 0, %s140
    $region4: #{lstm_par_seq_forward.4} parent=1 // loop_header_branch
      %14 = sbr.rel (%p12) target = $region8
    $region5: #{lstm_par_seq_forward.4} parent=1 // loop_body
      %s16 = ssub.s32 %s11, 1
      %s17 = ssub.s32 %s11, 2
      %s18 = sadd.s32 %s11, 1
      %s19 = ssub.s32 %s11, %s18
      %p20 = scmp.eq.s32.totalorder %s19, 0
      %s22 = sadd.s32 %s21, 1
      %s23 = scalar_select %p20, %s21, %s22
      %p26 = pneg %p20
      %p27 = scmp.eq.s32.totalorder %s11, 1
      %p28 = por %p26, %p27
      %p29 = scmp.ne.s32.totalorder %s21, %s24
      %p30 = scmp.eq.s32.totalorder %s11, 0
      %p31 = por %p29, %p30
      %p32 = scmp.ne.s32.totalorder %s21, %s24
      %p33 = scmp.eq.s32.totalorder %s16, 1
      %p34 = por %p32, %p33
      %p35 = scmp.ne.s32.totalorder %s24, %s25
      %p36 = scmp.eq.s32.totalorder %s16, 0
      %p37 = por %p35, %p36
      %p38 = scmp.ne.s32.totalorder %s24, %s25
      %p39 = scmp.eq.s32.totalorder %s17, 1
      %p40 = por %p38, %p39
      %p42 = scmp.ne.s32.totalorder %s25, %s41
      %p43 = scmp.eq.s32.totalorder %s17, 0
      %p44 = por %p42, %p43
      %s45 = ssub.s32 %s11, %s18
      %p46 = scmp.eq.s32.totalorder %s45, 0
      %s48 = sadd.s32 %s47, 1
      %s49 = scalar_select %p46, %s47, %s48
      %p52 = pneg %p46
      %p53 = scmp.eq.s32.totalorder %s11, 1
      %p54 = por %p52, %p53
      %p55 = scmp.ne.s32.totalorder %s47, %s50
      %p56 = scmp.eq.s32.totalorder %s11, 0
      %p57 = por %p55, %p56
      %p58 = scmp.ne.s32.totalorder %s47, %s50
      %p59 = scmp.eq.s32.totalorder %s16, 1
      %p60 = por %p58, %p59
      %p61 = scmp.ne.s32.totalorder %s50, %s51
      %p62 = scmp.eq.s32.totalorder %s16, 0
      %p63 = por %p61, %p62
      %p64 = scmp.ne.s32.totalorder %s50, %s51
      %p65 = scmp.eq.s32.totalorder %s17, 1
      %p66 = por %p64, %p65
      %p68 = scmp.ne.s32.totalorder %s51, %s67
      %p69 = scmp.eq.s32.totalorder %s17, 0
      %p70 = por %p68, %p69
      %s72 = sadd.s32 %s71, 1
      %p75 = scmp.eq.s32.totalorder %s11, 1
      %p76 = scmp.ne.s32.totalorder %s71, %s73
      %p77 = scmp.eq.s32.totalorder %s11, 0
      %p78 = por %p76, %p77
      %p79 = scmp.ne.s32.totalorder %s71, %s73
      %p80 = scmp.eq.s32.totalorder %s16, 1
      %p81 = por %p79, %p80
      %p82 = scmp.ne.s32.totalorder %s73, %s74
      %p83 = scmp.eq.s32.totalorder %s16, 0
      %p84 = por %p82, %p83
      %p85 = scmp.ne.s32.totalorder %s73, %s74
      %p86 = scmp.eq.s32.totalorder %s17, 1
      %p87 = por %p85, %p86
      %p89 = scmp.ne.s32.totalorder %s74, %s88
      %p90 = scmp.eq.s32.totalorder %s17, 0
      %p91 = por %p89, %p90
      %s93 = sadd.s32 %s92, 1
      %p96 = scmp.eq.s32.totalorder %s11, 1
      %p97 = scmp.ne.s32.totalorder %s92, %s94
      %p98 = scmp.eq.s32.totalorder %s11, 0
      %p99 = por %p97, %p98
      %p100 = scmp.ne.s32.totalorder %s92, %s94
      %p101 = scmp.eq.s32.totalorder %s16, 1
      %p102 = por %p100, %p101
      %p103 = scmp.ne.s32.totalorder %s94, %s95
      %p104 = scmp.eq.s32.totalorder %s16, 0
      %p105 = por %p103, %p104
      %p106 = scmp.ne.s32.totalorder %s94, %s95
      %p107 = scmp.eq.s32.totalorder %s17, 1
      %p108 = por %p106, %p107
      %p110 = scmp.ne.s32.totalorder %s95, %s109
      %p111 = scmp.eq.s32.totalorder %s17, 0
      %p112 = por %p110, %p111
      %s114 = sadd.s32 %s113, 1
      %p117 = scmp.eq.s32.totalorder %s11, 1
      %p118 = scmp.ne.s32.totalorder %s113, %s115
      %p119 = scmp.eq.s32.totalorder %s11, 0
      %p120 = por %p118, %p119
      %p121 = scmp.ne.s32.totalorder %s113, %s115
      %p122 = scmp.eq.s32.totalorder %s16, 1
      %p123 = por %p121, %p122
      %p124 = scmp.ne.s32.totalorder %s115, %s116
      %p125 = scmp.eq.s32.totalorder %s16, 0
      %p126 = por %p124, %p125
      %p127 = scmp.ne.s32.totalorder %s115, %s116
      %p128 = scmp.eq.s32.totalorder %s17, 1
      %p129 = por %p127, %p128
      %p131 = scmp.ne.s32.totalorder %s116, %s130
      %p132 = scmp.eq.s32.totalorder %s17, 0
      %p133 = por %p131, %p132
      %s134 = ssub.s32 %s11, %s18
      %p135 = scmp.eq.s32.totalorder %s134, 0
      %s137 = sadd.s32 %s136, 1
      %s138 = scalar_select %p135, %s136, %s137
      %p141 = pneg %p135
      %p142 = scmp.eq.s32.totalorder %s11, 1
      %p143 = por %p141, %p142
      %p144 = scmp.ne.s32.totalorder %s136, %s139
      %p145 = scmp.eq.s32.totalorder %s11, 0
      %p146 = por %p144, %p145
      %p147 = scmp.ne.s32.totalorder %s136, %s139
      %p148 = scmp.eq.s32.totalorder %s16, 1
      %p149 = por %p147, %p148
      %p150 = scmp.ne.s32.totalorder %s139, %s140
      %p151 = scmp.eq.s32.totalorder %s16, 0
      %p152 = por %p150, %p151
      %p153 = scmp.ne.s32.totalorder %s139, %s140
      %p154 = scmp.eq.s32.totalorder %s17, 1
      %p155 = por %p153, %p154
      %p157 = scmp.ne.s32.totalorder %s140, %s156
      %p158 = scmp.eq.s32.totalorder %s17, 0
      %p159 = por %p157, %p158
      %p160 = scmp.le.s32.totalorder 1, %s11
      %p161 = scmp.lt.s32.totalorder %s11, 3
      %p162 = pnand %p160, %p161
      %p163 = pneg %p162
      // Predicated region
      $region9: #{lstm_par_seq_forward.4} parent=5 // pred_check
        _
      $region10: #{lstm_par_seq_forward.4} parent=5 // pred_check_branch
        %165 = sbr.rel (%p162) target = $region12
      $region11: #{lstm_par_seq_forward.4} parent=5 // pred_region
        %s166 = ssub.s32 %s11, 1
        // Predicated region
        $region13: #{lstm_par_seq_forward.4} parent=11 // pred_check
          %p167 = pneg %p84
        $region14: #{lstm_par_seq_forward.4} parent=11 // pred_check_branch
          %169 = sbr.rel (%p167) target = $region16
        $region15: #{lstm_par_seq_forward.4} parent=11 // pred_region
          _
        $region16: #{lstm_par_seq_forward.4} parent=11 // pred_fallthru
          _
        // Predicated region
        $region17: #{lstm_par_seq_forward.4} parent=11 // pred_check
          %p170 = pneg %p105
        $region18: #{lstm_par_seq_forward.4} parent=11 // pred_check_branch
          %172 = sbr.rel (%p170) target = $region20
        $region19: #{lstm_par_seq_forward.4} parent=11 // pred_region
          _
        $region20: #{lstm_par_seq_forward.4} parent=11 // pred_fallthru
          _
        // Predicated region
        $region21: #{lstm_par_seq_forward.4} parent=11 // pred_check
          %p173 = pneg %p126
        $region22: #{lstm_par_seq_forward.4} parent=11 // pred_check_branch
          %175 = sbr.rel (%p173) target = $region24
        $region23: #{lstm_par_seq_forward.4} parent=11 // pred_region
          _
        $region24: #{lstm_par_seq_forward.4} parent=11 // pred_fallthru
          _
      $region12: #{lstm_par_seq_forward.4} parent=5 // pred_fallthru
        _
      %p176 = scmp.lt.s32.totalorder %s11, 2
      // Predicated region
      $region25: #{lstm_par_seq_forward.4} parent=5 // pred_check
        %p177 = pneg %p176
      $region26: #{lstm_par_seq_forward.4} parent=5 // pred_check_branch
        %179 = sbr.rel (%p177) target = $region28
      $region27: #{lstm_par_seq_forward.4} parent=5 // pred_region
        // Predicated region
        $region29: #{lstm_par_seq_forward.4} parent=27 // pred_check
          %p180 = pneg %p31
        $region30: #{lstm_par_seq_forward.4} parent=27 // pred_check_branch
          %182 = sbr.rel (%p180) target = $region32
        $region31: #{lstm_par_seq_forward.4} parent=27 // pred_region
          %s183 = sand.u32 %s21, 1
          %s184 = sand.u32 %s21, 1
          %s185 = smul.addr %s184, 64
          %s186 = scalar_lea.vmem [#allocation5], %s185
          %s187 = smul.addr %s11, 8
          %s188 = scalar_lea.vmem %s0, %s187
          // Predicated region
          $region33: #{lstm_par_seq_forward.4} parent=31 // pred_check
            _
          $region34: #{lstm_par_seq_forward.4} parent=31 // pred_check_branch
            %190 = sbr.rel (0) target = $region36
          $region35: #{lstm_par_seq_forward.4} parent=31 // pred_region
            // Predicated region
            $region37: #{lstm_par_seq_forward.4} parent=35 // pred_check
              _
            $region38: #{lstm_par_seq_forward.4} parent=35 // pred_check_branch
              %192 = sbr.rel (0) target = $region40
            $region39: #{lstm_par_seq_forward.4} parent=35 // pred_region
              // Predicated region
              $region52: #{lstm_par_seq_forward.4} parent=39 // pred_check
                _
              $region53: #{lstm_par_seq_forward.4} parent=39 // pred_check_branch
                %222 = sbr.rel (0) target = $region55
              $region54: #{lstm_par_seq_forward.4} parent=39 // pred_region
                loop: start=0, step=1, limit=1
                $region56: #{lstm_par_seq_forward.4} parent=54 // loop_pre_header
                  _
                $region57: #{lstm_par_seq_forward.4} parent=54 // loop_header
                  %s224 = sphi 0, %s228
                  %p225 = scmp.ge.s32.totalorder %s224, 1
                  %s229 = sphi %s188, %s188
                  %s230 = sphi %s186, %s186
                $region58: #{lstm_par_seq_forward.4} parent=54 // loop_header_branch
                  %227 = sbr.rel (%p225) target = $region62
                $region59: #{lstm_par_seq_forward.4} parent=54 // loop_body
                  %v231 = vld [vmem:[%s229] sm:$0xff]
                  %232 = vst [vmem:[%s230] sm:$0xff] %v231
                  %v233 = vld [vmem:[%s229 + $0x10] sm:$0xff]
                  %234 = vst [vmem:[%s230 + $0x8] sm:$0xff] %v233
                  %v235 = vld [vmem:[%s229 + $0x20] sm:$0xff]
                  %236 = vst [vmem:[%s230 + $0x10] sm:$0xff] %v235
                  %v237 = vld [vmem:[%s229 + $0x30] sm:$0xff]
                  %238 = vst [vmem:[%s230 + $0x18] sm:$0xff] %v237
                  %v239 = vld [vmem:[%s229 + $0x40] sm:$0xff]
                  %240 = vst [vmem:[%s230 + $0x20] sm:$0xff] %v239
                  %v241 = vld [vmem:[%s229 + $0x50] sm:$0xff]
                  %242 = vst [vmem:[%s230 + $0x28] sm:$0xff] %v241
                  %v243 = vld [vmem:[%s229 + $0x60] sm:$0xff]
                  %244 = vst [vmem:[%s230 + $0x30] sm:$0xff] %v243
                  %v245 = vld [vmem:[%s229 + $0x70] sm:$0xff]
                  %246 = vst [vmem:[%s230 + $0x38] sm:$0xff] %v245
                $region60: #{lstm_par_seq_forward.4} parent=54 // loop_footer
                  %s228 = sadd.s32 1, %s224
                $region61: #{lstm_par_seq_forward.4} parent=54 // loop_footer_branch
                  %223 = sbr.rel target = $region57
                $region62: #{lstm_par_seq_forward.4} parent=54 // loop_exit
                  _
              $region55: #{lstm_par_seq_forward.4} parent=39 // pred_fallthru
                _
              // Predicated region
              $region63: #{lstm_par_seq_forward.4} parent=39 // pred_check
                _
              $region64: #{lstm_par_seq_forward.4} parent=39 // pred_check_branch
                %248 = sbr.rel target = $region66
              $region65: #{lstm_par_seq_forward.4} parent=39 // pred_region
                _
              $region66: #{lstm_par_seq_forward.4} parent=39 // pred_fallthru
                _
            $region40: #{lstm_par_seq_forward.4} parent=35 // pred_fallthru
              _
            // Predicated region
            $region41: #{lstm_par_seq_forward.4} parent=35 // pred_check
              _
            $region42: #{lstm_par_seq_forward.4} parent=35 // pred_check_branch
              %194 = sbr.rel target = $region44
            $region43: #{lstm_par_seq_forward.4} parent=35 // pred_region
              %s196 = ssub.s32 256, 1
              loop: start=0, step=1, limit=1
              $region45: #{lstm_par_seq_forward.4} parent=43 // loop_pre_header
                _
              $region46: #{lstm_par_seq_forward.4} parent=43 // loop_header
                %s198 = sphi 0, %s202
                %p199 = scmp.ge.s32.totalorder %s198, 1
                %s203 = sphi %s188, %s188
                %s204 = sphi %s186, %s186
              $region47: #{lstm_par_seq_forward.4} parent=43 // loop_header_branch
                %201 = sbr.rel (%p199) target = $region51
              $region48: #{lstm_par_seq_forward.4} parent=43 // loop_body
                %v205 = vld [vmem:[%s203] sm:%s196]
                %206 = vst [vmem:[%s204] sm:%s196] %v205
                %v207 = vld [vmem:[%s203 + $0x10] sm:%s196]
                %208 = vst [vmem:[%s204 + $0x8] sm:%s196] %v207
                %v209 = vld [vmem:[%s203 + $0x20] sm:%s196]
                %210 = vst [vmem:[%s204 + $0x10] sm:%s196] %v209
                %v211 = vld [vmem:[%s203 + $0x30] sm:%s196]
                %212 = vst [vmem:[%s204 + $0x18] sm:%s196] %v211
                %v213 = vld [vmem:[%s203 + $0x40] sm:%s196]
                %214 = vst [vmem:[%s204 + $0x20] sm:%s196] %v213
                %v215 = vld [vmem:[%s203 + $0x50] sm:%s196]
                %216 = vst [vmem:[%s204 + $0x28] sm:%s196] %v215
                %v217 = vld [vmem:[%s203 + $0x60] sm:%s196]
                %218 = vst [vmem:[%s204 + $0x30] sm:%s196] %v217
                %v219 = vld [vmem:[%s203 + $0x70] sm:%s196]
                %220 = vst [vmem:[%s204 + $0x38] sm:%s196] %v219
              $region49: #{lstm_par_seq_forward.4} parent=43 // loop_footer
                %s202 = sadd.s32 1, %s198
              $region50: #{lstm_par_seq_forward.4} parent=43 // loop_footer_branch
                %197 = sbr.rel target = $region46
              $region51: #{lstm_par_seq_forward.4} parent=43 // loop_exit
                _
            $region44: #{lstm_par_seq_forward.4} parent=35 // pred_fallthru
              _
          $region36: #{lstm_par_seq_forward.4} parent=31 // pred_fallthru
            _
          %249 = vnop
        $region32: #{lstm_par_seq_forward.4} parent=27 // pred_fallthru
          _
        // Predicated region
        $region67: #{lstm_par_seq_forward.4} parent=27 // pred_check
          %p250 = pneg %p57
        $region68: #{lstm_par_seq_forward.4} parent=27 // pred_check_branch
          %252 = sbr.rel (%p250) target = $region70
        $region69: #{lstm_par_seq_forward.4} parent=27 // pred_region
          %p253 = scmp.lt.s32.totalorder %s11, 1
          %s254 = scalar_select %p253, %s11, 1
          %s255 = smul.addr %s254, 8
          %s256 = scalar_lea.vmem %s1, %s255
        $region70: #{lstm_par_seq_forward.4} parent=27 // pred_fallthru
          _
      $region28: #{lstm_par_seq_forward.4} parent=5 // pred_fallthru
        _
      %p257 = scmp.le.s32.totalorder 1, %s11
      %p258 = scmp.lt.s32.totalorder %s11, 3
      %p259 = pnand %p257, %p258
      %p260 = pneg %p259
      // Predicated region
      $region71: #{lstm_par_seq_forward.4} parent=5 // pred_check
        _
      $region72: #{lstm_par_seq_forward.4} parent=5 // pred_check_branch
        %262 = sbr.rel (%p259) target = $region74
      $region73: #{lstm_par_seq_forward.4} parent=5 // pred_region
        %s263 = ssub.s32 %s11, 1
        %s264 = sand.u32 %s24, 1
        %s265 = sand.u32 %s24, 1
        %s266 = smul.addr %s265, 64
        %s267 = scalar_lea.vmem [#allocation5], %s266
        // Predicated region
        $region75: #{lstm_par_seq_forward.4} parent=73 // pred_check
          %p268 = pneg %p37
        $region76: #{lstm_par_seq_forward.4} parent=73 // pred_check_branch
          %270 = sbr.rel (%p268) target = $region78
        $region77: #{lstm_par_seq_forward.4} parent=73 // pred_region
          _
        $region78: #{lstm_par_seq_forward.4} parent=73 // pred_fallthru
          _
        %s271 = sand.u32 %s24, 1
        %s272 = sand.u32 %s24, 1
        %s273 = smul.addr %s272, 64
        %s274 = scalar_lea.vmem [#allocation5], %s273
        %p275 = pneg %p37
        %p276 = pneg %p34
        %p277 = scmp.lt.s32.totalorder %s16, 1
        %s278 = scalar_select %p277, %s16, 1
        %s279 = smul.addr %s278, 8
        %s280 = scalar_lea.vmem %s1, %s279
        %p281 = pneg %p63
        %p282 = pneg %p60
        %p283 = pneg %p84
        %p284 = pneg %p81
        %p285 = pneg %p105
        %p286 = pneg %p102
        %p287 = pneg %p126
        %p288 = pneg %p123
        %p289 = pneg %p152
        %p290 = pneg %p149
        %p291 = scmp.lt.s32.totalorder %s16, 1
        %s292 = scalar_select %p291, %s16, 1
        %s293 = smul.addr %s292, 8
        %s294 = scalar_lea.vmem %s5, %s293
        %p295 = scmp.lt.s32.totalorder %s16, 1
        %s296 = scalar_select %p295, %s16, 1
        %s297 = smul.addr %s296, 8
        %s298 = scalar_lea.vmem %s1, %s297
        %p299 = scmp.lt.s32.totalorder %s16, 1
        %s300 = scalar_select %p299, %s16, 1
        %s301 = smul.addr %s300, 8
        %s302 = scalar_lea.vmem %s5, %s301
        %v303 = vld [vmem:[%s267] sm:$0xff]
        %v304 = vld [vmem:[%s267 + $0x8] sm:$0xff]
        %v305 = vld [vmem:[%s267 + $0x10] sm:$0xff]
        %v306 = vld [vmem:[%s267 + $0x18] sm:$0xff]
        %v307 = vld [vmem:[%s267 + $0x20] sm:$0xff]
        %v308 = vld [vmem:[%s267 + $0x28] sm:$0xff]
        %v309 = vld [vmem:[%s267 + $0x30] sm:$0xff]
        %v310 = vld [vmem:[%s267 + $0x38] sm:$0xff]
        %v311 = vld [vmem:[%s2] sm:$0xff]
        %v312 = vld [vmem:[%s2 + $0x8] sm:$0xff]
        %v313 = vld [vmem:[%s4] sm:$0x1]
        %v315 = vperm.slane %v313, 0
        %vm317 = vcmask 130048
        %v319 = vsel %vm317, %v303, 0
        %v322 = vsel %vm317, %v304, 0
        %v325 = vsel %vm317, %v305, 0
        %v328 = vsel %vm317, %v306, 0
        %v331 = vsel %vm317, %v307, 0
        %v334 = vsel %vm317, %v308, 0
        %v337 = vsel %vm317, %v309, 0
        %v340 = vsel %vm317, %v310, 0
        %342 = vmatpush.msra.mxu0 0.0
        %343 = vmatpush.msra.mxu0 0.0
        %344 = vmatpush.msra.mxu0 0.0
        %345 = vmatpush.msra.mxu0 0.0
        %346 = vmatpush.msra.mxu0 0.0
        %347 = vmatpush.msra.mxu0 0.0
        %348 = vmatpush.msra.mxu0 0.0
        %349 = vmatpush.msra.mxu0 0.0
        %350 = vmatpush.msra.mxu0 0.0
        %351 = vmatpush.msra.mxu0 0.0
        %352 = vmatpush.msra.mxu0 0.0
        %353 = vmatpush.msra.mxu0 0.0
        %354 = vmatpush.msra.mxu0 0.0
        %355 = vmatpush.msra.mxu0 0.0
        %356 = vmatpush.msra.mxu0 %v312
        %357 = vmatpush.msra.mxu0 %v311
        %358 = vmatmul.f32.gmra.mxu0 %v319
        %v359 = vpop.f32.mrf.mxu0
        %v360 = vadd.f32 %v315, %v359
        %361 = vmatmul.f32.gmra.mxu0 %v322
        %v362 = vpop.f32.mrf.mxu0
        %v363 = vadd.f32 %v315, %v362
        %364 = vmatmul.f32.gmra.mxu0 %v325
        %v365 = vpop.f32.mrf.mxu0
        %v366 = vadd.f32 %v315, %v365
        %367 = vmatmul.f32.gmra.mxu0 %v328
        %v368 = vpop.f32.mrf.mxu0
        %v369 = vadd.f32 %v315, %v368
        %370 = vmatmul.f32.gmra.mxu0 %v331
        %v371 = vpop.f32.mrf.mxu0
        %v372 = vadd.f32 %v315, %v371
        %373 = vmatmul.f32.gmra.mxu0 %v334
        %v374 = vpop.f32.mrf.mxu0
        %v375 = vadd.f32 %v315, %v374
        %376 = vmatmul.f32.gmra.mxu0 %v337
        %v377 = vpop.f32.mrf.mxu0
        %v378 = vadd.f32 %v315, %v377
        %379 = vmatmul.f32.gmra.mxu0 %v340
        %v380 = vpop.f32.mrf.mxu0
        %v381 = vadd.f32 %v315, %v380
        %382 = vdwg.mxu0
        %383 = vst [vmem:[#allocation4] sm:$0xff] %v360
        %384 = vst [vmem:[#allocation4 + $0x8] sm:$0xff] %v363
        %385 = vst [vmem:[#allocation4 + $0x10] sm:$0xff] %v366
        %386 = vst [vmem:[#allocation4 + $0x18] sm:$0xff] %v369
        %387 = vst [vmem:[#allocation4 + $0x20] sm:$0xff] %v372
        %388 = vst [vmem:[#allocation4 + $0x28] sm:$0xff] %v375
        %389 = vst [vmem:[#allocation4 + $0x30] sm:$0xff] %v378
        %390 = vst [vmem:[#allocation4 + $0x38] sm:$0xff] %v381
        %vm391 = vcmask 261120
        %392 = vst.msk [vmem:[#allocation2] sm:$0xff] %vm391, 0.0
        %393 = vst.msk [vmem:[#allocation3] sm:$0xff] %vm391, 0.0
        %v394 = vld [vmem:[%s298] sm:$0xff]
        %v395 = vld [vmem:[#allocation2] sm:$0xff]
        %v396 = vld [vmem:[#allocation3] sm:$0xff]
        %v397 = vld [vmem:[#allocation4] sm:$0xff]
        %v398 = vld [vmem:[%s3] sm:$0xff]
        %v399 = vld [vmem:[%s3 + $0x8] sm:$0xff]
        %v400 = vld [vmem:[%s3 + $0x10] sm:$0xff]
        %v401 = vld [vmem:[%s3 + $0x18] sm:$0xff]
        %v403 = vsel %vm391, %v395, 0
        %405 = vmatpush.msra.mxu0 0.0
        %406 = vmatpush.msra.mxu0 0.0
        %407 = vmatpush.msra.mxu0 0.0
        %408 = vmatpush.msra.mxu0 0.0
        %409 = vmatpush.msra.mxu0 0.0
        %410 = vmatpush.msra.mxu0 0.0
        %411 = vmatpush.msra.mxu0 0.0
        %412 = vmatpush.msra.mxu0 0.0
        %413 = vmatpush.msra.mxu0 0.0
        %414 = vmatpush.msra.mxu0 0.0
        %415 = vmatpush.msra.mxu0 0.0
        %416 = vmatpush.msra.mxu0 0.0
        %417 = vmatpush.msra.mxu0 %v401
        %418 = vmatpush.msra.mxu0 %v400
        %419 = vmatpush.msra.mxu0 %v399
        %420 = vmatpush.msra.mxu0 %v398
        %421 = vmatmul.f32.gmra.mxu0 %v403
        %v422 = vpop.f32.mrf.mxu0
        %v423 = vadd.f32 0.0, %v422
        %424 = vdwg.mxu0
        %v425 = vadd.f32 %v397, %v423
        %v426 = vxor.u32 %v425, 2147483648
        %v427 = vmul.f32 %v426, 1.442695
        %v428 = vpow.pop %v427
        %v429 = vadd.f32 %v428, 1.0
        %v430 = vrcp.pop %v429
        %v431 = vmul.f32 %v429, %v430
        %v432 = vsub.f32 1.0, %v431
        %v433 = vmul.f32 %v430, %v432
        %v434 = vadd.f32 %v430, %v433
        %vm435 = vweird.f32 %v429
        %vm436 = vweird.f32 %v430
        %vm437 = vmor %vm435, %vm436
        %v438 = vsel %vm437, %v430, %v434
        %v439 = vand.u32 2147483647, %v429
        %vm440 = vcmp.eq.f32.partialorder %v439, 8.507059e+37
        %v441 = vand.u32 %v429, 2147483648
        %v442 = vor.u32 1.1754944e-38, %v441
        %v443 = vsel %vm440, %v442, %v438
        %v444 = vmul.f32 1.0, %v443
        %v445 = vtanh.pop %v425
        %447 = vrot.lane.b32.xlu0 %v396, 32
        %v448 = vpop.permute.xlu0 %447
        %v450 = vmul.f32 %v444, %v448
        %452 = vrot.lane.b32.xlu0 %v445, 64
        %v453 = vpop.permute.xlu0 %452
        %v455 = vmul.f32 %v444, %v453
        %457 = vrot.lane.b32.xlu0 %v455, 32
        %v458 = vpop.permute.xlu0 %457
        %v460 = vadd.f32 %v450, %v458
        %v461 = vtanh.pop %v460
        %463 = vrot.lane.b32.xlu0 %v461, 64
        %v464 = vpop.permute.xlu0 %463
        %v466 = vmul.f32 %v444, %v464
        %vm467 = vcmp.gt.s32.totalorder %v394, 0
        %v468 = vsel %vm467, 1, 0
        %469 = vset.pattern.permute.xlu0 0
        %470 = vperm.xlu0 %469, %v468
        %v471 = vpop.permute.xlu0 %470
        %vm472 = vcmp.eq.s32.totalorder %v471, 1
        %473 = vrot.lane.b32.xlu0 %v395, 96
        %v474 = vpop.permute.xlu0 %473
        %v476 = vsel %vm472, %v466, %v474
        %478 = vrot.lane.b32.xlu0 %v476, 32
        %v479 = vpop.permute.xlu0 %478
        %481 = vst.msk [vmem:[#allocation2] sm:$0xff] %vm391, %v479
        %v482 = vsel %vm472, %v460, %v448
        %484 = vrot.lane.b32.xlu0 %v482, 96
        %v485 = vpop.permute.xlu0 %484
        %487 = vst.msk [vmem:[#allocation3] sm:$0xff] %vm391, %v485
        %v488 = vld [vmem:[#allocation2] sm:$0xff]
        %v489 = vld [vmem:[#allocation3] sm:$0xff]
        %s490 = scalar_lea.vmem [#allocation4], 8
        %v491 = vld [vmem:[%s490] sm:$0xff]
        %v492 = vld [vmem:[%s3] sm:$0xff]
        %v493 = vld [vmem:[%s3 + $0x8] sm:$0xff]
        %v494 = vld [vmem:[%s3 + $0x10] sm:$0xff]
        %v495 = vld [vmem:[%s3 + $0x18] sm:$0xff]
        %v497 = vsel %vm391, %v488, 0
        %499 = vmatpush.msra.mxu0 0.0
        %500 = vmatpush.msra.mxu0 0.0
        %501 = vmatpush.msra.mxu0 0.0
        %502 = vmatpush.msra.mxu0 0.0
        %503 = vmatpush.msra.mxu0 0.0
        %504 = vmatpush.msra.mxu0 0.0
        %505 = vmatpush.msra.mxu0 0.0
        %506 = vmatpush.msra.mxu0 0.0
        %507 = vmatpush.msra.mxu0 0.0
        %508 = vmatpush.msra.mxu0 0.0
        %509 = vmatpush.msra.mxu0 0.0
        %510 = vmatpush.msra.mxu0 0.0
        %511 = vmatpush.msra.mxu0 %v495
        %512 = vmatpush.msra.mxu0 %v494
        %513 = vmatpush.msra.mxu0 %v493
        %514 = vmatpush.msra.mxu0 %v492
        %515 = vmatmul.f32.gmra.mxu0 %v497
        %v516 = vpop.f32.mrf.mxu0
        %v517 = vadd.f32 0.0, %v516
        %518 = vdwg.mxu0
        %v519 = vadd.f32 %v491, %v517
        %v520 = vxor.u32 %v519, 2147483648
        %v521 = vmul.f32 %v520, 1.442695
        %v522 = vpow.pop %v521
        %v523 = vadd.f32 %v522, 1.0
        %v524 = vrcp.pop %v523
        %v525 = vmul.f32 %v523, %v524
        %v526 = vsub.f32 1.0, %v525
        %v527 = vmul.f32 %v524, %v526
        %v528 = vadd.f32 %v524, %v527
        %vm529 = vweird.f32 %v523
        %vm530 = vweird.f32 %v524
        %vm531 = vmor %vm529, %vm530
        %v532 = vsel %vm531, %v524, %v528
        %v533 = vand.u32 2147483647, %v523
        %vm534 = vcmp.eq.f32.partialorder %v533, 8.507059e+37
        %v535 = vand.u32 %v523, 2147483648
        %v536 = vor.u32 1.1754944e-38, %v535
        %v537 = vsel %vm534, %v536, %v532
        %v538 = vmul.f32 1.0, %v537
        %v539 = vtanh.pop %v519
        %541 = vrot.lane.b32.xlu0 %v489, 32
        %v542 = vpop.permute.xlu0 %541
        %v544 = vmul.f32 %v538, %v542
        %546 = vrot.lane.b32.xlu0 %v539, 64
        %v547 = vpop.permute.xlu0 %546
        %v549 = vmul.f32 %v538, %v547
        %551 = vrot.lane.b32.xlu0 %v549, 32
        %v552 = vpop.permute.xlu0 %551
        %v554 = vadd.f32 %v544, %v552
        %v555 = vtanh.pop %v554
        %557 = vrot.lane.b32.xlu0 %v555, 64
        %v558 = vpop.permute.xlu0 %557
        %v560 = vmul.f32 %v538, %v558
        %vm561 = vcmp.gt.s32.totalorder %v394, 1
        %v562 = vsel %vm561, 1, 0
        %563 = vset.pattern.permute.xlu0 0
        %564 = vperm.xlu0 %563, %v562
        %v565 = vpop.permute.xlu0 %564
        %vm566 = vcmp.eq.s32.totalorder %v565, 1
        %567 = vrot.lane.b32.xlu0 %v488, 96
        %v568 = vpop.permute.xlu0 %567
        %v570 = vsel %vm566, %v560, %v568
        %572 = vrot.lane.b32.xlu0 %v570, 32
        %v573 = vpop.permute.xlu0 %572
        %575 = vst.msk [vmem:[#allocation2] sm:$0xff] %vm391, %v573
        %v576 = vsel %vm566, %v554, %v542
        %578 = vrot.lane.b32.xlu0 %v576, 96
        %v579 = vpop.permute.xlu0 %578
        %581 = vst.msk [vmem:[#allocation3] sm:$0xff] %vm391, %v579
        %v582 = vld [vmem:[#allocation2] sm:$0xff]
        %v583 = vld [vmem:[#allocation3] sm:$0xff]
        %s584 = scalar_lea.vmem [#allocation4], 16
        %v585 = vld [vmem:[%s584] sm:$0xff]
        %v586 = vld [vmem:[%s3] sm:$0xff]
        %v587 = vld [vmem:[%s3 + $0x8] sm:$0xff]
        %v588 = vld [vmem:[%s3 + $0x10] sm:$0xff]
        %v589 = vld [vmem:[%s3 + $0x18] sm:$0xff]
        %v591 = vsel %vm391, %v582, 0
        %593 = vmatpush.msra.mxu0 0.0
        %594 = vmatpush.msra.mxu0 0.0
        %595 = vmatpush.msra.mxu0 0.0
        %596 = vmatpush.msra.mxu0 0.0
        %597 = vmatpush.msra.mxu0 0.0
        %598 = vmatpush.msra.mxu0 0.0
        %599 = vmatpush.msra.mxu0 0.0
        %600 = vmatpush.msra.mxu0 0.0
        %601 = vmatpush.msra.mxu0 0.0
        %602 = vmatpush.msra.mxu0 0.0
        %603 = vmatpush.msra.mxu0 0.0
        %604 = vmatpush.msra.mxu0 0.0
        %605 = vmatpush.msra.mxu0 %v589
        %606 = vmatpush.msra.mxu0 %v588
        %607 = vmatpush.msra.mxu0 %v587
        %608 = vmatpush.msra.mxu0 %v586
        %609 = vmatmul.f32.gmra.mxu0 %v591
        %v610 = vpop.f32.mrf.mxu0
        %v611 = vadd.f32 0.0, %v610
        %612 = vdwg.mxu0
        %v613 = vadd.f32 %v585, %v611
        %v614 = vxor.u32 %v613, 2147483648
        %v615 = vmul.f32 %v614, 1.442695
        %v616 = vpow.pop %v615
        %v617 = vadd.f32 %v616, 1.0
        %v618 = vrcp.pop %v617
        %v619 = vmul.f32 %v617, %v618
        %v620 = vsub.f32 1.0, %v619
        %v621 = vmul.f32 %v618, %v620
        %v622 = vadd.f32 %v618, %v621
        %vm623 = vweird.f32 %v617
        %vm624 = vweird.f32 %v618
        %vm625 = vmor %vm623, %vm624
        %v626 = vsel %vm625, %v618, %v622
        %v627 = vand.u32 2147483647, %v617
        %vm628 = vcmp.eq.f32.partialorder %v627, 8.507059e+37
        %v629 = vand.u32 %v617, 2147483648
        %v630 = vor.u32 1.1754944e-38, %v629
        %v631 = vsel %vm628, %v630, %v626
        %v632 = vmul.f32 1.0, %v631
        %v633 = vtanh.pop %v613
        %635 = vrot.lane.b32.xlu0 %v583, 32
        %v636 = vpop.permute.xlu0 %635
        %v638 = vmul.f32 %v632, %v636
        %640 = vrot.lane.b32.xlu0 %v633, 64
        %v641 = vpop.permute.xlu0 %640
        %v643 = vmul.f32 %v632, %v641
        %645 = vrot.lane.b32.xlu0 %v643, 32
        %v646 = vpop.permute.xlu0 %645
        %v648 = vadd.f32 %v638, %v646
        %v649 = vtanh.pop %v648
        %651 = vrot.lane.b32.xlu0 %v649, 64
        %v652 = vpop.permute.xlu0 %651
        %v654 = vmul.f32 %v632, %v652
        %vm655 = vcmp.gt.s32.totalorder %v394, 2
        %v656 = vsel %vm655, 1, 0
        %657 = vset.pattern.permute.xlu0 0
        %658 = vperm.xlu0 %657, %v656
        %v659 = vpop.permute.xlu0 %658
        %vm660 = vcmp.eq.s32.totalorder %v659, 1
        %661 = vrot.lane.b32.xlu0 %v582, 96
        %v662 = vpop.permute.xlu0 %661
        %v664 = vsel %vm660, %v654, %v662
        %666 = vrot.lane.b32.xlu0 %v664, 32
        %v667 = vpop.permute.xlu0 %666
        %669 = vst.msk [vmem:[#allocation2] sm:$0xff] %vm391, %v667
        %v670 = vsel %vm660, %v648, %v636
        %672 = vrot.lane.b32.xlu0 %v670, 96
        %v673 = vpop.permute.xlu0 %672
        %675 = vst.msk [vmem:[#allocation3] sm:$0xff] %vm391, %v673
        %v676 = vld [vmem:[#allocation2] sm:$0xff]
        %v677 = vld [vmem:[#allocation3] sm:$0xff]
        %s678 = scalar_lea.vmem [#allocation4], 24
        %v679 = vld [vmem:[%s678] sm:$0xff]
        %v680 = vld [vmem:[%s3] sm:$0xff]
        %v681 = vld [vmem:[%s3 + $0x8] sm:$0xff]
        %v682 = vld [vmem:[%s3 + $0x10] sm:$0xff]
        %v683 = vld [vmem:[%s3 + $0x18] sm:$0xff]
        %v685 = vsel %vm391, %v676, 0
        %687 = vmatpush.msra.mxu0 0.0
        %688 = vmatpush.msra.mxu0 0.0
        %689 = vmatpush.msra.mxu0 0.0
        %690 = vmatpush.msra.mxu0 0.0
        %691 = vmatpush.msra.mxu0 0.0
        %692 = vmatpush.msra.mxu0 0.0
        %693 = vmatpush.msra.mxu0 0.0
        %694 = vmatpush.msra.mxu0 0.0
        %695 = vmatpush.msra.mxu0 0.0
        %696 = vmatpush.msra.mxu0 0.0
        %697 = vmatpush.msra.mxu0 0.0
        %698 = vmatpush.msra.mxu0 0.0
        %699 = vmatpush.msra.mxu0 %v683
        %700 = vmatpush.msra.mxu0 %v682
        %701 = vmatpush.msra.mxu0 %v681
        %702 = vmatpush.msra.mxu0 %v680
        %703 = vmatmul.f32.gmra.mxu0 %v685
        %v704 = vpop.f32.mrf.mxu0
        %v705 = vadd.f32 0.0, %v704
        %706 = vdwg.mxu0
        %v707 = vadd.f32 %v679, %v705
        %v708 = vxor.u32 %v707, 2147483648
        %v709 = vmul.f32 %v708, 1.442695
        %v710 = vpow.pop %v709
        %v711 = vadd.f32 %v710, 1.0
        %v712 = vrcp.pop %v711
        %v713 = vmul.f32 %v711, %v712
        %v714 = vsub.f32 1.0, %v713
        %v715 = vmul.f32 %v712, %v714
        %v716 = vadd.f32 %v712, %v715
        %vm717 = vweird.f32 %v711
        %vm718 = vweird.f32 %v712
        %vm719 = vmor %vm717, %vm718
        %v720 = vsel %vm719, %v712, %v716
        %v721 = vand.u32 2147483647, %v711
        %vm722 = vcmp.eq.f32.partialorder %v721, 8.507059e+37
        %v723 = vand.u32 %v711, 2147483648
        %v724 = vor.u32 1.1754944e-38, %v723
        %v725 = vsel %vm722, %v724, %v720
        %v726 = vmul.f32 1.0, %v725
        %v727 = vtanh.pop %v707
        %729 = vrot.lane.b32.xlu0 %v677, 32
        %v730 = vpop.permute.xlu0 %729
        %v732 = vmul.f32 %v726, %v730
        %734 = vrot.lane.b32.xlu0 %v727, 64
        %v735 = vpop.permute.xlu0 %734
        %v737 = vmul.f32 %v726, %v735
        %739 = vrot.lane.b32.xlu0 %v737, 32
        %v740 = vpop.permute.xlu0 %739
        %v742 = vadd.f32 %v732, %v740
        %v743 = vtanh.pop %v742
        %745 = vrot.lane.b32.xlu0 %v743, 64
        %v746 = vpop.permute.xlu0 %745
        %v748 = vmul.f32 %v726, %v746
        %vm749 = vcmp.gt.s32.totalorder %v394, 3
        %v750 = vsel %vm749, 1, 0
        %751 = vset.pattern.permute.xlu0 0
        %752 = vperm.xlu0 %751, %v750
        %v753 = vpop.permute.xlu0 %752
        %vm754 = vcmp.eq.s32.totalorder %v753, 1
        %755 = vrot.lane.b32.xlu0 %v676, 96
        %v756 = vpop.permute.xlu0 %755
        %v758 = vsel %vm754, %v748, %v756
        %760 = vrot.lane.b32.xlu0 %v758, 32
        %v761 = vpop.permute.xlu0 %760
        %763 = vst.msk [vmem:[#allocation2] sm:$0xff] %vm391, %v761
        %v764 = vsel %vm754, %v742, %v730
        %766 = vrot.lane.b32.xlu0 %v764, 96
        %v767 = vpop.permute.xlu0 %766
        %769 = vst.msk [vmem:[#allocation3] sm:$0xff] %vm391, %v767
        %v770 = vld [vmem:[#allocation2] sm:$0xff]
        %v771 = vld [vmem:[#allocation3] sm:$0xff]
        %s772 = scalar_lea.vmem [#allocation4], 32
        %v773 = vld [vmem:[%s772] sm:$0xff]
        %v774 = vld [vmem:[%s3] sm:$0xff]
        %v775 = vld [vmem:[%s3 + $0x8] sm:$0xff]
        %v776 = vld [vmem:[%s3 + $0x10] sm:$0xff]
        %v777 = vld [vmem:[%s3 + $0x18] sm:$0xff]
        %v779 = vsel %vm391, %v770, 0
        %781 = vmatpush.msra.mxu0 0.0
        %782 = vmatpush.msra.mxu0 0.0
        %783 = vmatpush.msra.mxu0 0.0
        %784 = vmatpush.msra.mxu0 0.0
        %785 = vmatpush.msra.mxu0 0.0
        %786 = vmatpush.msra.mxu0 0.0
        %787 = vmatpush.msra.mxu0 0.0
        %788 = vmatpush.msra.mxu0 0.0
        %789 = vmatpush.msra.mxu0 0.0
        %790 = vmatpush.msra.mxu0 0.0
        %791 = vmatpush.msra.mxu0 0.0
        %792 = vmatpush.msra.mxu0 0.0
        %793 = vmatpush.msra.mxu0 %v777
        %794 = vmatpush.msra.mxu0 %v776
        %795 = vmatpush.msra.mxu0 %v775
        %796 = vmatpush.msra.mxu0 %v774
        %797 = vmatmul.f32.gmra.mxu0 %v779
        %v798 = vpop.f32.mrf.mxu0
        %v799 = vadd.f32 0.0, %v798
        %800 = vdwg.mxu0
        %v801 = vadd.f32 %v773, %v799
        %v802 = vxor.u32 %v801, 2147483648
        %v803 = vmul.f32 %v802, 1.442695
        %v804 = vpow.pop %v803
        %v805 = vadd.f32 %v804, 1.0
        %v806 = vrcp.pop %v805
        %v807 = vmul.f32 %v805, %v806
        %v808 = vsub.f32 1.0, %v807
        %v809 = vmul.f32 %v806, %v808
        %v810 = vadd.f32 %v806, %v809
        %vm811 = vweird.f32 %v805
        %vm812 = vweird.f32 %v806
        %vm813 = vmor %vm811, %vm812
        %v814 = vsel %vm813, %v806, %v810
        %v815 = vand.u32 2147483647, %v805
        %vm816 = vcmp.eq.f32.partialorder %v815, 8.507059e+37
        %v817 = vand.u32 %v805, 2147483648
        %v818 = vor.u32 1.1754944e-38, %v817
        %v819 = vsel %vm816, %v818, %v814
        %v820 = vmul.f32 1.0, %v819
        %v821 = vtanh.pop %v801
        %823 = vrot.lane.b32.xlu0 %v771, 32
        %v824 = vpop.permute.xlu0 %823
        %v826 = vmul.f32 %v820, %v824
        %828 = vrot.lane.b32.xlu0 %v821, 64
        %v829 = vpop.permute.xlu0 %828
        %v831 = vmul.f32 %v820, %v829
        %833 = vrot.lane.b32.xlu0 %v831, 32
        %v834 = vpop.permute.xlu0 %833
        %v836 = vadd.f32 %v826, %v834
        %v837 = vtanh.pop %v836
        %839 = vrot.lane.b32.xlu0 %v837, 64
        %v840 = vpop.permute.xlu0 %839
        %v842 = vmul.f32 %v820, %v840
        %vm843 = vcmp.gt.s32.totalorder %v394, 4
        %v844 = vsel %vm843, 1, 0
        %845 = vset.pattern.permute.xlu0 0
        %846 = vperm.xlu0 %845, %v844
        %v847 = vpop.permute.xlu0 %846
        %vm848 = vcmp.eq.s32.totalorder %v847, 1
        %849 = vrot.lane.b32.xlu0 %v770, 96
        %v850 = vpop.permute.xlu0 %849
        %v852 = vsel %vm848, %v842, %v850
        %854 = vrot.lane.b32.xlu0 %v852, 32
        %v855 = vpop.permute.xlu0 %854
        %857 = vst.msk [vmem:[#allocation2] sm:$0xff] %vm391, %v855
        %v858 = vsel %vm848, %v836, %v824
        %860 = vrot.lane.b32.xlu0 %v858, 96
        %v861 = vpop.permute.xlu0 %860
        %863 = vst.msk [vmem:[#allocation3] sm:$0xff] %vm391, %v861
        %v864 = vld [vmem:[#allocation2] sm:$0xff]
        %v865 = vld [vmem:[#allocation3] sm:$0xff]
        %s866 = scalar_lea.vmem [#allocation4], 40
        %v867 = vld [vmem:[%s866] sm:$0xff]
        %v868 = vld [vmem:[%s3] sm:$0xff]
        %v869 = vld [vmem:[%s3 + $0x8] sm:$0xff]
        %v870 = vld [vmem:[%s3 + $0x10] sm:$0xff]
        %v871 = vld [vmem:[%s3 + $0x18] sm:$0xff]
        %v873 = vsel %vm391, %v864, 0
        %875 = vmatpush.msra.mxu0 0.0
        %876 = vmatpush.msra.mxu0 0.0
        %877 = vmatpush.msra.mxu0 0.0
        %878 = vmatpush.msra.mxu0 0.0
        %879 = vmatpush.msra.mxu0 0.0
        %880 = vmatpush.msra.mxu0 0.0
        %881 = vmatpush.msra.mxu0 0.0
        %882 = vmatpush.msra.mxu0 0.0
        %883 = vmatpush.msra.mxu0 0.0
        %884 = vmatpush.msra.mxu0 0.0
        %885 = vmatpush.msra.mxu0 0.0
        %886 = vmatpush.msra.mxu0 0.0
        %887 = vmatpush.msra.mxu0 %v871
        %888 = vmatpush.msra.mxu0 %v870
        %889 = vmatpush.msra.mxu0 %v869
        %890 = vmatpush.msra.mxu0 %v868
        %891 = vmatmul.f32.gmra.mxu0 %v873
        %v892 = vpop.f32.mrf.mxu0
        %v893 = vadd.f32 0.0, %v892
        %894 = vdwg.mxu0
        %v895 = vadd.f32 %v867, %v893
        %v896 = vxor.u32 %v895, 2147483648
        %v897 = vmul.f32 %v896, 1.442695
        %v898 = vpow.pop %v897
        %v899 = vadd.f32 %v898, 1.0
        %v900 = vrcp.pop %v899
        %v901 = vmul.f32 %v899, %v900
        %v902 = vsub.f32 1.0, %v901
        %v903 = vmul.f32 %v900, %v902
        %v904 = vadd.f32 %v900, %v903
        %vm905 = vweird.f32 %v899
        %vm906 = vweird.f32 %v900
        %vm907 = vmor %vm905, %vm906
        %v908 = vsel %vm907, %v900, %v904
        %v909 = vand.u32 2147483647, %v899
        %vm910 = vcmp.eq.f32.partialorder %v909, 8.507059e+37
        %v911 = vand.u32 %v899, 2147483648
        %v912 = vor.u32 1.1754944e-38, %v911
        %v913 = vsel %vm910, %v912, %v908
        %v914 = vmul.f32 1.0, %v913
        %v915 = vtanh.pop %v895
        %917 = vrot.lane.b32.xlu0 %v865, 32
        %v918 = vpop.permute.xlu0 %917
        %v920 = vmul.f32 %v914, %v918
        %922 = vrot.lane.b32.xlu0 %v915, 64
        %v923 = vpop.permute.xlu0 %922
        %v925 = vmul.f32 %v914, %v923
        %927 = vrot.lane.b32.xlu0 %v925, 32
        %v928 = vpop.permute.xlu0 %927
        %v930 = vadd.f32 %v920, %v928
        %v931 = vtanh.pop %v930
        %933 = vrot.lane.b32.xlu0 %v931, 64
        %v934 = vpop.permute.xlu0 %933
        %v936 = vmul.f32 %v914, %v934
        %vm937 = vcmp.gt.s32.totalorder %v394, 5
        %v938 = vsel %vm937, 1, 0
        %939 = vset.pattern.permute.xlu0 0
        %940 = vperm.xlu0 %939, %v938
        %v941 = vpop.permute.xlu0 %940
        %vm942 = vcmp.eq.s32.totalorder %v941, 1
        %943 = vrot.lane.b32.xlu0 %v864, 96
        %v944 = vpop.permute.xlu0 %943
        %v946 = vsel %vm942, %v936, %v944
        %948 = vrot.lane.b32.xlu0 %v946, 32
        %v949 = vpop.permute.xlu0 %948
        %951 = vst.msk [vmem:[#allocation2] sm:$0xff] %vm391, %v949
        %v952 = vsel %vm942, %v930, %v918
        %954 = vrot.lane.b32.xlu0 %v952, 96
        %v955 = vpop.permute.xlu0 %954
        %957 = vst.msk [vmem:[#allocation3] sm:$0xff] %vm391, %v955
        %v958 = vld [vmem:[#allocation2] sm:$0xff]
        %v959 = vld [vmem:[#allocation3] sm:$0xff]
        %s960 = scalar_lea.vmem [#allocation4], 48
        %v961 = vld [vmem:[%s960] sm:$0xff]
        %v962 = vld [vmem:[%s3] sm:$0xff]
        %v963 = vld [vmem:[%s3 + $0x8] sm:$0xff]
        %v964 = vld [vmem:[%s3 + $0x10] sm:$0xff]
        %v965 = vld [vmem:[%s3 + $0x18] sm:$0xff]
        %v967 = vsel %vm391, %v958, 0
        %969 = vmatpush.msra.mxu0 0.0
        %970 = vmatpush.msra.mxu0 0.0
        %971 = vmatpush.msra.mxu0 0.0
        %972 = vmatpush.msra.mxu0 0.0
        %973 = vmatpush.msra.mxu0 0.0
        %974 = vmatpush.msra.mxu0 0.0
        %975 = vmatpush.msra.mxu0 0.0
        %976 = vmatpush.msra.mxu0 0.0
        %977 = vmatpush.msra.mxu0 0.0
        %978 = vmatpush.msra.mxu0 0.0
        %979 = vmatpush.msra.mxu0 0.0
        %980 = vmatpush.msra.mxu0 0.0
        %981 = vmatpush.msra.mxu0 %v965
        %982 = vmatpush.msra.mxu0 %v964
        %983 = vmatpush.msra.mxu0 %v963
        %984 = vmatpush.msra.mxu0 %v962
        %985 = vmatmul.f32.gmra.mxu0 %v967
        %v986 = vpop.f32.mrf.mxu0
        %v987 = vadd.f32 0.0, %v986
        %988 = vdwg.mxu0
        %v989 = vadd.f32 %v961, %v987
        %v990 = vxor.u32 %v989, 2147483648
        %v991 = vmul.f32 %v990, 1.442695
        %v992 = vpow.pop %v991
        %v993 = vadd.f32 %v992, 1.0
        %v994 = vrcp.pop %v993
        %v995 = vmul.f32 %v993, %v994
        %v996 = vsub.f32 1.0, %v995
        %v997 = vmul.f32 %v994, %v996
        %v998 = vadd.f32 %v994, %v997
        %vm999 = vweird.f32 %v993
        %vm1000 = vweird.f32 %v994
        %vm1001 = vmor %vm999, %vm1000
        %v1002 = vsel %vm1001, %v994, %v998
        %v1003 = vand.u32 2147483647, %v993
        %vm1004 = vcmp.eq.f32.partialorder %v1003, 8.507059e+37
        %v1005 = vand.u32 %v993, 2147483648
        %v1006 = vor.u32 1.1754944e-38, %v1005
        %v1007 = vsel %vm1004, %v1006, %v1002
        %v1008 = vmul.f32 1.0, %v1007
        %v1009 = vtanh.pop %v989
        %1011 = vrot.lane.b32.xlu0 %v959, 32
        %v1012 = vpop.permute.xlu0 %1011
        %v1014 = vmul.f32 %v1008, %v1012
        %1016 = vrot.lane.b32.xlu0 %v1009, 64
        %v1017 = vpop.permute.xlu0 %1016
        %v1019 = vmul.f32 %v1008, %v1017
        %1021 = vrot.lane.b32.xlu0 %v1019, 32
        %v1022 = vpop.permute.xlu0 %1021
        %v1024 = vadd.f32 %v1014, %v1022
        %v1025 = vtanh.pop %v1024
        %1027 = vrot.lane.b32.xlu0 %v1025, 64
        %v1028 = vpop.permute.xlu0 %1027
        %v1030 = vmul.f32 %v1008, %v1028
        %vm1031 = vcmp.gt.s32.totalorder %v394, 6
        %v1032 = vsel %vm1031, 1, 0
        %1033 = vset.pattern.permute.xlu0 0
        %1034 = vperm.xlu0 %1033, %v1032
        %v1035 = vpop.permute.xlu0 %1034
        %vm1036 = vcmp.eq.s32.totalorder %v1035, 1
        %1037 = vrot.lane.b32.xlu0 %v958, 96
        %v1038 = vpop.permute.xlu0 %1037
        %v1040 = vsel %vm1036, %v1030, %v1038
        %1042 = vrot.lane.b32.xlu0 %v1040, 32
        %v1043 = vpop.permute.xlu0 %1042
        %1045 = vst.msk [vmem:[#allocation2] sm:$0xff] %vm391, %v1043
        %v1046 = vsel %vm1036, %v1024, %v1012
        %1048 = vrot.lane.b32.xlu0 %v1046, 96
        %v1049 = vpop.permute.xlu0 %1048
        %1051 = vst.msk [vmem:[#allocation3] sm:$0xff] %vm391, %v1049
        %v1052 = vld [vmem:[#allocation2] sm:$0xff]
        %v1053 = vld [vmem:[#allocation3] sm:$0xff]
        %s1054 = scalar_lea.vmem [#allocation4], 56
        %v1055 = vld [vmem:[%s1054] sm:$0xff]
        %v1056 = vld [vmem:[%s3] sm:$0xff]
        %v1057 = vld [vmem:[%s3 + $0x8] sm:$0xff]
        %v1058 = vld [vmem:[%s3 + $0x10] sm:$0xff]
        %v1059 = vld [vmem:[%s3 + $0x18] sm:$0xff]
        %v1061 = vsel %vm391, %v1052, 0
        %1063 = vmatpush.msra.mxu0 0.0
        %1064 = vmatpush.msra.mxu0 0.0
        %1065 = vmatpush.msra.mxu0 0.0
        %1066 = vmatpush.msra.mxu0 0.0
        %1067 = vmatpush.msra.mxu0 0.0
        %1068 = vmatpush.msra.mxu0 0.0
        %1069 = vmatpush.msra.mxu0 0.0
        %1070 = vmatpush.msra.mxu0 0.0
        %1071 = vmatpush.msra.mxu0 0.0
        %1072 = vmatpush.msra.mxu0 0.0
        %1073 = vmatpush.msra.mxu0 0.0
        %1074 = vmatpush.msra.mxu0 0.0
        %1075 = vmatpush.msra.mxu0 %v1059
        %1076 = vmatpush.msra.mxu0 %v1058
        %1077 = vmatpush.msra.mxu0 %v1057
        %1078 = vmatpush.msra.mxu0 %v1056
        %1079 = vmatmul.f32.gmra.mxu0 %v1061
        %v1080 = vpop.f32.mrf.mxu0
        %v1081 = vadd.f32 0.0, %v1080
        %1082 = vdwg.mxu0
        %v1083 = vadd.f32 %v1055, %v1081
        %v1084 = vxor.u32 %v1083, 2147483648
        %v1085 = vmul.f32 %v1084, 1.442695
        %v1086 = vpow.pop %v1085
        %v1087 = vadd.f32 %v1086, 1.0
        %v1088 = vrcp.pop %v1087
        %v1089 = vmul.f32 %v1087, %v1088
        %v1090 = vsub.f32 1.0, %v1089
        %v1091 = vmul.f32 %v1088, %v1090
        %v1092 = vadd.f32 %v1088, %v1091
        %vm1093 = vweird.f32 %v1087
        %vm1094 = vweird.f32 %v1088
        %vm1095 = vmor %vm1093, %vm1094
        %v1096 = vsel %vm1095, %v1088, %v1092
        %v1097 = vand.u32 2147483647, %v1087
        %vm1098 = vcmp.eq.f32.partialorder %v1097, 8.507059e+37
        %v1099 = vand.u32 %v1087, 2147483648
        %v1100 = vor.u32 1.1754944e-38, %v1099
        %v1101 = vsel %vm1098, %v1100, %v1096
        %v1102 = vmul.f32 1.0, %v1101
        %v1103 = vtanh.pop %v1083
        %1105 = vrot.lane.b32.xlu0 %v1053, 32
        %v1106 = vpop.permute.xlu0 %1105
        %v1108 = vmul.f32 %v1102, %v1106
        %1110 = vrot.lane.b32.xlu0 %v1103, 64
        %v1111 = vpop.permute.xlu0 %1110
        %v1113 = vmul.f32 %v1102, %v1111
        %1115 = vrot.lane.b32.xlu0 %v1113, 32
        %v1116 = vpop.permute.xlu0 %1115
        %v1118 = vadd.f32 %v1108, %v1116
        %v1119 = vtanh.pop %v1118
        %1121 = vrot.lane.b32.xlu0 %v1119, 64
        %v1122 = vpop.permute.xlu0 %1121
        %v1124 = vmul.f32 %v1102, %v1122
        %vm1125 = vcmp.gt.s32.totalorder %v394, 7
        %v1126 = vsel %vm1125, 1, 0
        %1127 = vset.pattern.permute.xlu0 0
        %1128 = vperm.xlu0 %1127, %v1126
        %v1129 = vpop.permute.xlu0 %1128
        %vm1130 = vcmp.eq.s32.totalorder %v1129, 1
        %1131 = vrot.lane.b32.xlu0 %v1052, 96
        %v1132 = vpop.permute.xlu0 %1131
        %v1134 = vsel %vm1130, %v1124, %v1132
        %1136 = vrot.lane.b32.xlu0 %v1134, 32
        %v1137 = vpop.permute.xlu0 %1136
        %1139 = vst.msk [vmem:[#allocation2] sm:$0xff] %vm391, %v1137
        %v1140 = vsel %vm1130, %v1118, %v1106
        %1142 = vrot.lane.b32.xlu0 %v1140, 96
        %v1143 = vpop.permute.xlu0 %1142
        %1145 = vst.msk [vmem:[#allocation3] sm:$0xff] %vm391, %v1143
        %v1146 = vld [vmem:[#allocation2] sm:$0xff]
        %1147 = vst.msk [vmem:[%s302] sm:$0xff] %vm391, %v1146
        %p1148 = scmp.lt.s32.totalorder %s16, 1
        %s1149 = scalar_select %p1148, %s16, 1
        %s1150 = smul.addr %s1149, 8
        %s1151 = scalar_lea.vmem %s5, %s1150
        // Predicated region
        $region79: #{lstm_par_seq_forward.4} parent=73 // pred_check
          %p1152 = pneg %p149
        $region80: #{lstm_par_seq_forward.4} parent=73 // pred_check_branch
          %1154 = sbr.rel (%p1152) target = $region82
        $region81: #{lstm_par_seq_forward.4} parent=73 // pred_region
          _
        $region82: #{lstm_par_seq_forward.4} parent=73 // pred_fallthru
          _
      $region74: #{lstm_par_seq_forward.4} parent=5 // pred_fallthru
        _
      %p1155 = scmp.le.s32.totalorder 2, %s11
      // Predicated region
      $region83: #{lstm_par_seq_forward.4} parent=5 // pred_check
        %p1156 = pneg %p1155
      $region84: #{lstm_par_seq_forward.4} parent=5 // pred_check_branch
        %1158 = sbr.rel (%p1156) target = $region86
      $region85: #{lstm_par_seq_forward.4} parent=5 // pred_region
        %s1159 = ssub.s32 %s11, 2
        // Predicated region
        $region87: #{lstm_par_seq_forward.4} parent=85 // pred_check
          %p1160 = pneg %p155
        $region88: #{lstm_par_seq_forward.4} parent=85 // pred_check_branch
          %1162 = sbr.rel (%p1160) target = $region90
        $region89: #{lstm_par_seq_forward.4} parent=85 // pred_region
          %p1163 = scmp.lt.s32.totalorder %s17, 1
          %s1164 = scalar_select %p1163, %s17, 1
          %s1165 = smul.addr %s1164, 8
          %s1166 = scalar_lea.vmem %s5, %s1165
        $region90: #{lstm_par_seq_forward.4} parent=85 // pred_fallthru
          _
      $region86: #{lstm_par_seq_forward.4} parent=5 // pred_fallthru
        _
    $region6: #{lstm_par_seq_forward.4} parent=1 // loop_footer
      %s15 = sadd.s32 1, %s11
    $region7: #{lstm_par_seq_forward.4} parent=1 // loop_footer_branch
      %10 = sbr.rel target = $region3
    $region8: #{lstm_par_seq_forward.4} parent=1 // loop_exit
      _

// kernel: lstm_par_seq_forward.7
$region0: #{lstm_par_seq_forward.7}
  #allocation0 [shape = 'u32[]', space=smem, size = 0x4, offset = 0x4, fixed_abs, tag = 'smem constant byte address 0x4 - core index']
  #allocation1 [shape = 'u32[72,128]{1,0:T(1,128)}', space=vmem, size = 0x9000, scoped, tag = 'internal scratch']
  %s0 = inlined_call_operand.vmem [shape: f32[2,32], index: 0, kind: input, shape index: {}]
  %s1 = inlined_call_operand.vmem [shape: f32[32,32], index: 1, kind: input, shape index: {}]
  %s2 = inlined_call_operand.vmem [shape: f32[1,32], index: 2, kind: input, shape index: {}]
  %s3 = inlined_call_operand.vmem [shape: f32[1,32], index: 3, kind: input, shape index: {}]
  %s4 = inlined_call_operand.vmem [shape: f32[1,32], index: 4, kind: input, shape index: {}]
  %s5 = inlined_call_operand.vmem [shape: f32[1,32], index: 5, kind: input, shape index: {}]
  %s6 = inlined_call_operand.vmem [shape: f32[1,32], index: 6, kind: input, shape index: {}]
  %s7 = inlined_call_operand.vmem [shape: f32[32,3], index: 7, kind: input, shape index: {}]
  %s8 = inlined_call_operand.vmem [shape: f32[1,3], index: 8, kind: input, shape index: {}]
  %s9 = inlined_call_operand.hbm [shape: f32[2,3], index: 9, kind: output, shape index: {}]
  %s10 = sld [smem:[#allocation0]]
  $region46: #{lstm_par_seq_forward.7} parent=0
    _
  %s12 = ssub.s32 1, %s10
  %s13 = scalar_select 0, %s12, %s10
  $region1: #{lstm_par_seq_forward.7} parent=0
    #allocation2 [shape = 'u8[1024]{0}', space=vmem, size = 0x400, scoped, tag = 'output window, operand 0, single buffered']
    #allocation3 [shape = 's32[1]{0}', space=sflag, size = 0x4, scoped, tag = 'scoped memory for lstm_par_seq_forward.7']
    %14 = vsyncpa [#allocation3], 0
    // Predicated region
    $region2: #{lstm_par_seq_forward.7} parent=1 // pred_check
      _
    $region3: #{lstm_par_seq_forward.7} parent=1 // pred_check_branch
      %16 = sbr.rel (0) target = $region5
    $region4: #{lstm_par_seq_forward.7} parent=1 // pred_region
      _
    $region5: #{lstm_par_seq_forward.7} parent=1 // pred_fallthru
      _
    // Predicated region
    $region6: #{lstm_par_seq_forward.7} parent=1 // pred_check
      _
    $region7: #{lstm_par_seq_forward.7} parent=1 // pred_check_branch
      %18 = sbr.rel (0) target = $region9
    $region8: #{lstm_par_seq_forward.7} parent=1 // pred_region
      _
    $region9: #{lstm_par_seq_forward.7} parent=1 // pred_fallthru
      _
    // Predicated region
    $region10: #{lstm_par_seq_forward.7} parent=1 // pred_check
      _
    $region11: #{lstm_par_seq_forward.7} parent=1 // pred_check_branch
      %20 = sbr.rel (0) target = $region13
    $region12: #{lstm_par_seq_forward.7} parent=1 // pred_region
      _
    $region13: #{lstm_par_seq_forward.7} parent=1 // pred_fallthru
      _
    // Predicated region
    $region14: #{lstm_par_seq_forward.7} parent=1 // pred_check
      _
    $region15: #{lstm_par_seq_forward.7} parent=1 // pred_check_branch
      %22 = sbr.rel (0) target = $region17
    $region16: #{lstm_par_seq_forward.7} parent=1 // pred_region
      _
    $region17: #{lstm_par_seq_forward.7} parent=1 // pred_fallthru
      _
    // Predicated region
    $region18: #{lstm_par_seq_forward.7} parent=1 // pred_check
      _
    $region19: #{lstm_par_seq_forward.7} parent=1 // pred_check_branch
      %24 = sbr.rel (0) target = $region21
    $region20: #{lstm_par_seq_forward.7} parent=1 // pred_region
      _
    $region21: #{lstm_par_seq_forward.7} parent=1 // pred_fallthru
      _
    // Predicated region
    $region22: #{lstm_par_seq_forward.7} parent=1 // pred_check
      _
    $region23: #{lstm_par_seq_forward.7} parent=1 // pred_check_branch
      %26 = sbr.rel (0) target = $region25
    $region24: #{lstm_par_seq_forward.7} parent=1 // pred_region
      _
    $region25: #{lstm_par_seq_forward.7} parent=1 // pred_fallthru
      _
    // Predicated region
    $region26: #{lstm_par_seq_forward.7} parent=1 // pred_check
      _
    $region27: #{lstm_par_seq_forward.7} parent=1 // pred_check_branch
      %28 = sbr.rel (0) target = $region29
    $region28: #{lstm_par_seq_forward.7} parent=1 // pred_region
      _
    $region29: #{lstm_par_seq_forward.7} parent=1 // pred_fallthru
      _
    // Predicated region
    $region30: #{lstm_par_seq_forward.7} parent=1 // pred_check
      _
    $region31: #{lstm_par_seq_forward.7} parent=1 // pred_check_branch
      %30 = sbr.rel (0) target = $region33
    $region32: #{lstm_par_seq_forward.7} parent=1 // pred_region
      _
    $region33: #{lstm_par_seq_forward.7} parent=1 // pred_fallthru
      _
    // Predicated region
    $region34: #{lstm_par_seq_forward.7} parent=1 // pred_check
      _
    $region35: #{lstm_par_seq_forward.7} parent=1 // pred_check_branch
      %32 = sbr.rel (0) target = $region37
    $region36: #{lstm_par_seq_forward.7} parent=1 // pred_region
      _
    $region37: #{lstm_par_seq_forward.7} parent=1 // pred_fallthru
      _
    %v33 = vld [vmem:[%s0] sm:$0x3]
    %v34 = vld [vmem:[%s1] sm:$0xff]
    %v35 = vld [vmem:[%s1 + $0x8] sm:$0xff]
    %v36 = vld [vmem:[%s1 + $0x10] sm:$0xff]
    %v37 = vld [vmem:[%s1 + $0x18] sm:$0xff]
    %v38 = vld [vmem:[%s2] sm:$0x1]
    %v40 = vperm.slane %v38, 0
    %vm42 = vcmask 261120
    %v44 = vsel %vm42, %v33, 0
    %46 = vmatpush.msra.mxu0 0.0
    %47 = vmatpush.msra.mxu0 0.0
    %48 = vmatpush.msra.mxu0 0.0
    %49 = vmatpush.msra.mxu0 0.0
    %50 = vmatpush.msra.mxu0 0.0
    %51 = vmatpush.msra.mxu0 0.0
    %52 = vmatpush.msra.mxu0 0.0
    %53 = vmatpush.msra.mxu0 0.0
    %54 = vmatpush.msra.mxu0 0.0
    %55 = vmatpush.msra.mxu0 0.0
    %56 = vmatpush.msra.mxu0 0.0
    %57 = vmatpush.msra.mxu0 0.0
    %58 = vmatpush.msra.mxu0 %v37
    %59 = vmatpush.msra.mxu0 %v36
    %60 = vmatpush.msra.mxu0 %v35
    %61 = vmatpush.msra.mxu0 %v34
    %62 = vmatmul.f32.gmra.mxu0 %v44
    %v63 = vpop.f32.mrf.mxu0
    %v64 = vadd.f32 %v40, %v63
    %65 = vdwg.mxu0
    %v66 = vmax.f32 %v64, 0.0
    %v67 = vld [vmem:[%s5] sm:$0x1]
    %v69 = vperm.slane %v67, 0
    %v71 = vsub.f32 %v66, %v69
    %v72 = vld [vmem:[%s6] sm:$0x1]
    %v73 = vadd.f32 %v72, 1e-05
    %v74 = vrsqrt.pop %v73
    %v75 = vmul.f32 %v74, %v73
    %v76 = vmul.f32 %v75, %v74
    %v77 = vmul.f32 0.5, %v76
    %v78 = vsub.f32 1.5, %v77
    %v79 = vmul.f32 %v74, %v78
    %vm80 = vweird.f32 %v73
    %vm81 = vweird.f32 %v74
    %vm82 = vmor %vm80, %vm81
    %v83 = vsel %vm82, %v74, %v79
    %v85 = vperm.slane %v83, 0
    %v87 = vmul.f32 %v71, %v85
    %v88 = vld [vmem:[%s3] sm:$0x1]
    %v90 = vperm.slane %v88, 0
    %v92 = vmul.f32 %v87, %v90
    %v93 = vld [vmem:[%s4] sm:$0x1]
    %v95 = vperm.slane %v93, 0
    %v97 = vadd.f32 %v92, %v95
    %v98 = vld [vmem:[%s7] sm:$0xff]
    %v99 = vld [vmem:[%s7 + $0x8] sm:$0xff]
    %v100 = vld [vmem:[%s7 + $0x10] sm:$0xff]
    %v101 = vld [vmem:[%s7 + $0x18] sm:$0xff]
    %v102 = vld [vmem:[%s8] sm:$0x1]
    %v104 = vperm.slane %v102, 0
    %v107 = vsel %vm42, %v97, 0
    %109 = vmatpush.msra.mxu0 0.0
    %110 = vmatpush.msra.mxu0 0.0
    %111 = vmatpush.msra.mxu0 0.0
    %112 = vmatpush.msra.mxu0 0.0
    %113 = vmatpush.msra.mxu0 0.0
    %114 = vmatpush.msra.mxu0 0.0
    %115 = vmatpush.msra.mxu0 0.0
    %116 = vmatpush.msra.mxu0 0.0
    %117 = vmatpush.msra.mxu0 0.0
    %118 = vmatpush.msra.mxu0 0.0
    %119 = vmatpush.msra.mxu0 0.0
    %120 = vmatpush.msra.mxu0 0.0
    %121 = vmatpush.msra.mxu0 %v101
    %122 = vmatpush.msra.mxu0 %v100
    %123 = vmatpush.msra.mxu0 %v99
    %124 = vmatpush.msra.mxu0 %v98
    %125 = vmatmul.f32.gmra.mxu0 %v107
    %v126 = vpop.f32.mrf.mxu0
    %v127 = vadd.f32 %v104, %v126
    %128 = vdwg.mxu0
    %vm129 = vcmask 17408
    %v130 = vsel %vm129, %v127, -inf
    %v131 = vrot.slane %v130, 4
    %v132 = vmax.f32 %v130, %v131
    %v133 = vrot.slane %v132, 2
    %v134 = vmax.f32 %v132, %v133
    %v135 = vrot.slane %v134, 1
    %v136 = vmax.f32 %v134, %v135
    %v137 = vsub.f32 %v127, %v136
    %v138 = vmul.f32 %v137, 1.442695
    %v139 = vpow.pop %v138
    %v140 = vsel %vm129, %v139, 0.0
    %v141 = vrot.slane %v140, 4
    %v142 = vadd.f32 %v140, %v141
    %v143 = vrot.slane %v142, 2
    %v144 = vadd.f32 %v142, %v143
    %v145 = vrot.slane %v144, 1
    %v146 = vadd.f32 %v144, %v145
    %v147 = vrcp.pop %v146
    %v148 = vmul.f32 %v146, %v147
    %v149 = vsub.f32 1.0, %v148
    %v150 = vmul.f32 %v147, %v149
    %v151 = vadd.f32 %v147, %v150
    %vm152 = vweird.f32 %v146
    %vm153 = vweird.f32 %v147
    %vm154 = vmor %vm152, %vm153
    %v155 = vsel %vm154, %v147, %v151
    %v156 = vand.u32 2147483647, %v146
    %vm157 = vcmp.eq.f32.partialorder %v156, 8.507059e+37
    %v158 = vand.u32 %v146, 2147483648
    %v159 = vor.u32 1.1754944e-38, %v158
    %v160 = vsel %vm157, %v159, %v155
    %v161 = vmul.f32 %v139, %v160
    %162 = vst.msk [vmem:[#allocation2] sm:$0x3] %vm129, %v161
    // Predicated region
    $region38: #{lstm_par_seq_forward.7} parent=1 // pred_check
      _
    $region39: #{lstm_par_seq_forward.7} parent=1 // pred_check_branch
      %164 = sbr.rel (0) target = $region41
    $region40: #{lstm_par_seq_forward.7} parent=1 // pred_region
      %166 = vsyncadd [#allocation3], 0
      %s168 = sshll.u32 [#allocation2], 4
      %s169 = int_to_ptr.vmem [resolvable:$true] %s168
      %s170 = sshll.u32 %s9, 4
      %s171 = int_to_ptr.hbm [resolvable:$true] %s170
      %173 = dma.vmem_to_hbm [thread:$0]  %s169, 32, %s171, [#allocation3]
    $region41: #{lstm_par_seq_forward.7} parent=1 // pred_fallthru
      _
    // Predicated region
    $region42: #{lstm_par_seq_forward.7} parent=1 // pred_check
      _
    $region43: #{lstm_par_seq_forward.7} parent=1 // pred_check_branch
      %175 = sbr.rel (0) target = $region45
    $region44: #{lstm_par_seq_forward.7} parent=1 // pred_region
      %177 = dma.done [#allocation3], 32
    $region45: #{lstm_par_seq_forward.7} parent=1 // pred_fallthru
      _
    %178 = vsyncpa [#allocation3], 1

</llo_original>
